<compile_context>
chip_gen: v6e
topology: v6e:2x2x1
jax: 0.10.0
libtpu: 0.0.40
codegen_flags: <defaults>
</compile_context>

<pallas_src>
import functools

import jax
import jax.numpy as jnp
import numpy as np
from jax import lax
from jax.experimental import pallas as pl
from jax.experimental.pallas import tpu as pltpu


# ---------------------------------------------------------------------------
# Fused Pallas kernel
# ---------------------------------------------------------------------------

def _fused_forward_kernel(p1_ref, w1_ref, b1_ref, w2k_ref, b2_ref,
                          wih_ref, whh_ref, bl_ref,
                          wm1_ref, bm1_ref, wm2_ref, bm2_ref,
                          o_ref, y1_s, acc_s, gx_s, *, B, Bp, T2, K, Hp):
    k = pl.program_id(0)

    # ---- k == 0: conv1 (+ LeakyReLU), init conv2 accumulator. -------------
    @pl.when(k == 0)
    def _():
        y1 = jnp.dot(p1_ref[...], w1_ref[...],
                     preferred_element_type=jnp.float32) + b1_ref[...]
        y1_s[...] = jnp.where(y1 > 0, y1, 0.01 * y1)     # LeakyReLU(0.01)
        acc_s[...] = jnp.zeros_like(acc_s)
        # MaxPool1d(kernel_size=1) and Dropout (eval) are identities.

    # ---- every step: one conv2 tap.  Rows are time-major (row = t*Bp + b),
    # so tap k is the contiguous, sublane-aligned slice starting at k*Bp.
    start = pl.multiple_of(k * Bp, Bp)
    lhs = y1_s[pl.ds(start, T2 * Bp), :].astype(jnp.bfloat16)
    acc_s[...] += jnp.dot(lhs, w2k_ref[0], preferred_element_type=jnp.float32)

    # ---- k == K-1: bias + LeakyReLU, LSTM, MLP head. -----------------------
    @pl.when(k == K - 1)
    def _():
        y2 = acc_s[...] + b2_ref[...]
        y2 = jnp.where(y2 > 0, y2, 0.01 * y2)            # LeakyReLU(0.01)

        # LSTM input projection hoisted out of the recurrence (one matmul).
        # Stored 3-D so gx_s[t] is an aligned (Bp, 4*Hp) slab in the loop.
        gx = jnp.dot(y2.astype(jnp.bfloat16), wih_ref[...],
                     preferred_element_type=jnp.float32) + bl_ref[...]
        gx_s[...] = gx.reshape(T2, Bp, 4 * Hp)

        # Gates packed [i, f, o | g]: one sigmoid + one tanh per step.
        # (Follow-up per review: weight-stationary whh via
        #  pltpu.matmul_push_rhs if the dump shows a per-step weight re-push.)
        def lstm_step(t, carry):
            h, c = carry
            gates = gx_s[t] + jnp.dot(h.astype(jnp.bfloat16), whh_ref[...],
                                      preferred_element_type=jnp.float32)
            ifo = jax.nn.sigmoid(gates[:, :3 * Hp])
            g = jnp.tanh(gates[:, 3 * Hp:])
            i = ifo[:, 0 * Hp:1 * Hp]
            f = ifo[:, 1 * Hp:2 * Hp]
            o = ifo[:, 2 * Hp:3 * Hp]
            c = f * c + i * g
            h = o * jnp.tanh(c)
            return h, c

        def lstm_pair(j, carry):                          # manual unroll x2
            return lstm_step(2 * j + 1, lstm_step(2 * j, carry))

        carry = (jnp.zeros((Bp, Hp), jnp.float32),
                 jnp.zeros((Bp, Hp), jnp.float32))
        carry = lax.fori_loop(0, T2 // 2, lstm_pair, carry)
        if T2 % 2:
            carry = lstm_step(T2 - 1, carry)
        h_n = carry[0]

        # MLP head: Linear -> Sigmoid -> Linear (tiny, kept f32).
        z = jax.nn.sigmoid(jnp.dot(h_n, wm1_ref[...],
                                   preferred_element_type=jnp.float32)
                           + bm1_ref[...])
        out = (jnp.dot(z, wm2_ref[...], preferred_element_type=jnp.float32)
               + bm2_ref[...])
        o_ref[...] = out[:B, :].astype(o_ref.dtype)


def hybrid_forward(x, fp):
    """x: (B, L) float32 -> (B, 1); matches HybridModel.forward (eval mode)."""
    B, L = x.shape
    K, C = fp["w1"].shape
    Hp = fp["whh"].shape[0]
    M1 = fp["wm1"].shape[1]
    T1 = L - K + 1
    T2 = T1 - K + 1
    Bp = ((B + 7) // 8) * 8          # pad batch to a full sublane group

    # Tiny conv1 im2col (C_in = 1): patches in time-major row order t*Bp + b.
    xp = jnp.pad(x, ((0, Bp - B), (0, 0)))
    idx = jnp.arange(T1)[:, None] + jnp.arange(K)[None, :]        # (T1, K)
    p1 = jnp.transpose(xp[:, idx], (1, 0, 2)).reshape(T1 * Bp, K)

    kernel = functools.partial(_fused_forward_kernel,
                               B=B, Bp=Bp, T2=T2, K=K, Hp=Hp)
    return pl.pallas_call(
        kernel,
        out_shape=jax.ShapeDtypeStruct((B, 1), jnp.float32),
        grid_spec=pltpu.PrefetchScalarGridSpec(
            num_scalar_prefetch=0,
            grid=(K,),
            in_specs=[
                pl.BlockSpec((T1 * Bp, K), lambda k: (0, 0)),   # conv1 patches
                pl.BlockSpec((K, C), lambda k: (0, 0)),          # w1
                pl.BlockSpec((1, C), lambda k: (0, 0)),          # b1
                pl.BlockSpec((1, C, C), lambda k: (k, 0, 0)),    # w2: streamed per tap
                pl.BlockSpec((1, C), lambda k: (0, 0)),          # b2
                pl.BlockSpec((C, 4 * Hp), lambda k: (0, 0)),     # wih (bf16)
                pl.BlockSpec((Hp, 4 * Hp), lambda k: (0, 0)),    # whh (bf16)
                pl.BlockSpec((1, 4 * Hp), lambda k: (0, 0)),     # b_lstm
                pl.BlockSpec((Hp, M1), lambda k: (0, 0)),        # wm1
                pl.BlockSpec((1, M1), lambda k: (0, 0)),         # bm1
                pl.BlockSpec((M1, 1), lambda k: (0, 0)),         # wm2
                pl.BlockSpec((1, 1), lambda k: (0, 0)),          # bm2
            ],
            out_specs=pl.BlockSpec((B, 1), lambda k: (0, 0)),
            scratch_shapes=[
                pltpu.VMEM((T1 * Bp, C), jnp.float32),       # conv1 output
                pltpu.VMEM((T2 * Bp, C), jnp.float32),       # conv2 accumulator
                pltpu.VMEM((T2, Bp, 4 * Hp), jnp.float32),   # hoisted gate pre-acts
            ]),
        compiler_params=pltpu.CompilerParams(
            dimension_semantics=("arbitrary",),
            vmem_limit_bytes=8 * 1024 * 1024),
    )(p1, fp["w1"], fp["b1"], fp["w2"], fp["b2"],
      fp["wih"], fp["whh"], fp["bl"],
      fp["wm1"], fp["bm1"], fp["wm2"], fp["bm2"])


# ---------------------------------------------------------------------------
# Parameter setup (PyTorch-equivalent params + one-time kernel-layout prep)
# ---------------------------------------------------------------------------

def init_params(key, cnn_channels=256, cnn_kernel=8, lstm_hidden=50,
                layers_cnn=2):
    keys = jax.random.split(key, 12)
    k = 0
    params = {"cnn": []}
    for i in range(layers_cnn):
        cin = 1 if i == 0 else cnn_channels
        w = 0.1 * jax.random.normal(keys[k], (cnn_channels, cin, cnn_kernel),
                                    jnp.float32); k += 1
        b = 0.1 * jax.random.normal(keys[k], (cnn_channels,), jnp.float32); k += 1
        params["cnn"].append((w, b))
    H, C = lstm_hidden, cnn_channels
    wih = 0.1 * jax.random.normal(keys[k], (4 * H, C), jnp.float32); k += 1
    whh = 0.1 * jax.random.normal(keys[k], (4 * H, H), jnp.float32); k += 1
    bih = 0.1 * jax.random.normal(keys[k], (4 * H,), jnp.float32); k += 1
    bhh = 0.1 * jax.random.normal(keys[k], (4 * H,), jnp.float32); k += 1
    params["wih_t"] = jnp.transpose(wih)          # (C, 4H), gate order i,f,g,o
    params["whh_t"] = jnp.transpose(whh)          # (H, 4H)
    params["b_lstm"] = bih + bhh
    w1 = 0.1 * jax.random.normal(keys[k], (128, H), jnp.float32); k += 1
    b1 = 0.1 * jax.random.normal(keys[k], (128,), jnp.float32); k += 1
    w2 = 0.1 * jax.random.normal(keys[k], (1, 128), jnp.float32); k += 1
    b2 = 0.1 * jax.random.normal(keys[k], (1,), jnp.float32); k += 1
    params["w1_t"] = jnp.transpose(w1); params["b1"] = b1
    params["w2_t"] = jnp.transpose(w2); params["b2"] = b2
    return params


def prepare_fused_params(params, Hp=128):
    """One-time prep: conv weights to (K, C_in, C_out); LSTM hidden zero-padded
    50 -> Hp=128 with per-gate 128-lane blocks; gates repacked [i, f, o | g]
    (one sigmoid over 3*Hp + one tanh over Hp per step); w2/wih/whh cast to
    bf16 (MXU operands; accumulation and gate math stay f32)."""
    (w1, b1), (w2, b2) = params["cnn"]
    C, _, K = w1.shape
    H = params["whh_t"].shape[0]
    assert H <= Hp

    fp = {
        "w1": jnp.transpose(w1.reshape(C, K)),                       # (K, C)
        "b1": b1.reshape(1, C),
        "w2": jnp.transpose(w2, (2, 1, 0)).astype(jnp.bfloat16),     # (K, Cin, Cout)
        "b2": b2.reshape(1, C),
    }

    wih_t, whh_t, bl = params["wih_t"], params["whh_t"], params["b_lstm"]
    # native gate order along 4H axis: [i, f, g, o]; repack blocks to [i,f,o,g]
    src_order = (0, 1, 3, 2)
    wih_p = jnp.zeros((C, 4 * Hp), jnp.float32)
    whh_p = jnp.zeros((Hp, 4 * Hp), jnp.float32)
    bl_p = jnp.zeros((1, 4 * Hp), jnp.float32)
    for dst, src in enumerate(src_order):
        wih_p = wih_p.at[:, dst * Hp:dst * Hp + H].set(wih_t[:, src * H:(src + 1) * H])
        whh_p = whh_p.at[:H, dst * Hp:dst * Hp + H].set(whh_t[:, src * H:(src + 1) * H])
        bl_p = bl_p.at[0, dst * Hp:dst * Hp + H].set(bl[src * H:(src + 1) * H])
    fp["wih"] = wih_p.astype(jnp.bfloat16)
    fp["whh"] = whh_p.astype(jnp.bfloat16)
    fp["bl"] = bl_p

    w1m = params["w1_t"]                              # (H, 128)
    fp["wm1"] = jnp.zeros((Hp, w1m.shape[1]), jnp.float32).at[:H, :].set(w1m)
    fp["bm1"] = params["b1"].reshape(1, -1)
    fp["wm2"] = params["w2_t"]                        # (128, 1)
    fp["bm2"] = params["b2"].reshape(1, 1)
    return fp


# ---------------------------------------------------------------------------
# Pure-JAX reference (f32 weights, original layout) for correctness check
# ---------------------------------------------------------------------------

def ref_forward(x, params):
    B, L = x.shape
    h = x.reshape(B, 1, L)
    for (w, b) in params["cnn"]:
        y = lax.conv_general_dilated(h, w, (1,), "VALID",
                                     dimension_numbers=("NCH", "OIH", "NCH"))
        y = y + b[None, :, None]
        h = jnp.where(y > 0, y, 0.01 * y)
    xs = jnp.transpose(h, (0, 2, 1))                  # (B, T, C)
    H = params["whh_t"].shape[0]
    wih_t, whh_t, bl = params["wih_t"], params["whh_t"], params["b_lstm"]

    def step(carry, x_t):
        hp, cp = carry
        gates = x_t @ wih_t + hp @ whh_t + bl
        i = jax.nn.sigmoid(gates[:, :H])
        f = jax.nn.sigmoid(gates[:, H:2 * H])
        g = jnp.tanh(gates[:, 2 * H:3 * H])
        o = jax.nn.sigmoid(gates[:, 3 * H:])
        c = f * cp + i * g
        hh = o * jnp.tanh(c)
        return (hh, c), None

    init = (jnp.zeros((B, H), jnp.float32), jnp.zeros((B, H), jnp.float32))
    (hn, _), _ = lax.scan(step, init, jnp.transpose(xs, (1, 0, 2)))
    z = jax.nn.sigmoid(hn @ params["w1_t"] + params["b1"])
    return z @ params["w2_t"] + params["b2"]


if __name__ == "__main__":
    key = jax.random.PRNGKey(0)
    pkey, xkey = jax.random.split(key)
    params = init_params(pkey)
    fused = prepare_fused_params(params)

    B, L = 2, 32                     # after two VALID convs (K=8): T2 = 18
    x = jax.random.normal(xkey, (B, L), jnp.float32)

    fwd = jax.jit(hybrid_forward)
    out = jax.block_until_ready(fwd(x, fused))
    assert out.shape == (B, 1)

    # Tolerance reflects bf16 quantization of w2/wih/whh (review item #2);
    # accumulation + gate math are f32 and structure matches the f32 model.
    ref = ref_forward(x, params)
    np.testing.assert_allclose(np.asarray(out), np.asarray(ref),
                               rtol=1e-2, atol=1e-2)
    print("KERNEL_OK")
</pallas_src>

<mosaic_0001>
module attributes {stable_mosaic.version = 11 : i64} {
  func.func @_fused_forward_kernel(%arg0: i32, %arg1: memref<200x8xf32, #tpu.memory_space<vmem>>, %arg2: memref<8x256xf32, #tpu.memory_space<vmem>>, %arg3: memref<1x256xf32, #tpu.memory_space<vmem>>, %arg4: memref<1x256x256xbf16, #tpu.memory_space<vmem>>, %arg5: memref<1x256xf32, #tpu.memory_space<vmem>>, %arg6: memref<256x512xbf16, #tpu.memory_space<vmem>>, %arg7: memref<128x512xbf16, #tpu.memory_space<vmem>>, %arg8: memref<1x512xf32, #tpu.memory_space<vmem>>, %arg9: memref<128x128xf32, #tpu.memory_space<vmem>>, %arg10: memref<1x128xf32, #tpu.memory_space<vmem>>, %arg11: memref<128x1xf32, #tpu.memory_space<vmem>>, %arg12: memref<1x1xf32, #tpu.memory_space<vmem>>, %arg13: memref<2x1xf32, #tpu.memory_space<vmem>>, %arg14: memref<200x256xf32, #tpu.memory_space<vmem>>, %arg15: memref<144x256xf32, #tpu.memory_space<vmem>>, %arg16: memref<18x8x512xf32, #tpu.memory_space<vmem>>) attributes {dimension_semantics = [#tpu.dimension_semantics<arbitrary>], iteration_bounds = array<i64: 8>, scalar_prefetch = 0 : i64, scratch_operands = 3 : i64, tpu.core_type = #tpu.core_type<tc>, window_params = [{pipeline_mode = #tpu.pipeline_mode<synchronous>, transform_indices = @transform_0, window_bounds = array<i64: 200, 8>}, {pipeline_mode = #tpu.pipeline_mode<synchronous>, transform_indices = @transform_1, window_bounds = array<i64: 8, 256>}, {pipeline_mode = #tpu.pipeline_mode<synchronous>, transform_indices = @transform_2, window_bounds = array<i64: 1, 256>}, {transform_indices = @transform_3, window_bounds = array<i64: 1, 256, 256>}, {pipeline_mode = #tpu.pipeline_mode<synchronous>, transform_indices = @transform_4, window_bounds = array<i64: 1, 256>}, {pipeline_mode = #tpu.pipeline_mode<synchronous>, transform_indices = @transform_5, window_bounds = array<i64: 256, 512>}, {pipeline_mode = #tpu.pipeline_mode<synchronous>, transform_indices = @transform_6, window_bounds = array<i64: 128, 512>}, {pipeline_mode = #tpu.pipeline_mode<synchronous>, transform_indices = @transform_7, window_bounds = array<i64: 1, 512>}, {pipeline_mode = #tpu.pipeline_mode<synchronous>, transform_indices = @transform_8, window_bounds = array<i64: 128, 128>}, {pipeline_mode = #tpu.pipeline_mode<synchronous>, transform_indices = @transform_9, window_bounds = array<i64: 1, 128>}, {pipeline_mode = #tpu.pipeline_mode<synchronous>, transform_indices = @transform_10, window_bounds = array<i64: 128, 1>}, {pipeline_mode = #tpu.pipeline_mode<synchronous>, transform_indices = @transform_11, window_bounds = array<i64: 1, 1>}, {pipeline_mode = #tpu.pipeline_mode<synchronous>, transform_indices = @transform_12, window_bounds = array<i64: 2, 1>}]} {
    %c0_i32 = arith.constant 0 : i32
    %0 = arith.cmpi eq, %arg0, %c0_i32 : i32
    %1 = arith.extui %0 : i1 to i32
    %c0_i32_0 = arith.constant 0 : i32
    %2 = arith.cmpi ne, %1, %c0_i32_0 : i32
    scf.if %2 {
      %c0_9 = arith.constant 0 : index
      %c0_10 = arith.constant 0 : index
      %17 = vector.load %arg1[%c0_9, %c0_10] : memref<200x8xf32, #tpu.memory_space<vmem>>, vector<200x8xf32>
      %c0_11 = arith.constant 0 : index
      %c0_12 = arith.constant 0 : index
      %18 = vector.load %arg2[%c0_11, %c0_12] : memref<8x256xf32, #tpu.memory_space<vmem>>, vector<8x256xf32>
      %cst_13 = arith.constant dense<0.000000e+00> : vector<200x256xf32>
      %19 = tpu.matmul %17, %18, %cst_13 {dimension_numbers = #tpu.dot_dimension_numbers<[1], [0], [0], [1], [0, 0, 1, 1], [], []>} : vector<200x8xf32>, vector<8x256xf32>, vector<200x256xf32> -> vector<200x256xf32>
      %c0_14 = arith.constant 0 : index
      %c0_15 = arith.constant 0 : index
      %20 = vector.load %arg3[%c0_14, %c0_15] : memref<1x256xf32, #tpu.memory_space<vmem>>, vector<1x256xf32>
      %21 = vector.broadcast %20 : vector<1x256xf32> to vector<200x256xf32>
      %22 = arith.addf %19, %21 : vector<200x256xf32>
      %cst_16 = arith.constant 0.000000e+00 : f32
      %23 = vector.broadcast %cst_16 : f32 to vector<200x256xf32>
      %24 = arith.cmpf ogt, %22, %23 : vector<200x256xf32>
      %cst_17 = arith.constant 0.00999999977 : f32
      %25 = vector.broadcast %cst_17 : f32 to vector<200x256xf32>
      %26 = arith.mulf %25, %22 : vector<200x256xf32>
      %27 = arith.select %24, %22, %26 : vector<200x256xi1>, vector<200x256xf32>
      %c0_18 = arith.constant 0 : index
      %c0_19 = arith.constant 0 : index
      %28 = vector.load %arg14[%c0_18, %c0_19] : memref<200x256xf32, #tpu.memory_space<vmem>>, vector<200x256xf32>
      tpu.vector_store %arg14[%c0_18, %c0_19], %27 {strides = array<i32>} : memref<200x256xf32, #tpu.memory_space<vmem>>, vector<200x256xf32>,
      %cst_20 = arith.constant 0.000000e+00 : f32
      %29 = vector.broadcast %cst_20 : f32 to vector<144x256xf32>
      %c0_21 = arith.constant 0 : index
      %c0_22 = arith.constant 0 : index
      %30 = vector.load %arg15[%c0_21, %c0_22] : memref<144x256xf32, #tpu.memory_space<vmem>>, vector<144x256xf32>
      tpu.vector_store %arg15[%c0_21, %c0_22], %29 {strides = array<i32>} : memref<144x256xf32, #tpu.memory_space<vmem>>, vector<144x256xf32>,
    } else {
    }
    %c8_i32 = arith.constant 8 : i32
    %3 = arith.muli %arg0, %c8_i32 : i32
    %4 = tpu.assume_multiple %3, 8 : i32
    %5 = arith.index_cast %4 : i32 to index
    %c0 = arith.constant 0 : index
    %6 = vector.load %arg14[%5, %c0] : memref<200x256xf32, #tpu.memory_space<vmem>>, vector<144x256xf32>
    %7 = arith.truncf %6 : vector<144x256xf32> to vector<144x256xbf16>
    %c0_1 = arith.constant 0 : index
    %c0_2 = arith.constant 0 : index
    %8 = vector.load %arg15[%c0_1, %c0_2] : memref<144x256xf32, #tpu.memory_space<vmem>>, vector<144x256xf32>
    %c0_3 = arith.constant 0 : index
    %c0_4 = arith.constant 0 : index
    %c0_5 = arith.constant 0 : index
    %9 = vector.load %arg4[%c0_3, %c0_4, %c0_5] : memref<1x256x256xbf16, #tpu.memory_space<vmem>>, vector<1x256x256xbf16>
    %10 = vector.shape_cast %9 : vector<1x256x256xbf16> to vector<256x256xbf16>
    %cst = arith.constant dense<0.000000e+00> : vector<144x256xf32>
    %11 = tpu.matmul %7, %10, %cst {dimension_numbers = #tpu.dot_dimension_numbers<[1], [0], [0], [1], [0, 0, 1, 1], [], []>} : vector<144x256xbf16>, vector<256x256xbf16>, vector<144x256xf32> -> vector<144x256xf32>
    %12 = arith.addf %8, %11 : vector<144x256xf32>
    %c0_6 = arith.constant 0 : index
    %c0_7 = arith.constant 0 : index
    %13 = vector.load %arg15[%c0_6, %c0_7] : memref<144x256xf32, #tpu.memory_space<vmem>>, vector<144x256xf32>
    tpu.vector_store %arg15[%c0_6, %c0_7], %12 {strides = array<i32>} : memref<144x256xf32, #tpu.memory_space<vmem>>, vector<144x256xf32>,
    %c7_i32 = arith.constant 7 : i32
    %14 = arith.cmpi eq, %arg0, %c7_i32 : i32
    %15 = arith.extui %14 : i1 to i32
    %c0_i32_8 = arith.constant 0 : i32
    %16 = arith.cmpi ne, %15, %c0_i32_8 : i32
    scf.if %16 {
      %c0_9 = arith.constant 0 : index
      %c0_10 = arith.constant 0 : index
      %17 = vector.load %arg15[%c0_9, %c0_10] : memref<144x256xf32, #tpu.memory_space<vmem>>, vector<144x256xf32>
      %c0_11 = arith.constant 0 : index
      %c0_12 = arith.constant 0 : index
      %18 = vector.load %arg5[%c0_11, %c0_12] : memref<1x256xf32, #tpu.memory_space<vmem>>, vector<1x256xf32>
      %19 = vector.broadcast %18 : vector<1x256xf32> to vector<144x256xf32>
      %20 = arith.addf %17, %19 : vector<144x256xf32>
      %cst_13 = arith.constant 0.000000e+00 : f32
      %21 = vector.broadcast %cst_13 : f32 to vector<144x256xf32>
      %22 = arith.cmpf ogt, %20, %21 : vector<144x256xf32>
      %cst_14 = arith.constant 0.00999999977 : f32
      %23 = vector.broadcast %cst_14 : f32 to vector<144x256xf32>
      %24 = arith.mulf %23, %20 : vector<144x256xf32>
      %25 = arith.select %22, %20, %24 : vector<144x256xi1>, vector<144x256xf32>
      %26 = arith.truncf %25 : vector<144x256xf32> to vector<144x256xbf16>
      %c0_15 = arith.constant 0 : index
      %c0_16 = arith.constant 0 : index
      %27 = vector.load %arg6[%c0_15, %c0_16] : memref<256x512xbf16, #tpu.memory_space<vmem>>, vector<256x512xbf16>
      %cst_17 = arith.constant dense<0.000000e+00> : vector<144x512xf32>
      %28 = tpu.matmul %26, %27, %cst_17 {dimension_numbers = #tpu.dot_dimension_numbers<[1], [0], [0], [1], [0, 0, 1, 1], [], []>} : vector<144x256xbf16>, vector<256x512xbf16>, vector<144x512xf32> -> vector<144x512xf32>
      %c0_18 = arith.constant 0 : index
      %c0_19 = arith.constant 0 : index
      %29 = vector.load %arg8[%c0_18, %c0_19] : memref<1x512xf32, #tpu.memory_space<vmem>>, vector<1x512xf32>
      %30 = vector.broadcast %29 : vector<1x512xf32> to vector<144x512xf32>
      %31 = arith.addf %28, %30 : vector<144x512xf32>
      %32 = vector.shape_cast %31 : vector<144x512xf32> to vector<18x8x512xf32>
      %c0_20 = arith.constant 0 : index
      %c0_21 = arith.constant 0 : index
      %c0_22 = arith.constant 0 : index
      %33 = vector.load %arg16[%c0_20, %c0_21, %c0_22] : memref<18x8x512xf32, #tpu.memory_space<vmem>>, vector<18x8x512xf32>
      tpu.vector_store %arg16[%c0_20, %c0_21, %c0_22], %32 {strides = array<i32>} : memref<18x8x512xf32, #tpu.memory_space<vmem>>, vector<18x8x512xf32>,
      %cst_23 = arith.constant 0.000000e+00 : f32
      %34 = vector.broadcast %cst_23 : f32 to vector<8x128xf32>
      %cst_24 = arith.constant 0.000000e+00 : f32
      %35 = vector.broadcast %cst_24 : f32 to vector<8x128xf32>
      %c0_i32_25 = arith.constant 0 : i32
      %c9_i32 = arith.constant 9 : i32
      %36 = arith.addi %c0_i32_25, %c9_i32 : i32
      %c1_i32 = arith.constant 1 : i32
      %37:2 = scf.for %arg17 = %c0_i32_25 to %36 step %c1_i32 iter_args(%arg18 = %34, %arg19 = %35) -> (vector<8x128xf32>, vector<8x128xf32>)  : i32 {
        %c2_i32 = arith.constant 2 : i32
        %55 = arith.muli %c2_i32, %arg17 : i32
        %c1_i32_40 = arith.constant 1 : i32
        %56 = arith.addi %55, %c1_i32_40 : i32
        %c2_i32_41 = arith.constant 2 : i32
        %57 = arith.muli %c2_i32_41, %arg17 : i32
        %58 = arith.index_cast %57 : i32 to index
        %c0_42 = arith.constant 0 : index
        %c0_43 = arith.constant 0 : index
        %59 = vector.load %arg16[%58, %c0_42, %c0_43] : memref<18x8x512xf32, #tpu.memory_space<vmem>>, vector<1x8x512xf32>
        %60 = vector.shape_cast %59 : vector<1x8x512xf32> to vector<8x512xf32>
        %61 = arith.truncf %arg18 : vector<8x128xf32> to vector<8x128xbf16>
        %c0_44 = arith.constant 0 : index
        %c0_45 = arith.constant 0 : index
        %62 = vector.load %arg7[%c0_44, %c0_45] : memref<128x512xbf16, #tpu.memory_space<vmem>>, vector<128x512xbf16>
        %cst_46 = arith.constant dense<0.000000e+00> : vector<8x512xf32>
        %63 = tpu.matmul %61, %62, %cst_46 {dimension_numbers = #tpu.dot_dimension_numbers<[1], [0], [0], [1], [0, 0, 1, 1], [], []>} : vector<8x128xbf16>, vector<128x512xbf16>, vector<8x512xf32> -> vector<8x512xf32>
        %64 = arith.addf %60, %63 : vector<8x512xf32>
        %65 = vector.extract_strided_slice %64 {offsets = [0, 0], sizes = [8, 384], strides = [1, 1]} : vector<8x512xf32> to vector<8x384xf32>
        %66 = arith.negf %65 : vector<8x384xf32>
        %67 = math.exp %66 : vector<8x384xf32>
        %cst_47 = arith.constant 1.000000e+00 : f32
        %68 = vector.broadcast %cst_47 : f32 to vector<8x384xf32>
        %69 = arith.addf %68, %67 : vector<8x384xf32>
        %70 = arith.divf %68, %69 : vector<8x384xf32>
        %71 = vector.extract_strided_slice %64 {offsets = [0, 384], sizes = [8, 128], strides = [1, 1]} : vector<8x512xf32> to vector<8x128xf32>
        %72 = math.tanh %71 : vector<8x128xf32>
        %73 = vector.extract_strided_slice %70 {offsets = [0, 0], sizes = [8, 128], strides = [1, 1]} : vector<8x384xf32> to vector<8x128xf32>
        %74 = vector.extract_strided_slice %70 {offsets = [0, 128], sizes = [8, 128], strides = [1, 1]} : vector<8x384xf32> to vector<8x128xf32>
        %75 = vector.extract_strided_slice %70 {offsets = [0, 256], sizes = [8, 128], strides = [1, 1]} : vector<8x384xf32> to vector<8x128xf32>
        %76 = arith.mulf %74, %arg19 : vector<8x128xf32>
        %77 = arith.mulf %73, %72 : vector<8x128xf32>
        %78 = arith.addf %76, %77 : vector<8x128xf32>
        %79 = math.tanh %78 : vector<8x128xf32>
        %80 = arith.mulf %75, %79 : vector<8x128xf32>
        %81 = arith.index_cast %56 : i32 to index
        %c0_48 = arith.constant 0 : index
        %c0_49 = arith.constant 0 : index
        %82 = vector.load %arg16[%81, %c0_48, %c0_49] : memref<18x8x512xf32, #tpu.memory_space<vmem>>, vector<1x8x512xf32>
        %83 = vector.shape_cast %82 : vector<1x8x512xf32> to vector<8x512xf32>
        %84 = arith.truncf %80 : vector<8x128xf32> to vector<8x128xbf16>
        %c0_50 = arith.constant 0 : index
        %c0_51 = arith.constant 0 : index
        %85 = vector.load %arg7[%c0_50, %c0_51] : memref<128x512xbf16, #tpu.memory_space<vmem>>, vector<128x512xbf16>
        %cst_52 = arith.constant dense<0.000000e+00> : vector<8x512xf32>
        %86 = tpu.matmul %84, %85, %cst_52 {dimension_numbers = #tpu.dot_dimension_numbers<[1], [0], [0], [1], [0, 0, 1, 1], [], []>} : vector<8x128xbf16>, vector<128x512xbf16>, vector<8x512xf32> -> vector<8x512xf32>
        %87 = arith.addf %83, %86 : vector<8x512xf32>
        %88 = vector.extract_strided_slice %87 {offsets = [0, 0], sizes = [8, 384], strides = [1, 1]} : vector<8x512xf32> to vector<8x384xf32>
        %89 = arith.negf %88 : vector<8x384xf32>
        %90 = math.exp %89 : vector<8x384xf32>
        %cst_53 = arith.constant 1.000000e+00 : f32
        %91 = vector.broadcast %cst_53 : f32 to vector<8x384xf32>
        %92 = arith.addf %91, %90 : vector<8x384xf32>
        %93 = arith.divf %91, %92 : vector<8x384xf32>
        %94 = vector.extract_strided_slice %87 {offsets = [0, 384], sizes = [8, 128], strides = [1, 1]} : vector<8x512xf32> to vector<8x128xf32>
        %95 = math.tanh %94 : vector<8x128xf32>
        %96 = vector.extract_strided_slice %93 {offsets = [0, 0], sizes = [8, 128], strides = [1, 1]} : vector<8x384xf32> to vector<8x128xf32>
        %97 = vector.extract_strided_slice %93 {offsets = [0, 128], sizes = [8, 128], strides = [1, 1]} : vector<8x384xf32> to vector<8x128xf32>
        %98 = vector.extract_strided_slice %93 {offsets = [0, 256], sizes = [8, 128], strides = [1, 1]} : vector<8x384xf32> to vector<8x128xf32>
        %99 = arith.mulf %97, %78 : vector<8x128xf32>
        %100 = arith.mulf %96, %95 : vector<8x128xf32>
        %101 = arith.addf %99, %100 : vector<8x128xf32>
        %102 = math.tanh %101 : vector<8x128xf32>
        %103 = arith.mulf %98, %102 : vector<8x128xf32>
        scf.yield %103, %101 : vector<8x128xf32>, vector<8x128xf32>
      }
      %c9_i32_26 = arith.constant 9 : i32
      %c0_27 = arith.constant 0 : index
      %c0_28 = arith.constant 0 : index
      %38 = vector.load %arg9[%c0_27, %c0_28] : memref<128x128xf32, #tpu.memory_space<vmem>>, vector<128x128xf32>
      %cst_29 = arith.constant dense<0.000000e+00> : vector<8x128xf32>
      %39 = tpu.matmul %37#0, %38, %cst_29 {dimension_numbers = #tpu.dot_dimension_numbers<[1], [0], [0], [1], [0, 0, 1, 1], [], []>} : vector<8x128xf32>, vector<128x128xf32>, vector<8x128xf32> -> vector<8x128xf32>
      %c0_30 = arith.constant 0 : index
      %c0_31 = arith.constant 0 : index
      %40 = vector.load %arg10[%c0_30, %c0_31] : memref<1x128xf32, #tpu.memory_space<vmem>>, vector<1x128xf32>
      %41 = vector.broadcast %40 : vector<1x128xf32> to vector<8x128xf32>
      %42 = arith.addf %39, %41 : vector<8x128xf32>
      %43 = arith.negf %42 : vector<8x128xf32>
      %44 = math.exp %43 : vector<8x128xf32>
      %cst_32 = arith.constant 1.000000e+00 : f32
      %45 = vector.broadcast %cst_32 : f32 to vector<8x128xf32>
      %46 = arith.addf %45, %44 : vector<8x128xf32>
      %47 = arith.divf %45, %46 : vector<8x128xf32>
      %c0_33 = arith.constant 0 : index
      %c0_34 = arith.constant 0 : index
      %48 = vector.load %arg11[%c0_33, %c0_34] : memref<128x1xf32, #tpu.memory_space<vmem>>, vector<128x1xf32>
      %cst_35 = arith.constant dense<0.000000e+00> : vector<8x1xf32>
      %49 = tpu.matmul %47, %48, %cst_35 {dimension_numbers = #tpu.dot_dimension_numbers<[1], [0], [0], [1], [0, 0, 1, 1], [], []>} : vector<8x128xf32>, vector<128x1xf32>, vector<8x1xf32> -> vector<8x1xf32>
      %c0_36 = arith.constant 0 : index
      %c0_37 = arith.constant 0 : index
      %50 = vector.load %arg12[%c0_36, %c0_37] : memref<1x1xf32, #tpu.memory_space<vmem>>, vector<1x1xf32>
      %51 = vector.broadcast %50 : vector<1x1xf32> to vector<8x1xf32>
      %52 = arith.addf %49, %51 : vector<8x1xf32>
      %53 = vector.extract_strided_slice %52 {offsets = [0, 0], sizes = [2, 1], strides = [1, 1]} : vector<8x1xf32> to vector<2x1xf32>
      %c0_38 = arith.constant 0 : index
      %c0_39 = arith.constant 0 : index
      %54 = vector.load %arg13[%c0_38, %c0_39] : memref<2x1xf32, #tpu.memory_space<vmem>>, vector<2x1xf32>
      tpu.vector_store %arg13[%c0_38, %c0_39], %53 {strides = array<i32>} : memref<2x1xf32, #tpu.memory_space<vmem>>, vector<2x1xf32>,
    } else {
    }
    return
  }
  func.func @transform_0(%arg0: i32) -> (i32, i32) {
    %c0_i32 = arith.constant 0 : i32
    %c0_i32_0 = arith.constant 0 : i32
    %c0_i32_1 = arith.constant 0 : i32
    return %c0_i32, %c0_i32_0 : i32, i32
  }
  func.func @transform_1(%arg0: i32) -> (i32, i32) {
    %c0_i32 = arith.constant 0 : i32
    %c0_i32_0 = arith.constant 0 : i32
    %c0_i32_1 = arith.constant 0 : i32
    return %c0_i32, %c0_i32_0 : i32, i32
  }
  func.func @transform_2(%arg0: i32) -> (i32, i32) {
    %c0_i32 = arith.constant 0 : i32
    %c0_i32_0 = arith.constant 0 : i32
    %c0_i32_1 = arith.constant 0 : i32
    return %c0_i32, %c0_i32_0 : i32, i32
  }
  func.func @transform_3(%arg0: i32) -> (i32, i32, i32) {
    %c0_i32 = arith.constant 0 : i32
    %c0_i32_0 = arith.constant 0 : i32
    %c0_i32_1 = arith.constant 0 : i32
    return %arg0, %c0_i32, %c0_i32_0 : i32, i32, i32
  }
  func.func @transform_4(%arg0: i32) -> (i32, i32) {
    %c0_i32 = arith.constant 0 : i32
    %c0_i32_0 = arith.constant 0 : i32
    %c0_i32_1 = arith.constant 0 : i32
    return %c0_i32, %c0_i32_0 : i32, i32
  }
  func.func @transform_5(%arg0: i32) -> (i32, i32) {
    %c0_i32 = arith.constant 0 : i32
    %c0_i32_0 = arith.constant 0 : i32
    %c0_i32_1 = arith.constant 0 : i32
    return %c0_i32, %c0_i32_0 : i32, i32
  }
  func.func @transform_6(%arg0: i32) -> (i32, i32) {
    %c0_i32 = arith.constant 0 : i32
    %c0_i32_0 = arith.constant 0 : i32
    %c0_i32_1 = arith.constant 0 : i32
    return %c0_i32, %c0_i32_0 : i32, i32
  }
  func.func @transform_7(%arg0: i32) -> (i32, i32) {
    %c0_i32 = arith.constant 0 : i32
    %c0_i32_0 = arith.constant 0 : i32
    %c0_i32_1 = arith.constant 0 : i32
    return %c0_i32, %c0_i32_0 : i32, i32
  }
  func.func @transform_8(%arg0: i32) -> (i32, i32) {
    %c0_i32 = arith.constant 0 : i32
    %c0_i32_0 = arith.constant 0 : i32
    %c0_i32_1 = arith.constant 0 : i32
    return %c0_i32, %c0_i32_0 : i32, i32
  }
  func.func @transform_9(%arg0: i32) -> (i32, i32) {
    %c0_i32 = arith.constant 0 : i32
    %c0_i32_0 = arith.constant 0 : i32
    %c0_i32_1 = arith.constant 0 : i32
    return %c0_i32, %c0_i32_0 : i32, i32
  }
  func.func @transform_10(%arg0: i32) -> (i32, i32) {
    %c0_i32 = arith.constant 0 : i32
    %c0_i32_0 = arith.constant 0 : i32
    %c0_i32_1 = arith.constant 0 : i32
    return %c0_i32, %c0_i32_0 : i32, i32
  }
  func.func @transform_11(%arg0: i32) -> (i32, i32) {
    %c0_i32 = arith.constant 0 : i32
    %c0_i32_0 = arith.constant 0 : i32
    %c0_i32_1 = arith.constant 0 : i32
    return %c0_i32, %c0_i32_0 : i32, i32
  }
  func.func @transform_12(%arg0: i32) -> (i32, i32) {
    %c0_i32 = arith.constant 0 : i32
    %c0_i32_0 = arith.constant 0 : i32
    %c0_i32_1 = arith.constant 0 : i32
    return %c0_i32, %c0_i32_0 : i32, i32
  }
}

</mosaic_0001>

<llo_original>
// kernel: hybrid_forward.1
$region0: #{hybrid_forward.1}
  #allocation0 [shape = 'u32[]', space=smem, size = 0x4, offset = 0x4, fixed_abs, tag = 'smem constant byte address 0x4 - core index']
  #allocation1 [shape = 'u32[144,128]{1,0:T(1,128)}', space=vmem, size = 0x12000, scoped, tag = 'internal scratch']
  #allocation2 [shape = 'f32[200,256]{1,0:T(8,128)}', space=vmem, size = 0x32000, scoped, tag = 'scratch operand']
  #allocation3 [shape = 'f32[144,256]{1,0:T(8,128)}', space=vmem, size = 0x24000, scoped, tag = 'scratch operand']
  #allocation4 [shape = 'f32[18,8,512]{2,1,0:T(8,128)}', space=vmem, size = 0x48000, scoped, tag = 'scratch operand']
  #allocation5 [shape = 'f32[1,1]{1,0:T(1,128)S(1)}', space=vmem, size = 0x200, scoped, tag = 'scoped memory for hybrid_forward.1']
  %s0 = inlined_call_operand.vmem [shape: f32[200,8], index: 0, kind: input, shape index: {}]
  %s1 = inlined_call_operand.vmem [shape: f32[8,256], index: 1, kind: input, shape index: {}]
  %s2 = inlined_call_operand.vmem [shape: f32[1,256], index: 2, kind: input, shape index: {}]
  %s3 = inlined_call_operand.hbm [shape: bf16[8,256,256], index: 3, kind: input, shape index: {}]
  %s4 = inlined_call_operand.vmem [shape: f32[1,256], index: 4, kind: input, shape index: {}]
  %s5 = inlined_call_operand.vmem [shape: bf16[256,512], index: 5, kind: input, shape index: {}]
  %s6 = inlined_call_operand.vmem [shape: bf16[128,512], index: 6, kind: input, shape index: {}]
  %s7 = inlined_call_operand.vmem [shape: f32[1,512], index: 7, kind: input, shape index: {}]
  %s8 = inlined_call_operand.vmem [shape: f32[128,128], index: 8, kind: input, shape index: {}]
  %s9 = inlined_call_operand.vmem [shape: f32[1,128], index: 9, kind: input, shape index: {}]
  %s10 = inlined_call_operand.vmem [shape: f32[128,1], index: 10, kind: input, shape index: {}]
  %s11 = inlined_call_operand.<no memory space> [shape: f32[1,1], index: 11, kind: input, shape index: {}]
  %s12 = inlined_call_operand.vmem [shape: f32[2,1], index: 12, kind: output, shape index: {}]
  %s13 = sld [smem:[#allocation0]]
  $region100: #{hybrid_forward.1} parent=0
    _
  %s15 = ssub.s32 1, %s13
  %s16 = scalar_select 0, %s15, %s13
  %v17 = vstv %s11
  %18 = vst [vmem:[#allocation5] sm:$0x1] %v17
  $region1: #{hybrid_forward.1} parent=0
    #allocation6 [shape = 'u8[262144]{0}', space=vmem, size = 0x40000, scoped, tag = 'input window, operand 3']
    #allocation7 [shape = 's32[2]{0}', space=sflag, size = 0x8, scoped, tag = 'scoped memory for hybrid_forward.1']
    %19 = vsyncpa [#allocation7], 0
    %s20 = scalar_lea.sflag [#allocation7], 1
    %21 = vsyncpa %s20, 0
    loop: start=0, step=1, limit=10
    $region2: #{hybrid_forward.1} parent=1 // loop_pre_header
      _
    $region3: #{hybrid_forward.1} parent=1 // loop_header
      %s23 = sphi 0, %s27
      %p24 = scmp.ge.s32.totalorder %s23, 10
      %s31 = sphi 0, %s31
      %s33 = sphi 0, %s31
      %s34 = sphi 0, %s33
      %s48 = sphi 0, %s34
      %s52 = sphi 0, %s52
      %s54 = sphi 0, %s52
      %s55 = sphi 0, %s54
      %s69 = sphi 0, %s55
      %s73 = sphi 0, %s73
      %s75 = sphi 0, %s73
      %s76 = sphi 0, %s75
      %s90 = sphi 0, %s76
      %s96 = sphi 0, %s98
      %s99 = sphi 0, %s96
      %s100 = sphi 0, %s99
      %s116 = sphi 0, %s100
      %s120 = sphi 0, %s120
      %s122 = sphi 0, %s120
      %s123 = sphi 0, %s122
      %s137 = sphi 0, %s123
      %s141 = sphi 0, %s141
      %s143 = sphi 0, %s141
      %s144 = sphi 0, %s143
      %s158 = sphi 0, %s144
      %s162 = sphi 0, %s162
      %s164 = sphi 0, %s162
      %s165 = sphi 0, %s164
      %s179 = sphi 0, %s165
      %s183 = sphi 0, %s183
      %s185 = sphi 0, %s183
      %s186 = sphi 0, %s185
      %s200 = sphi 0, %s186
      %s204 = sphi 0, %s204
      %s206 = sphi 0, %s204
      %s207 = sphi 0, %s206
      %s221 = sphi 0, %s207
      %s225 = sphi 0, %s225
      %s227 = sphi 0, %s225
      %s228 = sphi 0, %s227
      %s242 = sphi 0, %s228
      %s246 = sphi 0, %s246
      %s248 = sphi 0, %s246
      %s249 = sphi 0, %s248
      %s263 = sphi 0, %s249
      %s267 = sphi 0, %s267
      %s269 = sphi 0, %s267
      %s270 = sphi 0, %s269
      %s284 = sphi 0, %s270
      %s288 = sphi 0, %s288
      %s290 = sphi 0, %s288
      %s291 = sphi 0, %s290
      %s305 = sphi 0, %s291
    $region4: #{hybrid_forward.1} parent=1 // loop_header_branch
      %26 = sbr.rel (%p24) target = $region8
    $region5: #{hybrid_forward.1} parent=1 // loop_body
      %s28 = ssub.s32 %s23, 1
      %s29 = ssub.s32 %s23, 2
      %s30 = sadd.s32 %s23, 1
      %s32 = sadd.s32 %s31, 1
      %p35 = scmp.eq.s32.totalorder %s23, 7
      %p36 = scmp.ne.s32.totalorder %s31, %s33
      %p37 = scmp.eq.s32.totalorder %s23, 0
      %p38 = por %p36, %p37
      %p39 = scmp.ne.s32.totalorder %s31, %s33
      %p40 = scmp.eq.s32.totalorder %s28, 7
      %p41 = por %p39, %p40
      %p42 = scmp.ne.s32.totalorder %s33, %s34
      %p43 = scmp.eq.s32.totalorder %s28, 0
      %p44 = por %p42, %p43
      %p45 = scmp.ne.s32.totalorder %s33, %s34
      %p46 = scmp.eq.s32.totalorder %s29, 7
      %p47 = por %p45, %p46
      %p49 = scmp.ne.s32.totalorder %s34, %s48
      %p50 = scmp.eq.s32.totalorder %s29, 0
      %p51 = por %p49, %p50
      %s53 = sadd.s32 %s52, 1
      %p56 = scmp.eq.s32.totalorder %s23, 7
      %p57 = scmp.ne.s32.totalorder %s52, %s54
      %p58 = scmp.eq.s32.totalorder %s23, 0
      %p59 = por %p57, %p58
      %p60 = scmp.ne.s32.totalorder %s52, %s54
      %p61 = scmp.eq.s32.totalorder %s28, 7
      %p62 = por %p60, %p61
      %p63 = scmp.ne.s32.totalorder %s54, %s55
      %p64 = scmp.eq.s32.totalorder %s28, 0
      %p65 = por %p63, %p64
      %p66 = scmp.ne.s32.totalorder %s54, %s55
      %p67 = scmp.eq.s32.totalorder %s29, 7
      %p68 = por %p66, %p67
      %p70 = scmp.ne.s32.totalorder %s55, %s69
      %p71 = scmp.eq.s32.totalorder %s29, 0
      %p72 = por %p70, %p71
      %s74 = sadd.s32 %s73, 1
      %p77 = scmp.eq.s32.totalorder %s23, 7
      %p78 = scmp.ne.s32.totalorder %s73, %s75
      %p79 = scmp.eq.s32.totalorder %s23, 0
      %p80 = por %p78, %p79
      %p81 = scmp.ne.s32.totalorder %s73, %s75
      %p82 = scmp.eq.s32.totalorder %s28, 7
      %p83 = por %p81, %p82
      %p84 = scmp.ne.s32.totalorder %s75, %s76
      %p85 = scmp.eq.s32.totalorder %s28, 0
      %p86 = por %p84, %p85
      %p87 = scmp.ne.s32.totalorder %s75, %s76
      %p88 = scmp.eq.s32.totalorder %s29, 7
      %p89 = por %p87, %p88
      %p91 = scmp.ne.s32.totalorder %s76, %s90
      %p92 = scmp.eq.s32.totalorder %s29, 0
      %p93 = por %p91, %p92
      %s94 = ssub.s32 %s23, %s30
      %p95 = scmp.eq.s32.totalorder %s94, 0
      %s97 = sadd.s32 %s96, 1
      %s98 = scalar_select %p95, %s96, %s97
      %p101 = pneg %p95
      %p102 = scmp.eq.s32.totalorder %s23, 7
      %p103 = por %p101, %p102
      %p104 = scmp.ne.s32.totalorder %s96, %s99
      %p105 = scmp.eq.s32.totalorder %s23, 0
      %p106 = por %p104, %p105
      %p107 = scmp.ne.s32.totalorder %s96, %s99
      %p108 = scmp.eq.s32.totalorder %s28, 7
      %p109 = por %p107, %p108
      %p110 = scmp.ne.s32.totalorder %s99, %s100
      %p111 = scmp.eq.s32.totalorder %s28, 0
      %p112 = por %p110, %p111
      %p113 = scmp.ne.s32.totalorder %s99, %s100
      %p114 = scmp.eq.s32.totalorder %s29, 7
      %p115 = por %p113, %p114
      %p117 = scmp.ne.s32.totalorder %s100, %s116
      %p118 = scmp.eq.s32.totalorder %s29, 0
      %p119 = por %p117, %p118
      %s121 = sadd.s32 %s120, 1
      %p124 = scmp.eq.s32.totalorder %s23, 7
      %p125 = scmp.ne.s32.totalorder %s120, %s122
      %p126 = scmp.eq.s32.totalorder %s23, 0
      %p127 = por %p125, %p126
      %p128 = scmp.ne.s32.totalorder %s120, %s122
      %p129 = scmp.eq.s32.totalorder %s28, 7
      %p130 = por %p128, %p129
      %p131 = scmp.ne.s32.totalorder %s122, %s123
      %p132 = scmp.eq.s32.totalorder %s28, 0
      %p133 = por %p131, %p132
      %p134 = scmp.ne.s32.totalorder %s122, %s123
      %p135 = scmp.eq.s32.totalorder %s29, 7
      %p136 = por %p134, %p135
      %p138 = scmp.ne.s32.totalorder %s123, %s137
      %p139 = scmp.eq.s32.totalorder %s29, 0
      %p140 = por %p138, %p139
      %s142 = sadd.s32 %s141, 1
      %p145 = scmp.eq.s32.totalorder %s23, 7
      %p146 = scmp.ne.s32.totalorder %s141, %s143
      %p147 = scmp.eq.s32.totalorder %s23, 0
      %p148 = por %p146, %p147
      %p149 = scmp.ne.s32.totalorder %s141, %s143
      %p150 = scmp.eq.s32.totalorder %s28, 7
      %p151 = por %p149, %p150
      %p152 = scmp.ne.s32.totalorder %s143, %s144
      %p153 = scmp.eq.s32.totalorder %s28, 0
      %p154 = por %p152, %p153
      %p155 = scmp.ne.s32.totalorder %s143, %s144
      %p156 = scmp.eq.s32.totalorder %s29, 7
      %p157 = por %p155, %p156
      %p159 = scmp.ne.s32.totalorder %s144, %s158
      %p160 = scmp.eq.s32.totalorder %s29, 0
      %p161 = por %p159, %p160
      %s163 = sadd.s32 %s162, 1
      %p166 = scmp.eq.s32.totalorder %s23, 7
      %p167 = scmp.ne.s32.totalorder %s162, %s164
      %p168 = scmp.eq.s32.totalorder %s23, 0
      %p169 = por %p167, %p168
      %p170 = scmp.ne.s32.totalorder %s162, %s164
      %p171 = scmp.eq.s32.totalorder %s28, 7
      %p172 = por %p170, %p171
      %p173 = scmp.ne.s32.totalorder %s164, %s165
      %p174 = scmp.eq.s32.totalorder %s28, 0
      %p175 = por %p173, %p174
      %p176 = scmp.ne.s32.totalorder %s164, %s165
      %p177 = scmp.eq.s32.totalorder %s29, 7
      %p178 = por %p176, %p177
      %p180 = scmp.ne.s32.totalorder %s165, %s179
      %p181 = scmp.eq.s32.totalorder %s29, 0
      %p182 = por %p180, %p181
      %s184 = sadd.s32 %s183, 1
      %p187 = scmp.eq.s32.totalorder %s23, 7
      %p188 = scmp.ne.s32.totalorder %s183, %s185
      %p189 = scmp.eq.s32.totalorder %s23, 0
      %p190 = por %p188, %p189
      %p191 = scmp.ne.s32.totalorder %s183, %s185
      %p192 = scmp.eq.s32.totalorder %s28, 7
      %p193 = por %p191, %p192
      %p194 = scmp.ne.s32.totalorder %s185, %s186
      %p195 = scmp.eq.s32.totalorder %s28, 0
      %p196 = por %p194, %p195
      %p197 = scmp.ne.s32.totalorder %s185, %s186
      %p198 = scmp.eq.s32.totalorder %s29, 7
      %p199 = por %p197, %p198
      %p201 = scmp.ne.s32.totalorder %s186, %s200
      %p202 = scmp.eq.s32.totalorder %s29, 0
      %p203 = por %p201, %p202
      %s205 = sadd.s32 %s204, 1
      %p208 = scmp.eq.s32.totalorder %s23, 7
      %p209 = scmp.ne.s32.totalorder %s204, %s206
      %p210 = scmp.eq.s32.totalorder %s23, 0
      %p211 = por %p209, %p210
      %p212 = scmp.ne.s32.totalorder %s204, %s206
      %p213 = scmp.eq.s32.totalorder %s28, 7
      %p214 = por %p212, %p213
      %p215 = scmp.ne.s32.totalorder %s206, %s207
      %p216 = scmp.eq.s32.totalorder %s28, 0
      %p217 = por %p215, %p216
      %p218 = scmp.ne.s32.totalorder %s206, %s207
      %p219 = scmp.eq.s32.totalorder %s29, 7
      %p220 = por %p218, %p219
      %p222 = scmp.ne.s32.totalorder %s207, %s221
      %p223 = scmp.eq.s32.totalorder %s29, 0
      %p224 = por %p222, %p223
      %s226 = sadd.s32 %s225, 1
      %p229 = scmp.eq.s32.totalorder %s23, 7
      %p230 = scmp.ne.s32.totalorder %s225, %s227
      %p231 = scmp.eq.s32.totalorder %s23, 0
      %p232 = por %p230, %p231
      %p233 = scmp.ne.s32.totalorder %s225, %s227
      %p234 = scmp.eq.s32.totalorder %s28, 7
      %p235 = por %p233, %p234
      %p236 = scmp.ne.s32.totalorder %s227, %s228
      %p237 = scmp.eq.s32.totalorder %s28, 0
      %p238 = por %p236, %p237
      %p239 = scmp.ne.s32.totalorder %s227, %s228
      %p240 = scmp.eq.s32.totalorder %s29, 7
      %p241 = por %p239, %p240
      %p243 = scmp.ne.s32.totalorder %s228, %s242
      %p244 = scmp.eq.s32.totalorder %s29, 0
      %p245 = por %p243, %p244
      %s247 = sadd.s32 %s246, 1
      %p250 = scmp.eq.s32.totalorder %s23, 7
      %p251 = scmp.ne.s32.totalorder %s246, %s248
      %p252 = scmp.eq.s32.totalorder %s23, 0
      %p253 = por %p251, %p252
      %p254 = scmp.ne.s32.totalorder %s246, %s248
      %p255 = scmp.eq.s32.totalorder %s28, 7
      %p256 = por %p254, %p255
      %p257 = scmp.ne.s32.totalorder %s248, %s249
      %p258 = scmp.eq.s32.totalorder %s28, 0
      %p259 = por %p257, %p258
      %p260 = scmp.ne.s32.totalorder %s248, %s249
      %p261 = scmp.eq.s32.totalorder %s29, 7
      %p262 = por %p260, %p261
      %p264 = scmp.ne.s32.totalorder %s249, %s263
      %p265 = scmp.eq.s32.totalorder %s29, 0
      %p266 = por %p264, %p265
      %s268 = sadd.s32 %s267, 1
      %p271 = scmp.eq.s32.totalorder %s23, 7
      %p272 = scmp.ne.s32.totalorder %s267, %s269
      %p273 = scmp.eq.s32.totalorder %s23, 0
      %p274 = por %p272, %p273
      %p275 = scmp.ne.s32.totalorder %s267, %s269
      %p276 = scmp.eq.s32.totalorder %s28, 7
      %p277 = por %p275, %p276
      %p278 = scmp.ne.s32.totalorder %s269, %s270
      %p279 = scmp.eq.s32.totalorder %s28, 0
      %p280 = por %p278, %p279
      %p281 = scmp.ne.s32.totalorder %s269, %s270
      %p282 = scmp.eq.s32.totalorder %s29, 7
      %p283 = por %p281, %p282
      %p285 = scmp.ne.s32.totalorder %s270, %s284
      %p286 = scmp.eq.s32.totalorder %s29, 0
      %p287 = por %p285, %p286
      %s289 = sadd.s32 %s288, 1
      %p292 = scmp.eq.s32.totalorder %s23, 7
      %p293 = scmp.ne.s32.totalorder %s288, %s290
      %p294 = scmp.eq.s32.totalorder %s23, 0
      %p295 = por %p293, %p294
      %p296 = scmp.ne.s32.totalorder %s288, %s290
      %p297 = scmp.eq.s32.totalorder %s28, 7
      %p298 = por %p296, %p297
      %p299 = scmp.ne.s32.totalorder %s290, %s291
      %p300 = scmp.eq.s32.totalorder %s28, 0
      %p301 = por %p299, %p300
      %p302 = scmp.ne.s32.totalorder %s290, %s291
      %p303 = scmp.eq.s32.totalorder %s29, 7
      %p304 = por %p302, %p303
      %p306 = scmp.ne.s32.totalorder %s291, %s305
      %p307 = scmp.eq.s32.totalorder %s29, 0
      %p308 = por %p306, %p307
      %p309 = scmp.le.s32.totalorder 1, %s23
      %p310 = scmp.lt.s32.totalorder %s23, 9
      %p311 = pnand %p309, %p310
      %p312 = pneg %p311
      // Predicated region
      $region9: #{hybrid_forward.1} parent=5 // pred_check
        _
      $region10: #{hybrid_forward.1} parent=5 // pred_check_branch
        %314 = sbr.rel (%p311) target = $region12
      $region11: #{hybrid_forward.1} parent=5 // pred_region
        %s315 = ssub.s32 %s23, 1
        // Predicated region
        $region13: #{hybrid_forward.1} parent=11 // pred_check
          %p316 = pneg %p44
        $region14: #{hybrid_forward.1} parent=11 // pred_check_branch
          %318 = sbr.rel (%p316) target = $region16
        $region15: #{hybrid_forward.1} parent=11 // pred_region
          _
        $region16: #{hybrid_forward.1} parent=11 // pred_fallthru
          _
        // Predicated region
        $region17: #{hybrid_forward.1} parent=11 // pred_check
          %p319 = pneg %p65
        $region18: #{hybrid_forward.1} parent=11 // pred_check_branch
          %321 = sbr.rel (%p319) target = $region20
        $region19: #{hybrid_forward.1} parent=11 // pred_region
          _
        $region20: #{hybrid_forward.1} parent=11 // pred_fallthru
          _
        // Predicated region
        $region21: #{hybrid_forward.1} parent=11 // pred_check
          %p322 = pneg %p86
        $region22: #{hybrid_forward.1} parent=11 // pred_check_branch
          %324 = sbr.rel (%p322) target = $region24
        $region23: #{hybrid_forward.1} parent=11 // pred_region
          _
        $region24: #{hybrid_forward.1} parent=11 // pred_fallthru
          _
        // Predicated region
        $region25: #{hybrid_forward.1} parent=11 // pred_check
          %p325 = pneg %p133
        $region26: #{hybrid_forward.1} parent=11 // pred_check_branch
          %327 = sbr.rel (%p325) target = $region28
        $region27: #{hybrid_forward.1} parent=11 // pred_region
          _
        $region28: #{hybrid_forward.1} parent=11 // pred_fallthru
          _
        // Predicated region
        $region29: #{hybrid_forward.1} parent=11 // pred_check
          %p328 = pneg %p154
        $region30: #{hybrid_forward.1} parent=11 // pred_check_branch
          %330 = sbr.rel (%p328) target = $region32
        $region31: #{hybrid_forward.1} parent=11 // pred_region
          _
        $region32: #{hybrid_forward.1} parent=11 // pred_fallthru
          _
        // Predicated region
        $region33: #{hybrid_forward.1} parent=11 // pred_check
          %p331 = pneg %p175
        $region34: #{hybrid_forward.1} parent=11 // pred_check_branch
          %333 = sbr.rel (%p331) target = $region36
        $region35: #{hybrid_forward.1} parent=11 // pred_region
          _
        $region36: #{hybrid_forward.1} parent=11 // pred_fallthru
          _
        // Predicated region
        $region37: #{hybrid_forward.1} parent=11 // pred_check
          %p334 = pneg %p196
        $region38: #{hybrid_forward.1} parent=11 // pred_check_branch
          %336 = sbr.rel (%p334) target = $region40
        $region39: #{hybrid_forward.1} parent=11 // pred_region
          _
        $region40: #{hybrid_forward.1} parent=11 // pred_fallthru
          _
        // Predicated region
        $region41: #{hybrid_forward.1} parent=11 // pred_check
          %p337 = pneg %p217
        $region42: #{hybrid_forward.1} parent=11 // pred_check_branch
          %339 = sbr.rel (%p337) target = $region44
        $region43: #{hybrid_forward.1} parent=11 // pred_region
          _
        $region44: #{hybrid_forward.1} parent=11 // pred_fallthru
          _
        // Predicated region
        $region45: #{hybrid_forward.1} parent=11 // pred_check
          %p340 = pneg %p238
        $region46: #{hybrid_forward.1} parent=11 // pred_check_branch
          %342 = sbr.rel (%p340) target = $region48
        $region47: #{hybrid_forward.1} parent=11 // pred_region
          _
        $region48: #{hybrid_forward.1} parent=11 // pred_fallthru
          _
        // Predicated region
        $region49: #{hybrid_forward.1} parent=11 // pred_check
          %p343 = pneg %p259
        $region50: #{hybrid_forward.1} parent=11 // pred_check_branch
          %345 = sbr.rel (%p343) target = $region52
        $region51: #{hybrid_forward.1} parent=11 // pred_region
          _
        $region52: #{hybrid_forward.1} parent=11 // pred_fallthru
          _
        // Predicated region
        $region53: #{hybrid_forward.1} parent=11 // pred_check
          %p346 = pneg %p280
        $region54: #{hybrid_forward.1} parent=11 // pred_check_branch
          %348 = sbr.rel (%p346) target = $region56
        $region55: #{hybrid_forward.1} parent=11 // pred_region
          _
        $region56: #{hybrid_forward.1} parent=11 // pred_fallthru
          _
      $region12: #{hybrid_forward.1} parent=5 // pred_fallthru
        _
      %p349 = scmp.lt.s32.totalorder %s23, 8
      // Predicated region
      $region57: #{hybrid_forward.1} parent=5 // pred_check
        %p350 = pneg %p349
      $region58: #{hybrid_forward.1} parent=5 // pred_check_branch
        %352 = sbr.rel (%p350) target = $region60
      $region59: #{hybrid_forward.1} parent=5 // pred_region
        // Predicated region
        $region61: #{hybrid_forward.1} parent=59 // pred_check
          %p353 = pneg %p106
        $region62: #{hybrid_forward.1} parent=59 // pred_check_branch
          %355 = sbr.rel (%p353) target = $region64
        $region63: #{hybrid_forward.1} parent=59 // pred_region
          %s356 = sand.u32 %s96, 1
          %s357 = scalar_lea.sflag [#allocation7], %s356
          %s358 = sand.u32 %s96, 1
          %s359 = smul.addr %s358, 256
          %s360 = scalar_lea.vmem [#allocation6], %s359
          %s362 = ssub.s32 4096, 4096
          %363 = vsyncadd %s357, %s362
          %s364 = smul.addr %s23, 64
          %s365 = smul.addr %s364, 64
          %s366 = scalar_lea.hbm %s3, %s365
          %s367 = sshll.u32 %s360, 4
          %s368 = int_to_ptr.vmem [resolvable:$true] %s367
          %373 = dma.hbm_to_vmem [thread:$0]  %s366, 4096, %s368, %s357, 128, 128, 8
        $region64: #{hybrid_forward.1} parent=59 // pred_fallthru
          _
      $region60: #{hybrid_forward.1} parent=5 // pred_fallthru
        _
      %p374 = scmp.le.s32.totalorder 1, %s23
      %p375 = scmp.lt.s32.totalorder %s23, 9
      %p376 = pnand %p374, %p375
      %p377 = pneg %p376
      // Predicated region
      $region65: #{hybrid_forward.1} parent=5 // pred_check
        _
      $region66: #{hybrid_forward.1} parent=5 // pred_check_branch
        %379 = sbr.rel (%p376) target = $region68
      $region67: #{hybrid_forward.1} parent=5 // pred_region
        %s380 = ssub.s32 %s23, 1
        %s381 = sand.u32 %s99, 1
        %s382 = scalar_lea.sflag [#allocation7], %s381
        %s383 = sand.u32 %s99, 1
        %s384 = smul.addr %s383, 256
        %s385 = scalar_lea.vmem [#allocation6], %s384
        // Predicated region
        $region69: #{hybrid_forward.1} parent=67 // pred_check
          %p386 = pneg %p112
        $region70: #{hybrid_forward.1} parent=67 // pred_check_branch
          %388 = sbr.rel (%p386) target = $region72
        $region71: #{hybrid_forward.1} parent=67 // pred_region
          %389 = dma.done %s382, 4096
        $region72: #{hybrid_forward.1} parent=67 // pred_fallthru
          _
        %p390 = pneg %p44
        %p391 = pneg %p41
        %p392 = pneg %p65
        %p393 = pneg %p62
        %p394 = pneg %p86
        %p395 = pneg %p83
        %s396 = sand.u32 %s99, 1
        %s397 = scalar_lea.sflag [#allocation7], %s396
        %s398 = sand.u32 %s99, 1
        %s399 = smul.addr %s398, 256
        %s400 = scalar_lea.vmem [#allocation6], %s399
        %p401 = pneg %p112
        %p402 = pneg %p109
        %p403 = pneg %p133
        %p404 = pneg %p130
        %p405 = pneg %p154
        %p406 = pneg %p151
        %p407 = pneg %p175
        %p408 = pneg %p172
        %p409 = pneg %p196
        %p410 = pneg %p193
        %p411 = pneg %p217
        %p412 = pneg %p214
        %p413 = pneg %p238
        %p414 = pneg %p235
        %p415 = pneg %p259
        %p416 = pneg %p256
        %p417 = pneg %p280
        %p418 = pneg %p277
        %p419 = pneg %p301
        %p420 = pneg %p298
        %p422 = scmp.eq.s32.totalorder %s28, 0
        // Predicated region
        $region73: #{hybrid_forward.1} parent=67 // pred_check
          %p423 = pneg %p422
        $region74: #{hybrid_forward.1} parent=67 // pred_check_branch
          %425 = sbr.rel (%p423) target = $region76
        $region75: #{hybrid_forward.1} parent=67 // pred_region
          %v426 = vld [vmem:[%s0] sm:$0xff]
          %v427 = vld [vmem:[%s0 + $0x8] sm:$0xff]
          %v428 = vld [vmem:[%s0 + $0x10] sm:$0xff]
          %v429 = vld [vmem:[%s0 + $0x18] sm:$0xff]
          %v430 = vld [vmem:[%s0 + $0x20] sm:$0xff]
          %v431 = vld [vmem:[%s0 + $0x28] sm:$0xff]
          %v432 = vld [vmem:[%s0 + $0x30] sm:$0xff]
          %v433 = vld [vmem:[%s0 + $0x38] sm:$0xff]
          %v434 = vld [vmem:[%s0 + $0x40] sm:$0xff]
          %v435 = vld [vmem:[%s0 + $0x48] sm:$0xff]
          %v436 = vld [vmem:[%s0 + $0x50] sm:$0xff]
          %v437 = vld [vmem:[%s0 + $0x58] sm:$0xff]
          %v438 = vld [vmem:[%s0 + $0x60] sm:$0xff]
          %v439 = vld [vmem:[%s0 + $0x68] sm:$0xff]
          %v440 = vld [vmem:[%s0 + $0x70] sm:$0xff]
          %v441 = vld [vmem:[%s0 + $0x78] sm:$0xff]
          %v442 = vld [vmem:[%s0 + $0x80] sm:$0xff]
          %v443 = vld [vmem:[%s0 + $0x88] sm:$0xff]
          %v444 = vld [vmem:[%s0 + $0x90] sm:$0xff]
          %v445 = vld [vmem:[%s0 + $0x98] sm:$0xff]
          %v446 = vld [vmem:[%s0 + $0xa0] sm:$0xff]
          %v447 = vld [vmem:[%s0 + $0xa8] sm:$0xff]
          %v448 = vld [vmem:[%s0 + $0xb0] sm:$0xff]
          %v449 = vld [vmem:[%s0 + $0xb8] sm:$0xff]
          %v450 = vld [vmem:[%s0 + $0xc0] sm:$0xff]
          %v451 = vld [vmem:[%s1] sm:$0xff]
          %v452 = vld [vmem:[%s1 + $0x8] sm:$0xff]
          %v453 = vld [vmem:[%s2] sm:$0x3]
          %v455 = vlaneseq
          %v456 = vshrl.u32 %v455, 7
          %v457 = vsub.s32 0, %v456
          %v458 = vrot.slane %v453, %v457
          %v459 = vlaneseq
          %v460 = vshrl.u32 %v459, 7
          %v461 = vsub.s32 1, %v460
          %v462 = vrot.slane %v453, %v461
          %vm465 = vcmask 64512
          %v467 = vsel %vm465, %v426, 0
          %v470 = vsel %vm465, %v427, 0
          %v473 = vsel %vm465, %v428, 0
          %v476 = vsel %vm465, %v429, 0
          %v479 = vsel %vm465, %v430, 0
          %v482 = vsel %vm465, %v431, 0
          %v485 = vsel %vm465, %v432, 0
          %v488 = vsel %vm465, %v433, 0
          %v491 = vsel %vm465, %v434, 0
          %v494 = vsel %vm465, %v435, 0
          %v497 = vsel %vm465, %v436, 0
          %v500 = vsel %vm465, %v437, 0
          %v503 = vsel %vm465, %v438, 0
          %v506 = vsel %vm465, %v439, 0
          %v509 = vsel %vm465, %v440, 0
          %v512 = vsel %vm465, %v441, 0
          %v515 = vsel %vm465, %v442, 0
          %v518 = vsel %vm465, %v443, 0
          %v521 = vsel %vm465, %v444, 0
          %v524 = vsel %vm465, %v445, 0
          %v527 = vsel %vm465, %v446, 0
          %v530 = vsel %vm465, %v447, 0
          %v533 = vsel %vm465, %v448, 0
          %v536 = vsel %vm465, %v449, 0
          %v539 = vsel %vm465, %v450, 0
          %541 = vmatprep.subr.mxu0 0.0
          %542 = vmatpush1.msra.mxu0 0.0
          %543 = vmatprep.subr.mxu0 0.0
          %544 = vmatpush1.msra.mxu0 0.0
          %545 = vmatprep.subr.mxu0 0.0
          %546 = vmatpush1.msra.mxu0 0.0
          %547 = vmatprep.subr.mxu0 0.0
          %548 = vmatpush1.msra.mxu0 0.0
          %549 = vmatprep.subr.mxu0 0.0
          %550 = vmatpush1.msra.mxu0 0.0
          %551 = vmatprep.subr.mxu0 0.0
          %552 = vmatpush1.msra.mxu0 0.0
          %553 = vmatprep.subr.mxu0 0.0
          %554 = vmatpush1.msra.mxu0 0.0
          %555 = vmatprep.subr.mxu0 0.0
          %556 = vmatpush1.msra.mxu0 0.0
          %557 = vmatprep.subr.mxu0 0.0
          %558 = vmatpush1.msra.mxu0 0.0
          %559 = vmatprep.subr.mxu0 0.0
          %560 = vmatpush1.msra.mxu0 0.0
          %561 = vmatprep.subr.mxu0 0.0
          %562 = vmatpush1.msra.mxu0 0.0
          %563 = vmatprep.subr.mxu0 0.0
          %564 = vmatpush1.msra.mxu0 0.0
          %565 = vmatprep.subr.mxu0 0.0
          %566 = vmatpush1.msra.mxu0 0.0
          %567 = vmatprep.subr.mxu0 0.0
          %568 = vmatpush1.msra.mxu0 0.0
          %569 = vmatprep.subr.mxu0 0.0
          %570 = vmatpush1.msra.mxu0 0.0
          %571 = vmatprep.subr.mxu0 %v452
          %572 = vmatpush1.msra.mxu0 %v451
          %573 = vmatprep.subr.mxu0 0.0
          %574 = vmatpush2.msra.mxu0 0.0
          %575 = vmatprep.subr.mxu0 0.0
          %576 = vmatpush2.msra.mxu0 0.0
          %577 = vmatprep.subr.mxu0 0.0
          %578 = vmatpush2.msra.mxu0 0.0
          %579 = vmatprep.subr.mxu0 0.0
          %580 = vmatpush2.msra.mxu0 0.0
          %581 = vmatprep.subr.mxu0 0.0
          %582 = vmatpush2.msra.mxu0 0.0
          %583 = vmatprep.subr.mxu0 0.0
          %584 = vmatpush2.msra.mxu0 0.0
          %585 = vmatprep.subr.mxu0 0.0
          %586 = vmatpush2.msra.mxu0 0.0
          %587 = vmatprep.subr.mxu0 0.0
          %588 = vmatpush2.msra.mxu0 0.0
          %589 = vmatprep.subr.mxu0 0.0
          %590 = vmatpush2.msra.mxu0 0.0
          %591 = vmatprep.subr.mxu0 0.0
          %592 = vmatpush2.msra.mxu0 0.0
          %593 = vmatprep.subr.mxu0 0.0
          %594 = vmatpush2.msra.mxu0 0.0
          %595 = vmatprep.subr.mxu0 0.0
          %596 = vmatpush2.msra.mxu0 0.0
          %597 = vmatprep.subr.mxu0 0.0
          %598 = vmatpush2.msra.mxu0 0.0
          %599 = vmatprep.subr.mxu0 0.0
          %600 = vmatpush2.msra.mxu0 0.0
          %601 = vmatprep.subr.mxu0 0.0
          %602 = vmatpush2.msra.mxu0 0.0
          %603 = vmatprep.subr.mxu0 0.0
          %604 = vmatpush2.msra.mxu0 0.0
          %605 = vmatprep.mubr.f32.mxu0 0.0
          %606 = vmatmul.mubr.f32.gmra.mxu0 %v467
          %v607 = vpop.f32.mrf.mxu0
          %v608 = vadd.f32 %v458, %v607
          %v609 = vpop.f32.mrf.mxu0
          %v610 = vadd.f32 %v462, %v609
          %611 = vmatprep.mubr.f32.mxu0 0.0
          %612 = vmatmul.mubr.f32.gmra.mxu0 %v470
          %v613 = vpop.f32.mrf.mxu0
          %v614 = vadd.f32 %v458, %v613
          %v615 = vpop.f32.mrf.mxu0
          %v616 = vadd.f32 %v462, %v615
          %617 = vmatprep.mubr.f32.mxu0 0.0
          %618 = vmatmul.mubr.f32.gmra.mxu0 %v473
          %v619 = vpop.f32.mrf.mxu0
          %v620 = vadd.f32 %v458, %v619
          %v621 = vpop.f32.mrf.mxu0
          %v622 = vadd.f32 %v462, %v621
          %623 = vmatprep.mubr.f32.mxu0 0.0
          %624 = vmatmul.mubr.f32.gmra.mxu0 %v476
          %v625 = vpop.f32.mrf.mxu0
          %v626 = vadd.f32 %v458, %v625
          %v627 = vpop.f32.mrf.mxu0
          %v628 = vadd.f32 %v462, %v627
          %629 = vmatprep.mubr.f32.mxu0 0.0
          %630 = vmatmul.mubr.f32.gmra.mxu0 %v479
          %v631 = vpop.f32.mrf.mxu0
          %v632 = vadd.f32 %v458, %v631
          %v633 = vpop.f32.mrf.mxu0
          %v634 = vadd.f32 %v462, %v633
          %635 = vmatprep.mubr.f32.mxu0 0.0
          %636 = vmatmul.mubr.f32.gmra.mxu0 %v482
          %v637 = vpop.f32.mrf.mxu0
          %v638 = vadd.f32 %v458, %v637
          %v639 = vpop.f32.mrf.mxu0
          %v640 = vadd.f32 %v462, %v639
          %641 = vmatprep.mubr.f32.mxu0 0.0
          %642 = vmatmul.mubr.f32.gmra.mxu0 %v485
          %v643 = vpop.f32.mrf.mxu0
          %v644 = vadd.f32 %v458, %v643
          %v645 = vpop.f32.mrf.mxu0
          %v646 = vadd.f32 %v462, %v645
          %647 = vmatprep.mubr.f32.mxu0 0.0
          %648 = vmatmul.mubr.f32.gmra.mxu0 %v488
          %v649 = vpop.f32.mrf.mxu0
          %v650 = vadd.f32 %v458, %v649
          %v651 = vpop.f32.mrf.mxu0
          %v652 = vadd.f32 %v462, %v651
          %653 = vmatprep.mubr.f32.mxu0 0.0
          %654 = vmatmul.mubr.f32.gmra.mxu0 %v491
          %v655 = vpop.f32.mrf.mxu0
          %v656 = vadd.f32 %v458, %v655
          %v657 = vpop.f32.mrf.mxu0
          %v658 = vadd.f32 %v462, %v657
          %659 = vmatprep.mubr.f32.mxu0 0.0
          %660 = vmatmul.mubr.f32.gmra.mxu0 %v494
          %v661 = vpop.f32.mrf.mxu0
          %v662 = vadd.f32 %v458, %v661
          %v663 = vpop.f32.mrf.mxu0
          %v664 = vadd.f32 %v462, %v663
          %665 = vmatprep.mubr.f32.mxu0 0.0
          %666 = vmatmul.mubr.f32.gmra.mxu0 %v497
          %v667 = vpop.f32.mrf.mxu0
          %v668 = vadd.f32 %v458, %v667
          %v669 = vpop.f32.mrf.mxu0
          %v670 = vadd.f32 %v462, %v669
          %671 = vmatprep.mubr.f32.mxu0 0.0
          %672 = vmatmul.mubr.f32.gmra.mxu0 %v500
          %v673 = vpop.f32.mrf.mxu0
          %v674 = vadd.f32 %v458, %v673
          %v675 = vpop.f32.mrf.mxu0
          %v676 = vadd.f32 %v462, %v675
          %677 = vmatprep.mubr.f32.mxu0 0.0
          %678 = vmatmul.mubr.f32.gmra.mxu0 %v503
          %v679 = vpop.f32.mrf.mxu0
          %v680 = vadd.f32 %v458, %v679
          %v681 = vpop.f32.mrf.mxu0
          %v682 = vadd.f32 %v462, %v681
          %683 = vmatprep.mubr.f32.mxu0 0.0
          %684 = vmatmul.mubr.f32.gmra.mxu0 %v506
          %v685 = vpop.f32.mrf.mxu0
          %v686 = vadd.f32 %v458, %v685
          %v687 = vpop.f32.mrf.mxu0
          %v688 = vadd.f32 %v462, %v687
          %689 = vmatprep.mubr.f32.mxu0 0.0
          %690 = vmatmul.mubr.f32.gmra.mxu0 %v509
          %v691 = vpop.f32.mrf.mxu0
          %v692 = vadd.f32 %v458, %v691
          %v693 = vpop.f32.mrf.mxu0
          %v694 = vadd.f32 %v462, %v693
          %695 = vmatprep.mubr.f32.mxu0 0.0
          %696 = vmatmul.mubr.f32.gmra.mxu0 %v512
          %v697 = vpop.f32.mrf.mxu0
          %v698 = vadd.f32 %v458, %v697
          %v699 = vpop.f32.mrf.mxu0
          %v700 = vadd.f32 %v462, %v699
          %701 = vmatprep.mubr.f32.mxu0 0.0
          %702 = vmatmul.mubr.f32.gmra.mxu0 %v515
          %v703 = vpop.f32.mrf.mxu0
          %v704 = vadd.f32 %v458, %v703
          %v705 = vpop.f32.mrf.mxu0
          %v706 = vadd.f32 %v462, %v705
          %707 = vmatprep.mubr.f32.mxu0 0.0
          %708 = vmatmul.mubr.f32.gmra.mxu0 %v518
          %v709 = vpop.f32.mrf.mxu0
          %v710 = vadd.f32 %v458, %v709
          %v711 = vpop.f32.mrf.mxu0
          %v712 = vadd.f32 %v462, %v711
          %713 = vmatprep.mubr.f32.mxu0 0.0
          %714 = vmatmul.mubr.f32.gmra.mxu0 %v521
          %v715 = vpop.f32.mrf.mxu0
          %v716 = vadd.f32 %v458, %v715
          %v717 = vpop.f32.mrf.mxu0
          %v718 = vadd.f32 %v462, %v717
          %719 = vmatprep.mubr.f32.mxu0 0.0
          %720 = vmatmul.mubr.f32.gmra.mxu0 %v524
          %v721 = vpop.f32.mrf.mxu0
          %v722 = vadd.f32 %v458, %v721
          %v723 = vpop.f32.mrf.mxu0
          %v724 = vadd.f32 %v462, %v723
          %725 = vmatprep.mubr.f32.mxu0 0.0
          %726 = vmatmul.mubr.f32.gmra.mxu0 %v527
          %v727 = vpop.f32.mrf.mxu0
          %v728 = vadd.f32 %v458, %v727
          %v729 = vpop.f32.mrf.mxu0
          %v730 = vadd.f32 %v462, %v729
          %731 = vmatprep.mubr.f32.mxu0 0.0
          %732 = vmatmul.mubr.f32.gmra.mxu0 %v530
          %v733 = vpop.f32.mrf.mxu0
          %v734 = vadd.f32 %v458, %v733
          %v735 = vpop.f32.mrf.mxu0
          %v736 = vadd.f32 %v462, %v735
          %737 = vmatprep.mubr.f32.mxu0 0.0
          %738 = vmatmul.mubr.f32.gmra.mxu0 %v533
          %v739 = vpop.f32.mrf.mxu0
          %v740 = vadd.f32 %v458, %v739
          %v741 = vpop.f32.mrf.mxu0
          %v742 = vadd.f32 %v462, %v741
          %743 = vmatprep.mubr.f32.mxu0 0.0
          %744 = vmatmul.mubr.f32.gmra.mxu0 %v536
          %v745 = vpop.f32.mrf.mxu0
          %v746 = vadd.f32 %v458, %v745
          %v747 = vpop.f32.mrf.mxu0
          %v748 = vadd.f32 %v462, %v747
          %749 = vmatprep.mubr.f32.mxu0 0.0
          %750 = vmatmul.mubr.f32.gmra.mxu0 %v539
          %v751 = vpop.f32.mrf.mxu0
          %v752 = vadd.f32 %v458, %v751
          %v753 = vpop.f32.mrf.mxu0
          %v754 = vadd.f32 %v462, %v753
          %755 = vdwg.mxu0
          %vm756 = vcmp.gt.f32.partialorder %v608, 0.0
          %vm757 = vcmp.gt.f32.partialorder %v610, 0.0
          %vm758 = vcmp.gt.f32.partialorder %v614, 0.0
          %vm759 = vcmp.gt.f32.partialorder %v616, 0.0
          %vm760 = vcmp.gt.f32.partialorder %v620, 0.0
          %vm761 = vcmp.gt.f32.partialorder %v622, 0.0
          %vm762 = vcmp.gt.f32.partialorder %v626, 0.0
          %vm763 = vcmp.gt.f32.partialorder %v628, 0.0
          %vm764 = vcmp.gt.f32.partialorder %v632, 0.0
          %vm765 = vcmp.gt.f32.partialorder %v634, 0.0
          %vm766 = vcmp.gt.f32.partialorder %v638, 0.0
          %vm767 = vcmp.gt.f32.partialorder %v640, 0.0
          %vm768 = vcmp.gt.f32.partialorder %v644, 0.0
          %vm769 = vcmp.gt.f32.partialorder %v646, 0.0
          %vm770 = vcmp.gt.f32.partialorder %v650, 0.0
          %vm771 = vcmp.gt.f32.partialorder %v652, 0.0
          %vm772 = vcmp.gt.f32.partialorder %v656, 0.0
          %vm773 = vcmp.gt.f32.partialorder %v658, 0.0
          %vm774 = vcmp.gt.f32.partialorder %v662, 0.0
          %vm775 = vcmp.gt.f32.partialorder %v664, 0.0
          %vm776 = vcmp.gt.f32.partialorder %v668, 0.0
          %vm777 = vcmp.gt.f32.partialorder %v670, 0.0
          %vm778 = vcmp.gt.f32.partialorder %v674, 0.0
          %vm779 = vcmp.gt.f32.partialorder %v676, 0.0
          %vm780 = vcmp.gt.f32.partialorder %v680, 0.0
          %vm781 = vcmp.gt.f32.partialorder %v682, 0.0
          %vm782 = vcmp.gt.f32.partialorder %v686, 0.0
          %vm783 = vcmp.gt.f32.partialorder %v688, 0.0
          %vm784 = vcmp.gt.f32.partialorder %v692, 0.0
          %vm785 = vcmp.gt.f32.partialorder %v694, 0.0
          %vm786 = vcmp.gt.f32.partialorder %v698, 0.0
          %vm787 = vcmp.gt.f32.partialorder %v700, 0.0
          %vm788 = vcmp.gt.f32.partialorder %v704, 0.0
          %vm789 = vcmp.gt.f32.partialorder %v706, 0.0
          %vm790 = vcmp.gt.f32.partialorder %v710, 0.0
          %vm791 = vcmp.gt.f32.partialorder %v712, 0.0
          %vm792 = vcmp.gt.f32.partialorder %v716, 0.0
          %vm793 = vcmp.gt.f32.partialorder %v718, 0.0
          %vm794 = vcmp.gt.f32.partialorder %v722, 0.0
          %vm795 = vcmp.gt.f32.partialorder %v724, 0.0
          %vm796 = vcmp.gt.f32.partialorder %v728, 0.0
          %vm797 = vcmp.gt.f32.partialorder %v730, 0.0
          %vm798 = vcmp.gt.f32.partialorder %v734, 0.0
          %vm799 = vcmp.gt.f32.partialorder %v736, 0.0
          %vm800 = vcmp.gt.f32.partialorder %v740, 0.0
          %vm801 = vcmp.gt.f32.partialorder %v742, 0.0
          %vm802 = vcmp.gt.f32.partialorder %v746, 0.0
          %vm803 = vcmp.gt.f32.partialorder %v748, 0.0
          %vm804 = vcmp.gt.f32.partialorder %v752, 0.0
          %vm805 = vcmp.gt.f32.partialorder %v754, 0.0
          %v806 = vmul.f32 %v608, 0.01
          %v807 = vmul.f32 %v610, 0.01
          %v808 = vmul.f32 %v614, 0.01
          %v809 = vmul.f32 %v616, 0.01
          %v810 = vmul.f32 %v620, 0.01
          %v811 = vmul.f32 %v622, 0.01
          %v812 = vmul.f32 %v626, 0.01
          %v813 = vmul.f32 %v628, 0.01
          %v814 = vmul.f32 %v632, 0.01
          %v815 = vmul.f32 %v634, 0.01
          %v816 = vmul.f32 %v638, 0.01
          %v817 = vmul.f32 %v640, 0.01
          %v818 = vmul.f32 %v644, 0.01
          %v819 = vmul.f32 %v646, 0.01
          %v820 = vmul.f32 %v650, 0.01
          %v821 = vmul.f32 %v652, 0.01
          %v822 = vmul.f32 %v656, 0.01
          %v823 = vmul.f32 %v658, 0.01
          %v824 = vmul.f32 %v662, 0.01
          %v825 = vmul.f32 %v664, 0.01
          %v826 = vmul.f32 %v668, 0.01
          %v827 = vmul.f32 %v670, 0.01
          %v828 = vmul.f32 %v674, 0.01
          %v829 = vmul.f32 %v676, 0.01
          %v830 = vmul.f32 %v680, 0.01
          %v831 = vmul.f32 %v682, 0.01
          %v832 = vmul.f32 %v686, 0.01
          %v833 = vmul.f32 %v688, 0.01
          %v834 = vmul.f32 %v692, 0.01
          %v835 = vmul.f32 %v694, 0.01
          %v836 = vmul.f32 %v698, 0.01
          %v837 = vmul.f32 %v700, 0.01
          %v838 = vmul.f32 %v704, 0.01
          %v839 = vmul.f32 %v706, 0.01
          %v840 = vmul.f32 %v710, 0.01
          %v841 = vmul.f32 %v712, 0.01
          %v842 = vmul.f32 %v716, 0.01
          %v843 = vmul.f32 %v718, 0.01
          %v844 = vmul.f32 %v722, 0.01
          %v845 = vmul.f32 %v724, 0.01
          %v846 = vmul.f32 %v728, 0.01
          %v847 = vmul.f32 %v730, 0.01
          %v848 = vmul.f32 %v734, 0.01
          %v849 = vmul.f32 %v736, 0.01
          %v850 = vmul.f32 %v740, 0.01
          %v851 = vmul.f32 %v742, 0.01
          %v852 = vmul.f32 %v746, 0.01
          %v853 = vmul.f32 %v748, 0.01
          %v854 = vmul.f32 %v752, 0.01
          %v855 = vmul.f32 %v754, 0.01
          %v856 = vsel %vm756, %v608, %v806
          %v857 = vsel %vm757, %v610, %v807
          %v858 = vsel %vm758, %v614, %v808
          %v859 = vsel %vm759, %v616, %v809
          %v860 = vsel %vm760, %v620, %v810
          %v861 = vsel %vm761, %v622, %v811
          %v862 = vsel %vm762, %v626, %v812
          %v863 = vsel %vm763, %v628, %v813
          %v864 = vsel %vm764, %v632, %v814
          %v865 = vsel %vm765, %v634, %v815
          %v866 = vsel %vm766, %v638, %v816
          %v867 = vsel %vm767, %v640, %v817
          %v868 = vsel %vm768, %v644, %v818
          %v869 = vsel %vm769, %v646, %v819
          %v870 = vsel %vm770, %v650, %v820
          %v871 = vsel %vm771, %v652, %v821
          %v872 = vsel %vm772, %v656, %v822
          %v873 = vsel %vm773, %v658, %v823
          %v874 = vsel %vm774, %v662, %v824
          %v875 = vsel %vm775, %v664, %v825
          %v876 = vsel %vm776, %v668, %v826
          %v877 = vsel %vm777, %v670, %v827
          %v878 = vsel %vm778, %v674, %v828
          %v879 = vsel %vm779, %v676, %v829
          %v880 = vsel %vm780, %v680, %v830
          %v881 = vsel %vm781, %v682, %v831
          %v882 = vsel %vm782, %v686, %v832
          %v883 = vsel %vm783, %v688, %v833
          %v884 = vsel %vm784, %v692, %v834
          %v885 = vsel %vm785, %v694, %v835
          %v886 = vsel %vm786, %v698, %v836
          %v887 = vsel %vm787, %v700, %v837
          %v888 = vsel %vm788, %v704, %v838
          %v889 = vsel %vm789, %v706, %v839
          %v890 = vsel %vm790, %v710, %v840
          %v891 = vsel %vm791, %v712, %v841
          %v892 = vsel %vm792, %v716, %v842
          %v893 = vsel %vm793, %v718, %v843
          %v894 = vsel %vm794, %v722, %v844
          %v895 = vsel %vm795, %v724, %v845
          %v896 = vsel %vm796, %v728, %v846
          %v897 = vsel %vm797, %v730, %v847
          %v898 = vsel %vm798, %v734, %v848
          %v899 = vsel %vm799, %v736, %v849
          %v900 = vsel %vm800, %v740, %v850
          %v901 = vsel %vm801, %v742, %v851
          %v902 = vsel %vm802, %v746, %v852
          %v903 = vsel %vm803, %v748, %v853
          %v904 = vsel %vm804, %v752, %v854
          %v905 = vsel %vm805, %v754, %v855
          %906 = vst [vmem:[#allocation2] sm:$0xff] %v856
          %907 = vst [vmem:[#allocation2 + $0x8] sm:$0xff] %v857
          %908 = vst [vmem:[#allocation2 + $0x10] sm:$0xff] %v858
          %909 = vst [vmem:[#allocation2 + $0x18] sm:$0xff] %v859
          %910 = vst [vmem:[#allocation2 + $0x20] sm:$0xff] %v860
          %911 = vst [vmem:[#allocation2 + $0x28] sm:$0xff] %v861
          %912 = vst [vmem:[#allocation2 + $0x30] sm:$0xff] %v862
          %913 = vst [vmem:[#allocation2 + $0x38] sm:$0xff] %v863
          %914 = vst [vmem:[#allocation2 + $0x40] sm:$0xff] %v864
          %915 = vst [vmem:[#allocation2 + $0x48] sm:$0xff] %v865
          %916 = vst [vmem:[#allocation2 + $0x50] sm:$0xff] %v866
          %917 = vst [vmem:[#allocation2 + $0x58] sm:$0xff] %v867
          %918 = vst [vmem:[#allocation2 + $0x60] sm:$0xff] %v868
          %919 = vst [vmem:[#allocation2 + $0x68] sm:$0xff] %v869
          %920 = vst [vmem:[#allocation2 + $0x70] sm:$0xff] %v870
          %921 = vst [vmem:[#allocation2 + $0x78] sm:$0xff] %v871
          %922 = vst [vmem:[#allocation2 + $0x80] sm:$0xff] %v872
          %923 = vst [vmem:[#allocation2 + $0x88] sm:$0xff] %v873
          %924 = vst [vmem:[#allocation2 + $0x90] sm:$0xff] %v874
          %925 = vst [vmem:[#allocation2 + $0x98] sm:$0xff] %v875
          %926 = vst [vmem:[#allocation2 + $0xa0] sm:$0xff] %v876
          %927 = vst [vmem:[#allocation2 + $0xa8] sm:$0xff] %v877
          %928 = vst [vmem:[#allocation2 + $0xb0] sm:$0xff] %v878
          %929 = vst [vmem:[#allocation2 + $0xb8] sm:$0xff] %v879
          %930 = vst [vmem:[#allocation2 + $0xc0] sm:$0xff] %v880
          %931 = vst [vmem:[#allocation2 + $0xc8] sm:$0xff] %v881
          %932 = vst [vmem:[#allocation2 + $0xd0] sm:$0xff] %v882
          %933 = vst [vmem:[#allocation2 + $0xd8] sm:$0xff] %v883
          %934 = vst [vmem:[#allocation2 + $0xe0] sm:$0xff] %v884
          %935 = vst [vmem:[#allocation2 + $0xe8] sm:$0xff] %v885
          %936 = vst [vmem:[#allocation2 + $0xf0] sm:$0xff] %v886
          %937 = vst [vmem:[#allocation2 + $0xf8] sm:$0xff] %v887
          %938 = vst [vmem:[#allocation2 + $0x100] sm:$0xff] %v888
          %939 = vst [vmem:[#allocation2 + $0x108] sm:$0xff] %v889
          %940 = vst [vmem:[#allocation2 + $0x110] sm:$0xff] %v890
          %941 = vst [vmem:[#allocation2 + $0x118] sm:$0xff] %v891
          %942 = vst [vmem:[#allocation2 + $0x120] sm:$0xff] %v892
          %943 = vst [vmem:[#allocation2 + $0x128] sm:$0xff] %v893
          %944 = vst [vmem:[#allocation2 + $0x130] sm:$0xff] %v894
          %945 = vst [vmem:[#allocation2 + $0x138] sm:$0xff] %v895
          %946 = vst [vmem:[#allocation2 + $0x140] sm:$0xff] %v896
          %947 = vst [vmem:[#allocation2 + $0x148] sm:$0xff] %v897
          %948 = vst [vmem:[#allocation2 + $0x150] sm:$0xff] %v898
          %949 = vst [vmem:[#allocation2 + $0x158] sm:$0xff] %v899
          %950 = vst [vmem:[#allocation2 + $0x160] sm:$0xff] %v900
          %951 = vst [vmem:[#allocation2 + $0x168] sm:$0xff] %v901
          %952 = vst [vmem:[#allocation2 + $0x170] sm:$0xff] %v902
          %953 = vst [vmem:[#allocation2 + $0x178] sm:$0xff] %v903
          %954 = vst [vmem:[#allocation2 + $0x180] sm:$0xff] %v904
          %955 = vst [vmem:[#allocation2 + $0x188] sm:$0xff] %v905
          %956 = vst [vmem:[#allocation3] sm:$0xff] 0.0
          %957 = vst [vmem:[#allocation3 + $0x8] sm:$0xff] 0.0
          %958 = vst [vmem:[#allocation3 + $0x10] sm:$0xff] 0.0
          %959 = vst [vmem:[#allocation3 + $0x18] sm:$0xff] 0.0
          %960 = vst [vmem:[#allocation3 + $0x20] sm:$0xff] 0.0
          %961 = vst [vmem:[#allocation3 + $0x28] sm:$0xff] 0.0
          %962 = vst [vmem:[#allocation3 + $0x30] sm:$0xff] 0.0
          %963 = vst [vmem:[#allocation3 + $0x38] sm:$0xff] 0.0
          %964 = vst [vmem:[#allocation3 + $0x40] sm:$0xff] 0.0
          %965 = vst [vmem:[#allocation3 + $0x48] sm:$0xff] 0.0
          %966 = vst [vmem:[#allocation3 + $0x50] sm:$0xff] 0.0
          %967 = vst [vmem:[#allocation3 + $0x58] sm:$0xff] 0.0
          %968 = vst [vmem:[#allocation3 + $0x60] sm:$0xff] 0.0
          %969 = vst [vmem:[#allocation3 + $0x68] sm:$0xff] 0.0
          %970 = vst [vmem:[#allocation3 + $0x70] sm:$0xff] 0.0
          %971 = vst [vmem:[#allocation3 + $0x78] sm:$0xff] 0.0
          %972 = vst [vmem:[#allocation3 + $0x80] sm:$0xff] 0.0
          %973 = vst [vmem:[#allocation3 + $0x88] sm:$0xff] 0.0
          %974 = vst [vmem:[#allocation3 + $0x90] sm:$0xff] 0.0
          %975 = vst [vmem:[#allocation3 + $0x98] sm:$0xff] 0.0
          %976 = vst [vmem:[#allocation3 + $0xa0] sm:$0xff] 0.0
          %977 = vst [vmem:[#allocation3 + $0xa8] sm:$0xff] 0.0
          %978 = vst [vmem:[#allocation3 + $0xb0] sm:$0xff] 0.0
          %979 = vst [vmem:[#allocation3 + $0xb8] sm:$0xff] 0.0
          %980 = vst [vmem:[#allocation3 + $0xc0] sm:$0xff] 0.0
          %981 = vst [vmem:[#allocation3 + $0xc8] sm:$0xff] 0.0
          %982 = vst [vmem:[#allocation3 + $0xd0] sm:$0xff] 0.0
          %983 = vst [vmem:[#allocation3 + $0xd8] sm:$0xff] 0.0
          %984 = vst [vmem:[#allocation3 + $0xe0] sm:$0xff] 0.0
          %985 = vst [vmem:[#allocation3 + $0xe8] sm:$0xff] 0.0
          %986 = vst [vmem:[#allocation3 + $0xf0] sm:$0xff] 0.0
          %987 = vst [vmem:[#allocation3 + $0xf8] sm:$0xff] 0.0
          %988 = vst [vmem:[#allocation3 + $0x100] sm:$0xff] 0.0
          %989 = vst [vmem:[#allocation3 + $0x108] sm:$0xff] 0.0
          %990 = vst [vmem:[#allocation3 + $0x110] sm:$0xff] 0.0
          %991 = vst [vmem:[#allocation3 + $0x118] sm:$0xff] 0.0
        $region76: #{hybrid_forward.1} parent=67 // pred_fallthru
          _
        %s992 = smul.u32 %s28, 8
        %s993 = sshra.s32 %s992, 3
        %s994 = sand.u32 %s992, 7
        %s995 = smul.u32 %s993, 2
        %s996 = smul.addr %s995, 8
        %s997 = scalar_lea.vmem [#allocation2], %s996
        %v998 = vld [vmem:[%s997] sm:$0xff]
        %v999 = vld [vmem:[%s997 + $0x8] sm:$0xff]
        %v1000 = vld [vmem:[%s997 + $0x10] sm:$0xff]
        %v1001 = vld [vmem:[%s997 + $0x18] sm:$0xff]
        %v1002 = vld [vmem:[%s997 + $0x20] sm:$0xff]
        %v1003 = vld [vmem:[%s997 + $0x28] sm:$0xff]
        %v1004 = vld [vmem:[%s997 + $0x30] sm:$0xff]
        %v1005 = vld [vmem:[%s997 + $0x38] sm:$0xff]
        %v1006 = vld [vmem:[%s997 + $0x40] sm:$0xff]
        %v1007 = vld [vmem:[%s997 + $0x48] sm:$0xff]
        %v1008 = vld [vmem:[%s997 + $0x50] sm:$0xff]
        %v1009 = vld [vmem:[%s997 + $0x58] sm:$0xff]
        %v1010 = vld [vmem:[%s997 + $0x60] sm:$0xff]
        %v1011 = vld [vmem:[%s997 + $0x68] sm:$0xff]
        %v1012 = vld [vmem:[%s997 + $0x70] sm:$0xff]
        %v1013 = vld [vmem:[%s997 + $0x78] sm:$0xff]
        %v1014 = vld [vmem:[%s997 + $0x80] sm:$0xff]
        %v1015 = vld [vmem:[%s997 + $0x88] sm:$0xff]
        %v1016 = vld [vmem:[%s997 + $0x90] sm:$0xff]
        %v1017 = vld [vmem:[%s997 + $0x98] sm:$0xff]
        %v1018 = vld [vmem:[%s997 + $0xa0] sm:$0xff]
        %v1019 = vld [vmem:[%s997 + $0xa8] sm:$0xff]
        %v1020 = vld [vmem:[%s997 + $0xb0] sm:$0xff]
        %v1021 = vld [vmem:[%s997 + $0xb8] sm:$0xff]
        %v1022 = vld [vmem:[%s997 + $0xc0] sm:$0xff]
        %v1023 = vld [vmem:[%s997 + $0xc8] sm:$0xff]
        %v1024 = vld [vmem:[%s997 + $0xd0] sm:$0xff]
        %v1025 = vld [vmem:[%s997 + $0xd8] sm:$0xff]
        %v1026 = vld [vmem:[%s997 + $0xe0] sm:$0xff]
        %v1027 = vld [vmem:[%s997 + $0xe8] sm:$0xff]
        %v1028 = vld [vmem:[%s997 + $0xf0] sm:$0xff]
        %v1029 = vld [vmem:[%s997 + $0xf8] sm:$0xff]
        %v1030 = vld [vmem:[%s997 + $0x100] sm:$0xff]
        %v1031 = vld [vmem:[%s997 + $0x108] sm:$0xff]
        %v1032 = vld [vmem:[%s997 + $0x110] sm:$0xff]
        %v1033 = vld [vmem:[%s997 + $0x118] sm:$0xff]
        %v1034 = vpack.c.bf16 %v1000, %v998
        %v1035 = vpack.c.bf16 %v1001, %v999
        %v1036 = vpack.c.bf16 %v1004, %v1002
        %v1037 = vpack.c.bf16 %v1005, %v1003
        %v1038 = vpack.c.bf16 %v1008, %v1006
        %v1039 = vpack.c.bf16 %v1009, %v1007
        %v1040 = vpack.c.bf16 %v1012, %v1010
        %v1041 = vpack.c.bf16 %v1013, %v1011
        %v1042 = vpack.c.bf16 %v1016, %v1014
        %v1043 = vpack.c.bf16 %v1017, %v1015
        %v1044 = vpack.c.bf16 %v1020, %v1018
        %v1045 = vpack.c.bf16 %v1021, %v1019
        %v1046 = vpack.c.bf16 %v1024, %v1022
        %v1047 = vpack.c.bf16 %v1025, %v1023
        %v1048 = vpack.c.bf16 %v1028, %v1026
        %v1049 = vpack.c.bf16 %v1029, %v1027
        %v1050 = vpack.c.bf16 %v1032, %v1030
        %v1051 = vpack.c.bf16 %v1033, %v1031
        %v1052 = vld [vmem:[#allocation3] sm:$0xff]
        %v1053 = vld [vmem:[#allocation3 + $0x8] sm:$0xff]
        %v1054 = vld [vmem:[#allocation3 + $0x10] sm:$0xff]
        %v1055 = vld [vmem:[#allocation3 + $0x18] sm:$0xff]
        %v1056 = vld [vmem:[#allocation3 + $0x20] sm:$0xff]
        %v1057 = vld [vmem:[#allocation3 + $0x28] sm:$0xff]
        %v1058 = vld [vmem:[#allocation3 + $0x30] sm:$0xff]
        %v1059 = vld [vmem:[#allocation3 + $0x38] sm:$0xff]
        %v1060 = vld [vmem:[#allocation3 + $0x40] sm:$0xff]
        %v1061 = vld [vmem:[#allocation3 + $0x48] sm:$0xff]
        %v1062 = vld [vmem:[#allocation3 + $0x50] sm:$0xff]
        %v1063 = vld [vmem:[#allocation3 + $0x58] sm:$0xff]
        %v1064 = vld [vmem:[#allocation3 + $0x60] sm:$0xff]
        %v1065 = vld [vmem:[#allocation3 + $0x68] sm:$0xff]
        %v1066 = vld [vmem:[#allocation3 + $0x70] sm:$0xff]
        %v1067 = vld [vmem:[#allocation3 + $0x78] sm:$0xff]
        %v1068 = vld [vmem:[#allocation3 + $0x80] sm:$0xff]
        %v1069 = vld [vmem:[#allocation3 + $0x88] sm:$0xff]
        %v1070 = vld [vmem:[#allocation3 + $0x90] sm:$0xff]
        %v1071 = vld [vmem:[#allocation3 + $0x98] sm:$0xff]
        %v1072 = vld [vmem:[#allocation3 + $0xa0] sm:$0xff]
        %v1073 = vld [vmem:[#allocation3 + $0xa8] sm:$0xff]
        %v1074 = vld [vmem:[#allocation3 + $0xb0] sm:$0xff]
        %v1075 = vld [vmem:[#allocation3 + $0xb8] sm:$0xff]
        %v1076 = vld [vmem:[#allocation3 + $0xc0] sm:$0xff]
        %v1077 = vld [vmem:[#allocation3 + $0xc8] sm:$0xff]
        %v1078 = vld [vmem:[#allocation3 + $0xd0] sm:$0xff]
        %v1079 = vld [vmem:[#allocation3 + $0xd8] sm:$0xff]
        %v1080 = vld [vmem:[#allocation3 + $0xe0] sm:$0xff]
        %v1081 = vld [vmem:[#allocation3 + $0xe8] sm:$0xff]
        %v1082 = vld [vmem:[#allocation3 + $0xf0] sm:$0xff]
        %v1083 = vld [vmem:[#allocation3 + $0xf8] sm:$0xff]
        %v1084 = vld [vmem:[#allocation3 + $0x100] sm:$0xff]
        %v1085 = vld [vmem:[#allocation3 + $0x108] sm:$0xff]
        %v1086 = vld [vmem:[#allocation3 + $0x110] sm:$0xff]
        %v1087 = vld [vmem:[#allocation3 + $0x118] sm:$0xff]
        %v1088 = vld [vmem:[%s385] sm:$0xff]
        %v1089 = vld [vmem:[%s385 + $0x8] sm:$0xff]
        %v1090 = vld [vmem:[%s385 + $0x10] sm:$0xff]
        %v1091 = vld [vmem:[%s385 + $0x18] sm:$0xff]
        %v1092 = vld [vmem:[%s385 + $0x20] sm:$0xff]
        %v1093 = vld [vmem:[%s385 + $0x28] sm:$0xff]
        %v1094 = vld [vmem:[%s385 + $0x30] sm:$0xff]
        %v1095 = vld [vmem:[%s385 + $0x38] sm:$0xff]
        %v1096 = vld [vmem:[%s385 + $0x40] sm:$0xff]
        %v1097 = vld [vmem:[%s385 + $0x48] sm:$0xff]
        %v1098 = vld [vmem:[%s385 + $0x50] sm:$0xff]
        %v1099 = vld [vmem:[%s385 + $0x58] sm:$0xff]
        %v1100 = vld [vmem:[%s385 + $0x60] sm:$0xff]
        %v1101 = vld [vmem:[%s385 + $0x68] sm:$0xff]
        %v1102 = vld [vmem:[%s385 + $0x70] sm:$0xff]
        %v1103 = vld [vmem:[%s385 + $0x78] sm:$0xff]
        %v1104 = vld [vmem:[%s385 + $0x80] sm:$0xff]
        %v1105 = vld [vmem:[%s385 + $0x88] sm:$0xff]
        %v1106 = vld [vmem:[%s385 + $0x90] sm:$0xff]
        %v1107 = vld [vmem:[%s385 + $0x98] sm:$0xff]
        %v1108 = vld [vmem:[%s385 + $0xa0] sm:$0xff]
        %v1109 = vld [vmem:[%s385 + $0xa8] sm:$0xff]
        %v1110 = vld [vmem:[%s385 + $0xb0] sm:$0xff]
        %v1111 = vld [vmem:[%s385 + $0xb8] sm:$0xff]
        %v1112 = vld [vmem:[%s385 + $0xc0] sm:$0xff]
        %v1113 = vld [vmem:[%s385 + $0xc8] sm:$0xff]
        %v1114 = vld [vmem:[%s385 + $0xd0] sm:$0xff]
        %v1115 = vld [vmem:[%s385 + $0xd8] sm:$0xff]
        %v1116 = vld [vmem:[%s385 + $0xe0] sm:$0xff]
        %v1117 = vld [vmem:[%s385 + $0xe8] sm:$0xff]
        %v1118 = vld [vmem:[%s385 + $0xf0] sm:$0xff]
        %v1119 = vld [vmem:[%s385 + $0xf8] sm:$0xff]
        %v1152 = vunpack.c.l.b16 %v1088
        %v1153 = vunpack.c.h.b16 %v1088
        %v1154 = vunpack.c.l.b16 %v1089
        %v1155 = vunpack.c.h.b16 %v1089
        %v1156 = vunpack.c.l.b16 %v1090
        %v1157 = vunpack.c.h.b16 %v1090
        %v1158 = vunpack.c.l.b16 %v1091
        %v1159 = vunpack.c.h.b16 %v1091
        %v1160 = vunpack.c.l.b16 %v1092
        %v1161 = vunpack.c.h.b16 %v1092
        %v1162 = vunpack.c.l.b16 %v1093
        %v1163 = vunpack.c.h.b16 %v1093
        %v1164 = vunpack.c.l.b16 %v1094
        %v1165 = vunpack.c.h.b16 %v1094
        %v1166 = vunpack.c.l.b16 %v1095
        %v1167 = vunpack.c.h.b16 %v1095
        %v1168 = vunpack.c.l.b16 %v1096
        %v1169 = vunpack.c.h.b16 %v1096
        %v1170 = vunpack.c.l.b16 %v1097
        %v1171 = vunpack.c.h.b16 %v1097
        %v1172 = vunpack.c.l.b16 %v1098
        %v1173 = vunpack.c.h.b16 %v1098
        %v1174 = vunpack.c.l.b16 %v1099
        %v1175 = vunpack.c.h.b16 %v1099
        %v1176 = vunpack.c.l.b16 %v1100
        %v1177 = vunpack.c.h.b16 %v1100
        %v1178 = vunpack.c.l.b16 %v1101
        %v1179 = vunpack.c.h.b16 %v1101
        %v1180 = vunpack.c.l.b16 %v1102
        %v1181 = vunpack.c.h.b16 %v1102
        %v1182 = vunpack.c.l.b16 %v1103
        %v1183 = vunpack.c.h.b16 %v1103
        %v1184 = vunpack.c.l.b16 %v1104
        %v1185 = vunpack.c.h.b16 %v1104
        %v1186 = vunpack.c.l.b16 %v1105
        %v1187 = vunpack.c.h.b16 %v1105
        %v1188 = vunpack.c.l.b16 %v1106
        %v1189 = vunpack.c.h.b16 %v1106
        %v1190 = vunpack.c.l.b16 %v1107
        %v1191 = vunpack.c.h.b16 %v1107
        %v1192 = vunpack.c.l.b16 %v1108
        %v1193 = vunpack.c.h.b16 %v1108
        %v1194 = vunpack.c.l.b16 %v1109
        %v1195 = vunpack.c.h.b16 %v1109
        %v1196 = vunpack.c.l.b16 %v1110
        %v1197 = vunpack.c.h.b16 %v1110
        %v1198 = vunpack.c.l.b16 %v1111
        %v1199 = vunpack.c.h.b16 %v1111
        %v1200 = vunpack.c.l.b16 %v1112
        %v1201 = vunpack.c.h.b16 %v1112
        %v1202 = vunpack.c.l.b16 %v1113
        %v1203 = vunpack.c.h.b16 %v1113
        %v1204 = vunpack.c.l.b16 %v1114
        %v1205 = vunpack.c.h.b16 %v1114
        %v1206 = vunpack.c.l.b16 %v1115
        %v1207 = vunpack.c.h.b16 %v1115
        %v1208 = vunpack.c.l.b16 %v1116
        %v1209 = vunpack.c.h.b16 %v1116
        %v1210 = vunpack.c.l.b16 %v1117
        %v1211 = vunpack.c.h.b16 %v1117
        %v1212 = vunpack.c.l.b16 %v1118
        %v1213 = vunpack.c.h.b16 %v1118
        %v1214 = vunpack.c.l.b16 %v1119
        %v1215 = vunpack.c.h.b16 %v1119
        %v1216 = vpack.c.b16 %v1154, %v1152
        %v1217 = vpack.c.b16 %v1155, %v1153
        %v1218 = vpack.c.b16 %v1158, %v1156
        %v1219 = vpack.c.b16 %v1159, %v1157
        %v1220 = vpack.c.b16 %v1162, %v1160
        %v1221 = vpack.c.b16 %v1163, %v1161
        %v1222 = vpack.c.b16 %v1166, %v1164
        %v1223 = vpack.c.b16 %v1167, %v1165
        %v1224 = vpack.c.b16 %v1170, %v1168
        %v1225 = vpack.c.b16 %v1171, %v1169
        %v1226 = vpack.c.b16 %v1174, %v1172
        %v1227 = vpack.c.b16 %v1175, %v1173
        %v1228 = vpack.c.b16 %v1178, %v1176
        %v1229 = vpack.c.b16 %v1179, %v1177
        %v1230 = vpack.c.b16 %v1182, %v1180
        %v1231 = vpack.c.b16 %v1183, %v1181
        %v1232 = vpack.c.b16 %v1186, %v1184
        %v1233 = vpack.c.b16 %v1187, %v1185
        %v1234 = vpack.c.b16 %v1190, %v1188
        %v1235 = vpack.c.b16 %v1191, %v1189
        %v1236 = vpack.c.b16 %v1194, %v1192
        %v1237 = vpack.c.b16 %v1195, %v1193
        %v1238 = vpack.c.b16 %v1198, %v1196
        %v1239 = vpack.c.b16 %v1199, %v1197
        %v1240 = vpack.c.b16 %v1202, %v1200
        %v1241 = vpack.c.b16 %v1203, %v1201
        %v1242 = vpack.c.b16 %v1206, %v1204
        %v1243 = vpack.c.b16 %v1207, %v1205
        %v1244 = vpack.c.b16 %v1210, %v1208
        %v1245 = vpack.c.b16 %v1211, %v1209
        %v1246 = vpack.c.b16 %v1214, %v1212
        %v1247 = vpack.c.b16 %v1215, %v1213
        %1280 = vmatprep.subr.bf16.mxu0 %v1231
        %1281 = vmatpush1.bf16.msra.mxu0 %v1230
        %1282 = vmatprep.subr.bf16.mxu0 %v1229
        %1283 = vmatpush1.bf16.msra.mxu0 %v1228
        %1284 = vmatprep.subr.bf16.mxu0 %v1227
        %1285 = vmatpush1.bf16.msra.mxu0 %v1226
        %1286 = vmatprep.subr.bf16.mxu0 %v1225
        %1287 = vmatpush1.bf16.msra.mxu0 %v1224
        %1288 = vmatprep.subr.bf16.mxu0 %v1223
        %1289 = vmatpush1.bf16.msra.mxu0 %v1222
        %1290 = vmatprep.subr.bf16.mxu0 %v1221
        %1291 = vmatpush1.bf16.msra.mxu0 %v1220
        %1292 = vmatprep.subr.bf16.mxu0 %v1219
        %1293 = vmatpush1.bf16.msra.mxu0 %v1218
        %1294 = vmatprep.subr.bf16.mxu0 %v1217
        %1295 = vmatpush1.bf16.msra.mxu0 %v1216
        %1296 = vmatprep.subr.bf16.mxu0 %v1247
        %1297 = vmatpush2.bf16.msra.mxu0 %v1246
        %1298 = vmatprep.subr.bf16.mxu0 %v1245
        %1299 = vmatpush2.bf16.msra.mxu0 %v1244
        %1300 = vmatprep.subr.bf16.mxu0 %v1243
        %1301 = vmatpush2.bf16.msra.mxu0 %v1242
        %1302 = vmatprep.subr.bf16.mxu0 %v1241
        %1303 = vmatpush2.bf16.msra.mxu0 %v1240
        %1304 = vmatprep.subr.bf16.mxu0 %v1239
        %1305 = vmatpush2.bf16.msra.mxu0 %v1238
        %1306 = vmatprep.subr.bf16.mxu0 %v1237
        %1307 = vmatpush2.bf16.msra.mxu0 %v1236
        %1308 = vmatprep.subr.bf16.mxu0 %v1235
        %1309 = vmatpush2.bf16.msra.mxu0 %v1234
        %1310 = vmatprep.subr.bf16.mxu0 %v1233
        %1311 = vmatpush2.bf16.msra.mxu0 %v1232
        %1312 = vmatprep.mubr.bf16.mxu0 %v1035
        %1313 = vmatmul.mubr.bf16.gmra.mxu0 %v1034
        %v1314 = vpop.f32.mrf.mxu0
        %v1315 = vadd.f32 0.0, %v1314
        %v1316 = vpop.f32.mrf.mxu0
        %v1317 = vadd.f32 0.0, %v1316
        %v1318 = vpop.f32.mrf.mxu0
        %v1319 = vadd.f32 0.0, %v1318
        %v1320 = vpop.f32.mrf.mxu0
        %v1321 = vadd.f32 0.0, %v1320
        %1322 = vmatprep.mubr.bf16.mxu0 %v1037
        %1323 = vmatmul.mubr.bf16.gmra.mxu0 %v1036
        %v1324 = vpop.f32.mrf.mxu0
        %v1325 = vadd.f32 0.0, %v1324
        %v1326 = vpop.f32.mrf.mxu0
        %v1327 = vadd.f32 0.0, %v1326
        %v1328 = vpop.f32.mrf.mxu0
        %v1329 = vadd.f32 0.0, %v1328
        %v1330 = vpop.f32.mrf.mxu0
        %v1331 = vadd.f32 0.0, %v1330
        %1332 = vmatprep.mubr.bf16.mxu0 %v1039
        %1333 = vmatmul.mubr.bf16.gmra.mxu0 %v1038
        %v1334 = vpop.f32.mrf.mxu0
        %v1335 = vadd.f32 0.0, %v1334
        %v1336 = vpop.f32.mrf.mxu0
        %v1337 = vadd.f32 0.0, %v1336
        %v1338 = vpop.f32.mrf.mxu0
        %v1339 = vadd.f32 0.0, %v1338
        %v1340 = vpop.f32.mrf.mxu0
        %v1341 = vadd.f32 0.0, %v1340
        %1342 = vmatprep.mubr.bf16.mxu0 %v1041
        %1343 = vmatmul.mubr.bf16.gmra.mxu0 %v1040
        %v1344 = vpop.f32.mrf.mxu0
        %v1345 = vadd.f32 0.0, %v1344
        %v1346 = vpop.f32.mrf.mxu0
        %v1347 = vadd.f32 0.0, %v1346
        %v1348 = vpop.f32.mrf.mxu0
        %v1349 = vadd.f32 0.0, %v1348
        %v1350 = vpop.f32.mrf.mxu0
        %v1351 = vadd.f32 0.0, %v1350
        %1352 = vmatprep.mubr.bf16.mxu0 %v1043
        %1353 = vmatmul.mubr.bf16.gmra.mxu0 %v1042
        %v1354 = vpop.f32.mrf.mxu0
        %v1355 = vadd.f32 0.0, %v1354
        %v1356 = vpop.f32.mrf.mxu0
        %v1357 = vadd.f32 0.0, %v1356
        %v1358 = vpop.f32.mrf.mxu0
        %v1359 = vadd.f32 0.0, %v1358
        %v1360 = vpop.f32.mrf.mxu0
        %v1361 = vadd.f32 0.0, %v1360
        %1362 = vmatprep.mubr.bf16.mxu0 %v1045
        %1363 = vmatmul.mubr.bf16.gmra.mxu0 %v1044
        %v1364 = vpop.f32.mrf.mxu0
        %v1365 = vadd.f32 0.0, %v1364
        %v1366 = vpop.f32.mrf.mxu0
        %v1367 = vadd.f32 0.0, %v1366
        %v1368 = vpop.f32.mrf.mxu0
        %v1369 = vadd.f32 0.0, %v1368
        %v1370 = vpop.f32.mrf.mxu0
        %v1371 = vadd.f32 0.0, %v1370
        %1372 = vmatprep.mubr.bf16.mxu0 %v1047
        %1373 = vmatmul.mubr.bf16.gmra.mxu0 %v1046
        %v1374 = vpop.f32.mrf.mxu0
        %v1375 = vadd.f32 0.0, %v1374
        %v1376 = vpop.f32.mrf.mxu0
        %v1377 = vadd.f32 0.0, %v1376
        %v1378 = vpop.f32.mrf.mxu0
        %v1379 = vadd.f32 0.0, %v1378
        %v1380 = vpop.f32.mrf.mxu0
        %v1381 = vadd.f32 0.0, %v1380
        %1382 = vmatprep.mubr.bf16.mxu0 %v1049
        %1383 = vmatmul.mubr.bf16.gmra.mxu0 %v1048
        %v1384 = vpop.f32.mrf.mxu0
        %v1385 = vadd.f32 0.0, %v1384
        %v1386 = vpop.f32.mrf.mxu0
        %v1387 = vadd.f32 0.0, %v1386
        %v1388 = vpop.f32.mrf.mxu0
        %v1389 = vadd.f32 0.0, %v1388
        %v1390 = vpop.f32.mrf.mxu0
        %v1391 = vadd.f32 0.0, %v1390
        %1392 = vmatprep.mubr.bf16.mxu0 %v1051
        %1393 = vmatmul.mubr.bf16.gmra.mxu0 %v1050
        %v1394 = vpop.f32.mrf.mxu0
        %v1395 = vadd.f32 0.0, %v1394
        %v1396 = vpop.f32.mrf.mxu0
        %v1397 = vadd.f32 0.0, %v1396
        %v1398 = vpop.f32.mrf.mxu0
        %v1399 = vadd.f32 0.0, %v1398
        %v1400 = vpop.f32.mrf.mxu0
        %v1401 = vadd.f32 0.0, %v1400
        %1402 = vdwg.mxu0
        %v1403 = vadd.f32 %v1052, %v1315
        %v1404 = vadd.f32 %v1053, %v1317
        %v1405 = vadd.f32 %v1054, %v1319
        %v1406 = vadd.f32 %v1055, %v1321
        %v1407 = vadd.f32 %v1056, %v1325
        %v1408 = vadd.f32 %v1057, %v1327
        %v1409 = vadd.f32 %v1058, %v1329
        %v1410 = vadd.f32 %v1059, %v1331
        %v1411 = vadd.f32 %v1060, %v1335
        %v1412 = vadd.f32 %v1061, %v1337
        %v1413 = vadd.f32 %v1062, %v1339
        %v1414 = vadd.f32 %v1063, %v1341
        %v1415 = vadd.f32 %v1064, %v1345
        %v1416 = vadd.f32 %v1065, %v1347
        %v1417 = vadd.f32 %v1066, %v1349
        %v1418 = vadd.f32 %v1067, %v1351
        %v1419 = vadd.f32 %v1068, %v1355
        %v1420 = vadd.f32 %v1069, %v1357
        %v1421 = vadd.f32 %v1070, %v1359
        %v1422 = vadd.f32 %v1071, %v1361
        %v1423 = vadd.f32 %v1072, %v1365
        %v1424 = vadd.f32 %v1073, %v1367
        %v1425 = vadd.f32 %v1074, %v1369
        %v1426 = vadd.f32 %v1075, %v1371
        %v1427 = vadd.f32 %v1076, %v1375
        %v1428 = vadd.f32 %v1077, %v1377
        %v1429 = vadd.f32 %v1078, %v1379
        %v1430 = vadd.f32 %v1079, %v1381
        %v1431 = vadd.f32 %v1080, %v1385
        %v1432 = vadd.f32 %v1081, %v1387
        %v1433 = vadd.f32 %v1082, %v1389
        %v1434 = vadd.f32 %v1083, %v1391
        %v1435 = vadd.f32 %v1084, %v1395
        %v1436 = vadd.f32 %v1085, %v1397
        %v1437 = vadd.f32 %v1086, %v1399
        %v1438 = vadd.f32 %v1087, %v1401
        %1439 = vst [vmem:[#allocation3] sm:$0xff] %v1403
        %1440 = vst [vmem:[#allocation3 + $0x8] sm:$0xff] %v1404
        %1441 = vst [vmem:[#allocation3 + $0x10] sm:$0xff] %v1405
        %1442 = vst [vmem:[#allocation3 + $0x18] sm:$0xff] %v1406
        %1443 = vst [vmem:[#allocation3 + $0x20] sm:$0xff] %v1407
        %1444 = vst [vmem:[#allocation3 + $0x28] sm:$0xff] %v1408
        %1445 = vst [vmem:[#allocation3 + $0x30] sm:$0xff] %v1409
        %1446 = vst [vmem:[#allocation3 + $0x38] sm:$0xff] %v1410
        %1447 = vst [vmem:[#allocation3 + $0x40] sm:$0xff] %v1411
        %1448 = vst [vmem:[#allocation3 + $0x48] sm:$0xff] %v1412
        %1449 = vst [vmem:[#allocation3 + $0x50] sm:$0xff] %v1413
        %1450 = vst [vmem:[#allocation3 + $0x58] sm:$0xff] %v1414
        %1451 = vst [vmem:[#allocation3 + $0x60] sm:$0xff] %v1415
        %1452 = vst [vmem:[#allocation3 + $0x68] sm:$0xff] %v1416
        %1453 = vst [vmem:[#allocation3 + $0x70] sm:$0xff] %v1417
        %1454 = vst [vmem:[#allocation3 + $0x78] sm:$0xff] %v1418
        %1455 = vst [vmem:[#allocation3 + $0x80] sm:$0xff] %v1419
        %1456 = vst [vmem:[#allocation3 + $0x88] sm:$0xff] %v1420
        %1457 = vst [vmem:[#allocation3 + $0x90] sm:$0xff] %v1421
        %1458 = vst [vmem:[#allocation3 + $0x98] sm:$0xff] %v1422
        %1459 = vst [vmem:[#allocation3 + $0xa0] sm:$0xff] %v1423
        %1460 = vst [vmem:[#allocation3 + $0xa8] sm:$0xff] %v1424
        %1461 = vst [vmem:[#allocation3 + $0xb0] sm:$0xff] %v1425
        %1462 = vst [vmem:[#allocation3 + $0xb8] sm:$0xff] %v1426
        %1463 = vst [vmem:[#allocation3 + $0xc0] sm:$0xff] %v1427
        %1464 = vst [vmem:[#allocation3 + $0xc8] sm:$0xff] %v1428
        %1465 = vst [vmem:[#allocation3 + $0xd0] sm:$0xff] %v1429
        %1466 = vst [vmem:[#allocation3 + $0xd8] sm:$0xff] %v1430
        %1467 = vst [vmem:[#allocation3 + $0xe0] sm:$0xff] %v1431
        %1468 = vst [vmem:[#allocation3 + $0xe8] sm:$0xff] %v1432
        %1469 = vst [vmem:[#allocation3 + $0xf0] sm:$0xff] %v1433
        %1470 = vst [vmem:[#allocation3 + $0xf8] sm:$0xff] %v1434
        %1471 = vst [vmem:[#allocation3 + $0x100] sm:$0xff] %v1435
        %1472 = vst [vmem:[#allocation3 + $0x108] sm:$0xff] %v1436
        %1473 = vst [vmem:[#allocation3 + $0x110] sm:$0xff] %v1437
        %1474 = vst [vmem:[#allocation3 + $0x118] sm:$0xff] %v1438
        %p1475 = scmp.eq.s32.totalorder %s28, 7
        // Predicated region
        $region77: #{hybrid_forward.1} parent=67 // pred_check
          %p1476 = pneg %p1475
        $region78: #{hybrid_forward.1} parent=67 // pred_check_branch
          %1478 = sbr.rel (%p1476) target = $region80
        $region79: #{hybrid_forward.1} parent=67 // pred_region
          %v1479 = vld [vmem:[#allocation3] sm:$0xff]
          %v1480 = vld [vmem:[#allocation3 + $0x8] sm:$0xff]
          %v1481 = vld [vmem:[#allocation3 + $0x10] sm:$0xff]
          %v1482 = vld [vmem:[#allocation3 + $0x18] sm:$0xff]
          %v1483 = vld [vmem:[#allocation3 + $0x20] sm:$0xff]
          %v1484 = vld [vmem:[#allocation3 + $0x28] sm:$0xff]
          %v1485 = vld [vmem:[#allocation3 + $0x30] sm:$0xff]
          %v1486 = vld [vmem:[#allocation3 + $0x38] sm:$0xff]
          %v1487 = vld [vmem:[#allocation3 + $0x40] sm:$0xff]
          %v1488 = vld [vmem:[#allocation3 + $0x48] sm:$0xff]
          %v1489 = vld [vmem:[#allocation3 + $0x50] sm:$0xff]
          %v1490 = vld [vmem:[#allocation3 + $0x58] sm:$0xff]
          %v1491 = vld [vmem:[#allocation3 + $0x60] sm:$0xff]
          %v1492 = vld [vmem:[#allocation3 + $0x68] sm:$0xff]
          %v1493 = vld [vmem:[#allocation3 + $0x70] sm:$0xff]
          %v1494 = vld [vmem:[#allocation3 + $0x78] sm:$0xff]
          %v1495 = vld [vmem:[#allocation3 + $0x80] sm:$0xff]
          %v1496 = vld [vmem:[#allocation3 + $0x88] sm:$0xff]
          %v1497 = vld [vmem:[#allocation3 + $0x90] sm:$0xff]
          %v1498 = vld [vmem:[#allocation3 + $0x98] sm:$0xff]
          %v1499 = vld [vmem:[#allocation3 + $0xa0] sm:$0xff]
          %v1500 = vld [vmem:[#allocation3 + $0xa8] sm:$0xff]
          %v1501 = vld [vmem:[#allocation3 + $0xb0] sm:$0xff]
          %v1502 = vld [vmem:[#allocation3 + $0xb8] sm:$0xff]
          %v1503 = vld [vmem:[#allocation3 + $0xc0] sm:$0xff]
          %v1504 = vld [vmem:[#allocation3 + $0xc8] sm:$0xff]
          %v1505 = vld [vmem:[#allocation3 + $0xd0] sm:$0xff]
          %v1506 = vld [vmem:[#allocation3 + $0xd8] sm:$0xff]
          %v1507 = vld [vmem:[#allocation3 + $0xe0] sm:$0xff]
          %v1508 = vld [vmem:[#allocation3 + $0xe8] sm:$0xff]
          %v1509 = vld [vmem:[#allocation3 + $0xf0] sm:$0xff]
          %v1510 = vld [vmem:[#allocation3 + $0xf8] sm:$0xff]
          %v1511 = vld [vmem:[#allocation3 + $0x100] sm:$0xff]
          %v1512 = vld [vmem:[#allocation3 + $0x108] sm:$0xff]
          %v1513 = vld [vmem:[#allocation3 + $0x110] sm:$0xff]
          %v1514 = vld [vmem:[#allocation3 + $0x118] sm:$0xff]
          %v1515 = vld [vmem:[%s4] sm:$0x3]
          %v1517 = vlaneseq
          %v1518 = vshrl.u32 %v1517, 7
          %v1519 = vsub.s32 0, %v1518
          %v1520 = vrot.slane %v1515, %v1519
          %v1521 = vlaneseq
          %v1522 = vshrl.u32 %v1521, 7
          %v1523 = vsub.s32 1, %v1522
          %v1524 = vrot.slane %v1515, %v1523
          %v1527 = vadd.f32 %v1479, %v1520
          %v1528 = vadd.f32 %v1480, %v1524
          %v1529 = vadd.f32 %v1481, %v1520
          %v1530 = vadd.f32 %v1482, %v1524
          %v1531 = vadd.f32 %v1483, %v1520
          %v1532 = vadd.f32 %v1484, %v1524
          %v1533 = vadd.f32 %v1485, %v1520
          %v1534 = vadd.f32 %v1486, %v1524
          %v1535 = vadd.f32 %v1487, %v1520
          %v1536 = vadd.f32 %v1488, %v1524
          %v1537 = vadd.f32 %v1489, %v1520
          %v1538 = vadd.f32 %v1490, %v1524
          %v1539 = vadd.f32 %v1491, %v1520
          %v1540 = vadd.f32 %v1492, %v1524
          %v1541 = vadd.f32 %v1493, %v1520
          %v1542 = vadd.f32 %v1494, %v1524
          %v1543 = vadd.f32 %v1495, %v1520
          %v1544 = vadd.f32 %v1496, %v1524
          %v1545 = vadd.f32 %v1497, %v1520
          %v1546 = vadd.f32 %v1498, %v1524
          %v1547 = vadd.f32 %v1499, %v1520
          %v1548 = vadd.f32 %v1500, %v1524
          %v1549 = vadd.f32 %v1501, %v1520
          %v1550 = vadd.f32 %v1502, %v1524
          %v1551 = vadd.f32 %v1503, %v1520
          %v1552 = vadd.f32 %v1504, %v1524
          %v1553 = vadd.f32 %v1505, %v1520
          %v1554 = vadd.f32 %v1506, %v1524
          %v1555 = vadd.f32 %v1507, %v1520
          %v1556 = vadd.f32 %v1508, %v1524
          %v1557 = vadd.f32 %v1509, %v1520
          %v1558 = vadd.f32 %v1510, %v1524
          %v1559 = vadd.f32 %v1511, %v1520
          %v1560 = vadd.f32 %v1512, %v1524
          %v1561 = vadd.f32 %v1513, %v1520
          %v1562 = vadd.f32 %v1514, %v1524
          %vm1563 = vcmp.gt.f32.partialorder %v1527, 0.0
          %vm1564 = vcmp.gt.f32.partialorder %v1528, 0.0
          %vm1565 = vcmp.gt.f32.partialorder %v1529, 0.0
          %vm1566 = vcmp.gt.f32.partialorder %v1530, 0.0
          %vm1567 = vcmp.gt.f32.partialorder %v1531, 0.0
          %vm1568 = vcmp.gt.f32.partialorder %v1532, 0.0
          %vm1569 = vcmp.gt.f32.partialorder %v1533, 0.0
          %vm1570 = vcmp.gt.f32.partialorder %v1534, 0.0
          %vm1571 = vcmp.gt.f32.partialorder %v1535, 0.0
          %vm1572 = vcmp.gt.f32.partialorder %v1536, 0.0
          %vm1573 = vcmp.gt.f32.partialorder %v1537, 0.0
          %vm1574 = vcmp.gt.f32.partialorder %v1538, 0.0
          %vm1575 = vcmp.gt.f32.partialorder %v1539, 0.0
          %vm1576 = vcmp.gt.f32.partialorder %v1540, 0.0
          %vm1577 = vcmp.gt.f32.partialorder %v1541, 0.0
          %vm1578 = vcmp.gt.f32.partialorder %v1542, 0.0
          %vm1579 = vcmp.gt.f32.partialorder %v1543, 0.0
          %vm1580 = vcmp.gt.f32.partialorder %v1544, 0.0
          %vm1581 = vcmp.gt.f32.partialorder %v1545, 0.0
          %vm1582 = vcmp.gt.f32.partialorder %v1546, 0.0
          %vm1583 = vcmp.gt.f32.partialorder %v1547, 0.0
          %vm1584 = vcmp.gt.f32.partialorder %v1548, 0.0
          %vm1585 = vcmp.gt.f32.partialorder %v1549, 0.0
          %vm1586 = vcmp.gt.f32.partialorder %v1550, 0.0
          %vm1587 = vcmp.gt.f32.partialorder %v1551, 0.0
          %vm1588 = vcmp.gt.f32.partialorder %v1552, 0.0
          %vm1589 = vcmp.gt.f32.partialorder %v1553, 0.0
          %vm1590 = vcmp.gt.f32.partialorder %v1554, 0.0
          %vm1591 = vcmp.gt.f32.partialorder %v1555, 0.0
          %vm1592 = vcmp.gt.f32.partialorder %v1556, 0.0
          %vm1593 = vcmp.gt.f32.partialorder %v1557, 0.0
          %vm1594 = vcmp.gt.f32.partialorder %v1558, 0.0
          %vm1595 = vcmp.gt.f32.partialorder %v1559, 0.0
          %vm1596 = vcmp.gt.f32.partialorder %v1560, 0.0
          %vm1597 = vcmp.gt.f32.partialorder %v1561, 0.0
          %vm1598 = vcmp.gt.f32.partialorder %v1562, 0.0
          %v1599 = vmul.f32 %v1527, 0.01
          %v1600 = vmul.f32 %v1528, 0.01
          %v1601 = vmul.f32 %v1529, 0.01
          %v1602 = vmul.f32 %v1530, 0.01
          %v1603 = vmul.f32 %v1531, 0.01
          %v1604 = vmul.f32 %v1532, 0.01
          %v1605 = vmul.f32 %v1533, 0.01
          %v1606 = vmul.f32 %v1534, 0.01
          %v1607 = vmul.f32 %v1535, 0.01
          %v1608 = vmul.f32 %v1536, 0.01
          %v1609 = vmul.f32 %v1537, 0.01
          %v1610 = vmul.f32 %v1538, 0.01
          %v1611 = vmul.f32 %v1539, 0.01
          %v1612 = vmul.f32 %v1540, 0.01
          %v1613 = vmul.f32 %v1541, 0.01
          %v1614 = vmul.f32 %v1542, 0.01
          %v1615 = vmul.f32 %v1543, 0.01
          %v1616 = vmul.f32 %v1544, 0.01
          %v1617 = vmul.f32 %v1545, 0.01
          %v1618 = vmul.f32 %v1546, 0.01
          %v1619 = vmul.f32 %v1547, 0.01
          %v1620 = vmul.f32 %v1548, 0.01
          %v1621 = vmul.f32 %v1549, 0.01
          %v1622 = vmul.f32 %v1550, 0.01
          %v1623 = vmul.f32 %v1551, 0.01
          %v1624 = vmul.f32 %v1552, 0.01
          %v1625 = vmul.f32 %v1553, 0.01
          %v1626 = vmul.f32 %v1554, 0.01
          %v1627 = vmul.f32 %v1555, 0.01
          %v1628 = vmul.f32 %v1556, 0.01
          %v1629 = vmul.f32 %v1557, 0.01
          %v1630 = vmul.f32 %v1558, 0.01
          %v1631 = vmul.f32 %v1559, 0.01
          %v1632 = vmul.f32 %v1560, 0.01
          %v1633 = vmul.f32 %v1561, 0.01
          %v1634 = vmul.f32 %v1562, 0.01
          %v1635 = vsel %vm1563, %v1527, %v1599
          %v1636 = vsel %vm1564, %v1528, %v1600
          %v1637 = vsel %vm1565, %v1529, %v1601
          %v1638 = vsel %vm1566, %v1530, %v1602
          %v1639 = vsel %vm1567, %v1531, %v1603
          %v1640 = vsel %vm1568, %v1532, %v1604
          %v1641 = vsel %vm1569, %v1533, %v1605
          %v1642 = vsel %vm1570, %v1534, %v1606
          %v1643 = vsel %vm1571, %v1535, %v1607
          %v1644 = vsel %vm1572, %v1536, %v1608
          %v1645 = vsel %vm1573, %v1537, %v1609
          %v1646 = vsel %vm1574, %v1538, %v1610
          %v1647 = vsel %vm1575, %v1539, %v1611
          %v1648 = vsel %vm1576, %v1540, %v1612
          %v1649 = vsel %vm1577, %v1541, %v1613
          %v1650 = vsel %vm1578, %v1542, %v1614
          %v1651 = vsel %vm1579, %v1543, %v1615
          %v1652 = vsel %vm1580, %v1544, %v1616
          %v1653 = vsel %vm1581, %v1545, %v1617
          %v1654 = vsel %vm1582, %v1546, %v1618
          %v1655 = vsel %vm1583, %v1547, %v1619
          %v1656 = vsel %vm1584, %v1548, %v1620
          %v1657 = vsel %vm1585, %v1549, %v1621
          %v1658 = vsel %vm1586, %v1550, %v1622
          %v1659 = vsel %vm1587, %v1551, %v1623
          %v1660 = vsel %vm1588, %v1552, %v1624
          %v1661 = vsel %vm1589, %v1553, %v1625
          %v1662 = vsel %vm1590, %v1554, %v1626
          %v1663 = vsel %vm1591, %v1555, %v1627
          %v1664 = vsel %vm1592, %v1556, %v1628
          %v1665 = vsel %vm1593, %v1557, %v1629
          %v1666 = vsel %vm1594, %v1558, %v1630
          %v1667 = vsel %vm1595, %v1559, %v1631
          %v1668 = vsel %vm1596, %v1560, %v1632
          %v1669 = vsel %vm1597, %v1561, %v1633
          %v1670 = vsel %vm1598, %v1562, %v1634
          %v1671 = vpack.c.bf16 %v1637, %v1635
          %v1672 = vpack.c.bf16 %v1638, %v1636
          %v1673 = vpack.c.bf16 %v1641, %v1639
          %v1674 = vpack.c.bf16 %v1642, %v1640
          %v1675 = vpack.c.bf16 %v1645, %v1643
          %v1676 = vpack.c.bf16 %v1646, %v1644
          %v1677 = vpack.c.bf16 %v1649, %v1647
          %v1678 = vpack.c.bf16 %v1650, %v1648
          %v1679 = vpack.c.bf16 %v1653, %v1651
          %v1680 = vpack.c.bf16 %v1654, %v1652
          %v1681 = vpack.c.bf16 %v1657, %v1655
          %v1682 = vpack.c.bf16 %v1658, %v1656
          %v1683 = vpack.c.bf16 %v1661, %v1659
          %v1684 = vpack.c.bf16 %v1662, %v1660
          %v1685 = vpack.c.bf16 %v1665, %v1663
          %v1686 = vpack.c.bf16 %v1666, %v1664
          %v1687 = vpack.c.bf16 %v1669, %v1667
          %v1688 = vpack.c.bf16 %v1670, %v1668
          %v1689 = vld [vmem:[%s5] sm:$0xff]
          %v1690 = vld [vmem:[%s5 + $0x8] sm:$0xff]
          %v1691 = vld [vmem:[%s5 + $0x10] sm:$0xff]
          %v1692 = vld [vmem:[%s5 + $0x18] sm:$0xff]
          %v1693 = vld [vmem:[%s5 + $0x20] sm:$0xff]
          %v1694 = vld [vmem:[%s5 + $0x28] sm:$0xff]
          %v1695 = vld [vmem:[%s5 + $0x30] sm:$0xff]
          %v1696 = vld [vmem:[%s5 + $0x38] sm:$0xff]
          %v1697 = vld [vmem:[%s5 + $0x40] sm:$0xff]
          %v1698 = vld [vmem:[%s5 + $0x48] sm:$0xff]
          %v1699 = vld [vmem:[%s5 + $0x50] sm:$0xff]
          %v1700 = vld [vmem:[%s5 + $0x58] sm:$0xff]
          %v1701 = vld [vmem:[%s5 + $0x60] sm:$0xff]
          %v1702 = vld [vmem:[%s5 + $0x68] sm:$0xff]
          %v1703 = vld [vmem:[%s5 + $0x70] sm:$0xff]
          %v1704 = vld [vmem:[%s5 + $0x78] sm:$0xff]
          %v1705 = vld [vmem:[%s5 + $0x80] sm:$0xff]
          %v1706 = vld [vmem:[%s5 + $0x88] sm:$0xff]
          %v1707 = vld [vmem:[%s5 + $0x90] sm:$0xff]
          %v1708 = vld [vmem:[%s5 + $0x98] sm:$0xff]
          %v1709 = vld [vmem:[%s5 + $0xa0] sm:$0xff]
          %v1710 = vld [vmem:[%s5 + $0xa8] sm:$0xff]
          %v1711 = vld [vmem:[%s5 + $0xb0] sm:$0xff]
          %v1712 = vld [vmem:[%s5 + $0xb8] sm:$0xff]
          %v1713 = vld [vmem:[%s5 + $0xc0] sm:$0xff]
          %v1714 = vld [vmem:[%s5 + $0xc8] sm:$0xff]
          %v1715 = vld [vmem:[%s5 + $0xd0] sm:$0xff]
          %v1716 = vld [vmem:[%s5 + $0xd8] sm:$0xff]
          %v1717 = vld [vmem:[%s5 + $0xe0] sm:$0xff]
          %v1718 = vld [vmem:[%s5 + $0xe8] sm:$0xff]
          %v1719 = vld [vmem:[%s5 + $0xf0] sm:$0xff]
          %v1720 = vld [vmem:[%s5 + $0xf8] sm:$0xff]
          %v1721 = vld [vmem:[%s5 + $0x100] sm:$0xff]
          %v1722 = vld [vmem:[%s5 + $0x108] sm:$0xff]
          %v1723 = vld [vmem:[%s5 + $0x110] sm:$0xff]
          %v1724 = vld [vmem:[%s5 + $0x118] sm:$0xff]
          %v1725 = vld [vmem:[%s5 + $0x120] sm:$0xff]
          %v1726 = vld [vmem:[%s5 + $0x128] sm:$0xff]
          %v1727 = vld [vmem:[%s5 + $0x130] sm:$0xff]
          %v1728 = vld [vmem:[%s5 + $0x138] sm:$0xff]
          %v1729 = vld [vmem:[%s5 + $0x140] sm:$0xff]
          %v1730 = vld [vmem:[%s5 + $0x148] sm:$0xff]
          %v1731 = vld [vmem:[%s5 + $0x150] sm:$0xff]
          %v1732 = vld [vmem:[%s5 + $0x158] sm:$0xff]
          %v1733 = vld [vmem:[%s5 + $0x160] sm:$0xff]
          %v1734 = vld [vmem:[%s5 + $0x168] sm:$0xff]
          %v1735 = vld [vmem:[%s5 + $0x170] sm:$0xff]
          %v1736 = vld [vmem:[%s5 + $0x178] sm:$0xff]
          %v1737 = vld [vmem:[%s5 + $0x180] sm:$0xff]
          %v1738 = vld [vmem:[%s5 + $0x188] sm:$0xff]
          %v1739 = vld [vmem:[%s5 + $0x190] sm:$0xff]
          %v1740 = vld [vmem:[%s5 + $0x198] sm:$0xff]
          %v1741 = vld [vmem:[%s5 + $0x1a0] sm:$0xff]
          %v1742 = vld [vmem:[%s5 + $0x1a8] sm:$0xff]
          %v1743 = vld [vmem:[%s5 + $0x1b0] sm:$0xff]
          %v1744 = vld [vmem:[%s5 + $0x1b8] sm:$0xff]
          %v1745 = vld [vmem:[%s5 + $0x1c0] sm:$0xff]
          %v1746 = vld [vmem:[%s5 + $0x1c8] sm:$0xff]
          %v1747 = vld [vmem:[%s5 + $0x1d0] sm:$0xff]
          %v1748 = vld [vmem:[%s5 + $0x1d8] sm:$0xff]
          %v1749 = vld [vmem:[%s5 + $0x1e0] sm:$0xff]
          %v1750 = vld [vmem:[%s5 + $0x1e8] sm:$0xff]
          %v1751 = vld [vmem:[%s5 + $0x1f0] sm:$0xff]
          %v1752 = vld [vmem:[%s5 + $0x1f8] sm:$0xff]
          %v1753 = vld [vmem:[%s7] sm:$0xf]
          %v1755 = vlaneseq
          %v1756 = vshrl.u32 %v1755, 7
          %v1757 = vsub.s32 0, %v1756
          %v1758 = vrot.slane %v1753, %v1757
          %v1759 = vlaneseq
          %v1760 = vshrl.u32 %v1759, 7
          %v1761 = vsub.s32 1, %v1760
          %v1762 = vrot.slane %v1753, %v1761
          %v1763 = vlaneseq
          %v1764 = vshrl.u32 %v1763, 7
          %v1765 = vsub.s32 2, %v1764
          %v1766 = vrot.slane %v1753, %v1765
          %v1767 = vlaneseq
          %v1768 = vshrl.u32 %v1767, 7
          %v1769 = vsub.s32 3, %v1768
          %v1770 = vrot.slane %v1753, %v1769
          %v1839 = vunpack.c.l.b16 %v1689
          %v1840 = vunpack.c.h.b16 %v1689
          %v1841 = vunpack.c.l.b16 %v1690
          %v1842 = vunpack.c.h.b16 %v1690
          %v1843 = vunpack.c.l.b16 %v1691
          %v1844 = vunpack.c.h.b16 %v1691
          %v1845 = vunpack.c.l.b16 %v1692
          %v1846 = vunpack.c.h.b16 %v1692
          %v1847 = vunpack.c.l.b16 %v1693
          %v1848 = vunpack.c.h.b16 %v1693
          %v1849 = vunpack.c.l.b16 %v1694
          %v1850 = vunpack.c.h.b16 %v1694
          %v1851 = vunpack.c.l.b16 %v1695
          %v1852 = vunpack.c.h.b16 %v1695
          %v1853 = vunpack.c.l.b16 %v1696
          %v1854 = vunpack.c.h.b16 %v1696
          %v1855 = vunpack.c.l.b16 %v1697
          %v1856 = vunpack.c.h.b16 %v1697
          %v1857 = vunpack.c.l.b16 %v1698
          %v1858 = vunpack.c.h.b16 %v1698
          %v1859 = vunpack.c.l.b16 %v1699
          %v1860 = vunpack.c.h.b16 %v1699
          %v1861 = vunpack.c.l.b16 %v1700
          %v1862 = vunpack.c.h.b16 %v1700
          %v1863 = vunpack.c.l.b16 %v1701
          %v1864 = vunpack.c.h.b16 %v1701
          %v1865 = vunpack.c.l.b16 %v1702
          %v1866 = vunpack.c.h.b16 %v1702
          %v1867 = vunpack.c.l.b16 %v1703
          %v1868 = vunpack.c.h.b16 %v1703
          %v1869 = vunpack.c.l.b16 %v1704
          %v1870 = vunpack.c.h.b16 %v1704
          %v1871 = vunpack.c.l.b16 %v1705
          %v1872 = vunpack.c.h.b16 %v1705
          %v1873 = vunpack.c.l.b16 %v1706
          %v1874 = vunpack.c.h.b16 %v1706
          %v1875 = vunpack.c.l.b16 %v1707
          %v1876 = vunpack.c.h.b16 %v1707
          %v1877 = vunpack.c.l.b16 %v1708
          %v1878 = vunpack.c.h.b16 %v1708
          %v1879 = vunpack.c.l.b16 %v1709
          %v1880 = vunpack.c.h.b16 %v1709
          %v1881 = vunpack.c.l.b16 %v1710
          %v1882 = vunpack.c.h.b16 %v1710
          %v1883 = vunpack.c.l.b16 %v1711
          %v1884 = vunpack.c.h.b16 %v1711
          %v1885 = vunpack.c.l.b16 %v1712
          %v1886 = vunpack.c.h.b16 %v1712
          %v1887 = vunpack.c.l.b16 %v1713
          %v1888 = vunpack.c.h.b16 %v1713
          %v1889 = vunpack.c.l.b16 %v1714
          %v1890 = vunpack.c.h.b16 %v1714
          %v1891 = vunpack.c.l.b16 %v1715
          %v1892 = vunpack.c.h.b16 %v1715
          %v1893 = vunpack.c.l.b16 %v1716
          %v1894 = vunpack.c.h.b16 %v1716
          %v1895 = vunpack.c.l.b16 %v1717
          %v1896 = vunpack.c.h.b16 %v1717
          %v1897 = vunpack.c.l.b16 %v1718
          %v1898 = vunpack.c.h.b16 %v1718
          %v1899 = vunpack.c.l.b16 %v1719
          %v1900 = vunpack.c.h.b16 %v1719
          %v1901 = vunpack.c.l.b16 %v1720
          %v1902 = vunpack.c.h.b16 %v1720
          %v1903 = vunpack.c.l.b16 %v1721
          %v1904 = vunpack.c.h.b16 %v1721
          %v1905 = vunpack.c.l.b16 %v1722
          %v1906 = vunpack.c.h.b16 %v1722
          %v1907 = vunpack.c.l.b16 %v1723
          %v1908 = vunpack.c.h.b16 %v1723
          %v1909 = vunpack.c.l.b16 %v1724
          %v1910 = vunpack.c.h.b16 %v1724
          %v1911 = vunpack.c.l.b16 %v1725
          %v1912 = vunpack.c.h.b16 %v1725
          %v1913 = vunpack.c.l.b16 %v1726
          %v1914 = vunpack.c.h.b16 %v1726
          %v1915 = vunpack.c.l.b16 %v1727
          %v1916 = vunpack.c.h.b16 %v1727
          %v1917 = vunpack.c.l.b16 %v1728
          %v1918 = vunpack.c.h.b16 %v1728
          %v1919 = vunpack.c.l.b16 %v1729
          %v1920 = vunpack.c.h.b16 %v1729
          %v1921 = vunpack.c.l.b16 %v1730
          %v1922 = vunpack.c.h.b16 %v1730
          %v1923 = vunpack.c.l.b16 %v1731
          %v1924 = vunpack.c.h.b16 %v1731
          %v1925 = vunpack.c.l.b16 %v1732
          %v1926 = vunpack.c.h.b16 %v1732
          %v1927 = vunpack.c.l.b16 %v1733
          %v1928 = vunpack.c.h.b16 %v1733
          %v1929 = vunpack.c.l.b16 %v1734
          %v1930 = vunpack.c.h.b16 %v1734
          %v1931 = vunpack.c.l.b16 %v1735
          %v1932 = vunpack.c.h.b16 %v1735
          %v1933 = vunpack.c.l.b16 %v1736
          %v1934 = vunpack.c.h.b16 %v1736
          %v1935 = vunpack.c.l.b16 %v1737
          %v1936 = vunpack.c.h.b16 %v1737
          %v1937 = vunpack.c.l.b16 %v1738
          %v1938 = vunpack.c.h.b16 %v1738
          %v1939 = vunpack.c.l.b16 %v1739
          %v1940 = vunpack.c.h.b16 %v1739
          %v1941 = vunpack.c.l.b16 %v1740
          %v1942 = vunpack.c.h.b16 %v1740
          %v1943 = vunpack.c.l.b16 %v1741
          %v1944 = vunpack.c.h.b16 %v1741
          %v1945 = vunpack.c.l.b16 %v1742
          %v1946 = vunpack.c.h.b16 %v1742
          %v1947 = vunpack.c.l.b16 %v1743
          %v1948 = vunpack.c.h.b16 %v1743
          %v1949 = vunpack.c.l.b16 %v1744
          %v1950 = vunpack.c.h.b16 %v1744
          %v1951 = vunpack.c.l.b16 %v1745
          %v1952 = vunpack.c.h.b16 %v1745
          %v1953 = vunpack.c.l.b16 %v1746
          %v1954 = vunpack.c.h.b16 %v1746
          %v1955 = vunpack.c.l.b16 %v1747
          %v1956 = vunpack.c.h.b16 %v1747
          %v1957 = vunpack.c.l.b16 %v1748
          %v1958 = vunpack.c.h.b16 %v1748
          %v1959 = vunpack.c.l.b16 %v1749
          %v1960 = vunpack.c.h.b16 %v1749
          %v1961 = vunpack.c.l.b16 %v1750
          %v1962 = vunpack.c.h.b16 %v1750
          %v1963 = vunpack.c.l.b16 %v1751
          %v1964 = vunpack.c.h.b16 %v1751
          %v1965 = vunpack.c.l.b16 %v1752
          %v1966 = vunpack.c.h.b16 %v1752
          %v1967 = vpack.c.b16 %v1843, %v1839
          %v1968 = vpack.c.b16 %v1844, %v1840
          %v1969 = vpack.c.b16 %v1845, %v1841
          %v1970 = vpack.c.b16 %v1846, %v1842
          %v1971 = vpack.c.b16 %v1851, %v1847
          %v1972 = vpack.c.b16 %v1852, %v1848
          %v1973 = vpack.c.b16 %v1853, %v1849
          %v1974 = vpack.c.b16 %v1854, %v1850
          %v1975 = vpack.c.b16 %v1859, %v1855
          %v1976 = vpack.c.b16 %v1860, %v1856
          %v1977 = vpack.c.b16 %v1861, %v1857
          %v1978 = vpack.c.b16 %v1862, %v1858
          %v1979 = vpack.c.b16 %v1867, %v1863
          %v1980 = vpack.c.b16 %v1868, %v1864
          %v1981 = vpack.c.b16 %v1869, %v1865
          %v1982 = vpack.c.b16 %v1870, %v1866
          %v1983 = vpack.c.b16 %v1875, %v1871
          %v1984 = vpack.c.b16 %v1876, %v1872
          %v1985 = vpack.c.b16 %v1877, %v1873
          %v1986 = vpack.c.b16 %v1878, %v1874
          %v1987 = vpack.c.b16 %v1883, %v1879
          %v1988 = vpack.c.b16 %v1884, %v1880
          %v1989 = vpack.c.b16 %v1885, %v1881
          %v1990 = vpack.c.b16 %v1886, %v1882
          %v1991 = vpack.c.b16 %v1891, %v1887
          %v1992 = vpack.c.b16 %v1892, %v1888
          %v1993 = vpack.c.b16 %v1893, %v1889
          %v1994 = vpack.c.b16 %v1894, %v1890
          %v1995 = vpack.c.b16 %v1899, %v1895
          %v1996 = vpack.c.b16 %v1900, %v1896
          %v1997 = vpack.c.b16 %v1901, %v1897
          %v1998 = vpack.c.b16 %v1902, %v1898
          %v1999 = vpack.c.b16 %v1907, %v1903
          %v2000 = vpack.c.b16 %v1908, %v1904
          %v2001 = vpack.c.b16 %v1909, %v1905
          %v2002 = vpack.c.b16 %v1910, %v1906
          %v2003 = vpack.c.b16 %v1915, %v1911
          %v2004 = vpack.c.b16 %v1916, %v1912
          %v2005 = vpack.c.b16 %v1917, %v1913
          %v2006 = vpack.c.b16 %v1918, %v1914
          %v2007 = vpack.c.b16 %v1923, %v1919
          %v2008 = vpack.c.b16 %v1924, %v1920
          %v2009 = vpack.c.b16 %v1925, %v1921
          %v2010 = vpack.c.b16 %v1926, %v1922
          %v2011 = vpack.c.b16 %v1931, %v1927
          %v2012 = vpack.c.b16 %v1932, %v1928
          %v2013 = vpack.c.b16 %v1933, %v1929
          %v2014 = vpack.c.b16 %v1934, %v1930
          %v2015 = vpack.c.b16 %v1939, %v1935
          %v2016 = vpack.c.b16 %v1940, %v1936
          %v2017 = vpack.c.b16 %v1941, %v1937
          %v2018 = vpack.c.b16 %v1942, %v1938
          %v2019 = vpack.c.b16 %v1947, %v1943
          %v2020 = vpack.c.b16 %v1948, %v1944
          %v2021 = vpack.c.b16 %v1949, %v1945
          %v2022 = vpack.c.b16 %v1950, %v1946
          %v2023 = vpack.c.b16 %v1955, %v1951
          %v2024 = vpack.c.b16 %v1956, %v1952
          %v2025 = vpack.c.b16 %v1957, %v1953
          %v2026 = vpack.c.b16 %v1958, %v1954
          %v2027 = vpack.c.b16 %v1963, %v1959
          %v2028 = vpack.c.b16 %v1964, %v1960
          %v2029 = vpack.c.b16 %v1965, %v1961
          %v2030 = vpack.c.b16 %v1966, %v1962
          %2095 = vmatprep.subr.bf16.mxu0 %v1996
          %2096 = vmatpush1.bf16.msra.mxu0 %v1995
          %2097 = vmatprep.subr.bf16.mxu0 %v1992
          %2098 = vmatpush1.bf16.msra.mxu0 %v1991
          %2099 = vmatprep.subr.bf16.mxu0 %v1988
          %2100 = vmatpush1.bf16.msra.mxu0 %v1987
          %2101 = vmatprep.subr.bf16.mxu0 %v1984
          %2102 = vmatpush1.bf16.msra.mxu0 %v1983
          %2103 = vmatprep.subr.bf16.mxu0 %v1980
          %2104 = vmatpush1.bf16.msra.mxu0 %v1979
          %2105 = vmatprep.subr.bf16.mxu0 %v1976
          %2106 = vmatpush1.bf16.msra.mxu0 %v1975
          %2107 = vmatprep.subr.bf16.mxu0 %v1972
          %2108 = vmatpush1.bf16.msra.mxu0 %v1971
          %2109 = vmatprep.subr.bf16.mxu0 %v1968
          %2110 = vmatpush1.bf16.msra.mxu0 %v1967
          %2111 = vmatprep.subr.bf16.mxu0 %v2028
          %2112 = vmatpush2.bf16.msra.mxu0 %v2027
          %2113 = vmatprep.subr.bf16.mxu0 %v2024
          %2114 = vmatpush2.bf16.msra.mxu0 %v2023
          %2115 = vmatprep.subr.bf16.mxu0 %v2020
          %2116 = vmatpush2.bf16.msra.mxu0 %v2019
          %2117 = vmatprep.subr.bf16.mxu0 %v2016
          %2118 = vmatpush2.bf16.msra.mxu0 %v2015
          %2119 = vmatprep.subr.bf16.mxu0 %v2012
          %2120 = vmatpush2.bf16.msra.mxu0 %v2011
          %2121 = vmatprep.subr.bf16.mxu0 %v2008
          %2122 = vmatpush2.bf16.msra.mxu0 %v2007
          %2123 = vmatprep.subr.bf16.mxu0 %v2004
          %2124 = vmatpush2.bf16.msra.mxu0 %v2003
          %2125 = vmatprep.subr.bf16.mxu0 %v2000
          %2126 = vmatpush2.bf16.msra.mxu0 %v1999
          %2127 = vmatprep.mubr.bf16.mxu0 %v1672
          %2128 = vmatmul.mubr.bf16.gmra.mxu0 %v1671
          %v2129 = vpop.f32.mrf.mxu0
          %v2130 = vadd.f32 %v1758, %v2129
          %v2131 = vpop.f32.mrf.mxu0
          %v2132 = vadd.f32 %v1762, %v2131
          %v2133 = vpop.f32.mrf.mxu0
          %v2134 = vadd.f32 %v1758, %v2133
          %v2135 = vpop.f32.mrf.mxu0
          %v2136 = vadd.f32 %v1762, %v2135
          %2137 = vmatprep.mubr.bf16.mxu0 %v1674
          %2138 = vmatmul.mubr.bf16.gmra.mxu0 %v1673
          %v2139 = vpop.f32.mrf.mxu0
          %v2140 = vadd.f32 %v1758, %v2139
          %v2141 = vpop.f32.mrf.mxu0
          %v2142 = vadd.f32 %v1762, %v2141
          %v2143 = vpop.f32.mrf.mxu0
          %v2144 = vadd.f32 %v1758, %v2143
          %v2145 = vpop.f32.mrf.mxu0
          %v2146 = vadd.f32 %v1762, %v2145
          %2147 = vmatprep.mubr.bf16.mxu0 %v1676
          %2148 = vmatmul.mubr.bf16.gmra.mxu0 %v1675
          %v2149 = vpop.f32.mrf.mxu0
          %v2150 = vadd.f32 %v1758, %v2149
          %v2151 = vpop.f32.mrf.mxu0
          %v2152 = vadd.f32 %v1762, %v2151
          %v2153 = vpop.f32.mrf.mxu0
          %v2154 = vadd.f32 %v1758, %v2153
          %v2155 = vpop.f32.mrf.mxu0
          %v2156 = vadd.f32 %v1762, %v2155
          %2157 = vmatprep.mubr.bf16.mxu0 %v1678
          %2158 = vmatmul.mubr.bf16.gmra.mxu0 %v1677
          %v2159 = vpop.f32.mrf.mxu0
          %v2160 = vadd.f32 %v1758, %v2159
          %v2161 = vpop.f32.mrf.mxu0
          %v2162 = vadd.f32 %v1762, %v2161
          %v2163 = vpop.f32.mrf.mxu0
          %v2164 = vadd.f32 %v1758, %v2163
          %v2165 = vpop.f32.mrf.mxu0
          %v2166 = vadd.f32 %v1762, %v2165
          %2167 = vmatprep.mubr.bf16.mxu0 %v1680
          %2168 = vmatmul.mubr.bf16.gmra.mxu0 %v1679
          %v2169 = vpop.f32.mrf.mxu0
          %v2170 = vadd.f32 %v1758, %v2169
          %v2171 = vpop.f32.mrf.mxu0
          %v2172 = vadd.f32 %v1762, %v2171
          %v2173 = vpop.f32.mrf.mxu0
          %v2174 = vadd.f32 %v1758, %v2173
          %v2175 = vpop.f32.mrf.mxu0
          %v2176 = vadd.f32 %v1762, %v2175
          %2177 = vmatprep.mubr.bf16.mxu0 %v1682
          %2178 = vmatmul.mubr.bf16.gmra.mxu0 %v1681
          %v2179 = vpop.f32.mrf.mxu0
          %v2180 = vadd.f32 %v1758, %v2179
          %v2181 = vpop.f32.mrf.mxu0
          %v2182 = vadd.f32 %v1762, %v2181
          %v2183 = vpop.f32.mrf.mxu0
          %v2184 = vadd.f32 %v1758, %v2183
          %v2185 = vpop.f32.mrf.mxu0
          %v2186 = vadd.f32 %v1762, %v2185
          %2187 = vmatprep.mubr.bf16.mxu0 %v1684
          %2188 = vmatmul.mubr.bf16.gmra.mxu0 %v1683
          %v2189 = vpop.f32.mrf.mxu0
          %v2190 = vadd.f32 %v1758, %v2189
          %v2191 = vpop.f32.mrf.mxu0
          %v2192 = vadd.f32 %v1762, %v2191
          %v2193 = vpop.f32.mrf.mxu0
          %v2194 = vadd.f32 %v1758, %v2193
          %v2195 = vpop.f32.mrf.mxu0
          %v2196 = vadd.f32 %v1762, %v2195
          %2197 = vmatprep.mubr.bf16.mxu0 %v1686
          %2198 = vmatmul.mubr.bf16.gmra.mxu0 %v1685
          %v2199 = vpop.f32.mrf.mxu0
          %v2200 = vadd.f32 %v1758, %v2199
          %v2201 = vpop.f32.mrf.mxu0
          %v2202 = vadd.f32 %v1762, %v2201
          %v2203 = vpop.f32.mrf.mxu0
          %v2204 = vadd.f32 %v1758, %v2203
          %v2205 = vpop.f32.mrf.mxu0
          %v2206 = vadd.f32 %v1762, %v2205
          %2207 = vmatprep.mubr.bf16.mxu0 %v1688
          %2208 = vmatmul.mubr.bf16.gmra.mxu0 %v1687
          %v2209 = vpop.f32.mrf.mxu0
          %v2210 = vadd.f32 %v1758, %v2209
          %v2211 = vpop.f32.mrf.mxu0
          %v2212 = vadd.f32 %v1762, %v2211
          %v2213 = vpop.f32.mrf.mxu0
          %v2214 = vadd.f32 %v1758, %v2213
          %v2215 = vpop.f32.mrf.mxu0
          %v2216 = vadd.f32 %v1762, %v2215
          %2217 = vdwg.mxu0
          %2218 = vmatprep.subr.bf16.mxu0 %v1998
          %2219 = vmatpush1.bf16.msra.mxu0 %v1997
          %2220 = vmatprep.subr.bf16.mxu0 %v1994
          %2221 = vmatpush1.bf16.msra.mxu0 %v1993
          %2222 = vmatprep.subr.bf16.mxu0 %v1990
          %2223 = vmatpush1.bf16.msra.mxu0 %v1989
          %2224 = vmatprep.subr.bf16.mxu0 %v1986
          %2225 = vmatpush1.bf16.msra.mxu0 %v1985
          %2226 = vmatprep.subr.bf16.mxu0 %v1982
          %2227 = vmatpush1.bf16.msra.mxu0 %v1981
          %2228 = vmatprep.subr.bf16.mxu0 %v1978
          %2229 = vmatpush1.bf16.msra.mxu0 %v1977
          %2230 = vmatprep.subr.bf16.mxu0 %v1974
          %2231 = vmatpush1.bf16.msra.mxu0 %v1973
          %2232 = vmatprep.subr.bf16.mxu0 %v1970
          %2233 = vmatpush1.bf16.msra.mxu0 %v1969
          %2234 = vmatprep.subr.bf16.mxu0 %v2030
          %2235 = vmatpush2.bf16.msra.mxu0 %v2029
          %2236 = vmatprep.subr.bf16.mxu0 %v2026
          %2237 = vmatpush2.bf16.msra.mxu0 %v2025
          %2238 = vmatprep.subr.bf16.mxu0 %v2022
          %2239 = vmatpush2.bf16.msra.mxu0 %v2021
          %2240 = vmatprep.subr.bf16.mxu0 %v2018
          %2241 = vmatpush2.bf16.msra.mxu0 %v2017
          %2242 = vmatprep.subr.bf16.mxu0 %v2014
          %2243 = vmatpush2.bf16.msra.mxu0 %v2013
          %2244 = vmatprep.subr.bf16.mxu0 %v2010
          %2245 = vmatpush2.bf16.msra.mxu0 %v2009
          %2246 = vmatprep.subr.bf16.mxu0 %v2006
          %2247 = vmatpush2.bf16.msra.mxu0 %v2005
          %2248 = vmatprep.subr.bf16.mxu0 %v2002
          %2249 = vmatpush2.bf16.msra.mxu0 %v2001
          %2250 = vmatprep.mubr.bf16.mxu0 %v1672
          %2251 = vmatmul.mubr.bf16.gmra.mxu0 %v1671
          %v2252 = vpop.f32.mrf.mxu0
          %v2253 = vadd.f32 %v1766, %v2252
          %v2254 = vpop.f32.mrf.mxu0
          %v2255 = vadd.f32 %v1770, %v2254
          %v2256 = vpop.f32.mrf.mxu0
          %v2257 = vadd.f32 %v1766, %v2256
          %v2258 = vpop.f32.mrf.mxu0
          %v2259 = vadd.f32 %v1770, %v2258
          %2260 = vmatprep.mubr.bf16.mxu0 %v1674
          %2261 = vmatmul.mubr.bf16.gmra.mxu0 %v1673
          %v2262 = vpop.f32.mrf.mxu0
          %v2263 = vadd.f32 %v1766, %v2262
          %v2264 = vpop.f32.mrf.mxu0
          %v2265 = vadd.f32 %v1770, %v2264
          %v2266 = vpop.f32.mrf.mxu0
          %v2267 = vadd.f32 %v1766, %v2266
          %v2268 = vpop.f32.mrf.mxu0
          %v2269 = vadd.f32 %v1770, %v2268
          %2270 = vmatprep.mubr.bf16.mxu0 %v1676
          %2271 = vmatmul.mubr.bf16.gmra.mxu0 %v1675
          %v2272 = vpop.f32.mrf.mxu0
          %v2273 = vadd.f32 %v1766, %v2272
          %v2274 = vpop.f32.mrf.mxu0
          %v2275 = vadd.f32 %v1770, %v2274
          %v2276 = vpop.f32.mrf.mxu0
          %v2277 = vadd.f32 %v1766, %v2276
          %v2278 = vpop.f32.mrf.mxu0
          %v2279 = vadd.f32 %v1770, %v2278
          %2280 = vmatprep.mubr.bf16.mxu0 %v1678
          %2281 = vmatmul.mubr.bf16.gmra.mxu0 %v1677
          %v2282 = vpop.f32.mrf.mxu0
          %v2283 = vadd.f32 %v1766, %v2282
          %v2284 = vpop.f32.mrf.mxu0
          %v2285 = vadd.f32 %v1770, %v2284
          %v2286 = vpop.f32.mrf.mxu0
          %v2287 = vadd.f32 %v1766, %v2286
          %v2288 = vpop.f32.mrf.mxu0
          %v2289 = vadd.f32 %v1770, %v2288
          %2290 = vmatprep.mubr.bf16.mxu0 %v1680
          %2291 = vmatmul.mubr.bf16.gmra.mxu0 %v1679
          %v2292 = vpop.f32.mrf.mxu0
          %v2293 = vadd.f32 %v1766, %v2292
          %v2294 = vpop.f32.mrf.mxu0
          %v2295 = vadd.f32 %v1770, %v2294
          %v2296 = vpop.f32.mrf.mxu0
          %v2297 = vadd.f32 %v1766, %v2296
          %v2298 = vpop.f32.mrf.mxu0
          %v2299 = vadd.f32 %v1770, %v2298
          %2300 = vmatprep.mubr.bf16.mxu0 %v1682
          %2301 = vmatmul.mubr.bf16.gmra.mxu0 %v1681
          %v2302 = vpop.f32.mrf.mxu0
          %v2303 = vadd.f32 %v1766, %v2302
          %v2304 = vpop.f32.mrf.mxu0
          %v2305 = vadd.f32 %v1770, %v2304
          %v2306 = vpop.f32.mrf.mxu0
          %v2307 = vadd.f32 %v1766, %v2306
          %v2308 = vpop.f32.mrf.mxu0
          %v2309 = vadd.f32 %v1770, %v2308
          %2310 = vmatprep.mubr.bf16.mxu0 %v1684
          %2311 = vmatmul.mubr.bf16.gmra.mxu0 %v1683
          %v2312 = vpop.f32.mrf.mxu0
          %v2313 = vadd.f32 %v1766, %v2312
          %v2314 = vpop.f32.mrf.mxu0
          %v2315 = vadd.f32 %v1770, %v2314
          %v2316 = vpop.f32.mrf.mxu0
          %v2317 = vadd.f32 %v1766, %v2316
          %v2318 = vpop.f32.mrf.mxu0
          %v2319 = vadd.f32 %v1770, %v2318
          %2320 = vmatprep.mubr.bf16.mxu0 %v1686
          %2321 = vmatmul.mubr.bf16.gmra.mxu0 %v1685
          %v2322 = vpop.f32.mrf.mxu0
          %v2323 = vadd.f32 %v1766, %v2322
          %v2324 = vpop.f32.mrf.mxu0
          %v2325 = vadd.f32 %v1770, %v2324
          %v2326 = vpop.f32.mrf.mxu0
          %v2327 = vadd.f32 %v1766, %v2326
          %v2328 = vpop.f32.mrf.mxu0
          %v2329 = vadd.f32 %v1770, %v2328
          %2330 = vmatprep.mubr.bf16.mxu0 %v1688
          %2331 = vmatmul.mubr.bf16.gmra.mxu0 %v1687
          %v2332 = vpop.f32.mrf.mxu0
          %v2333 = vadd.f32 %v1766, %v2332
          %v2334 = vpop.f32.mrf.mxu0
          %v2335 = vadd.f32 %v1770, %v2334
          %v2336 = vpop.f32.mrf.mxu0
          %v2337 = vadd.f32 %v1766, %v2336
          %v2338 = vpop.f32.mrf.mxu0
          %v2339 = vadd.f32 %v1770, %v2338
          %2340 = vdwg.mxu0
          %2341 = vst [vmem:[#allocation4] sm:$0xff] %v2130
          %2342 = vst [vmem:[#allocation4 + $0x8] sm:$0xff] %v2132
          %2343 = vst [vmem:[#allocation4 + $0x10] sm:$0xff] %v2253
          %2344 = vst [vmem:[#allocation4 + $0x18] sm:$0xff] %v2255
          %2345 = vst [vmem:[#allocation4 + $0x20] sm:$0xff] %v2134
          %2346 = vst [vmem:[#allocation4 + $0x28] sm:$0xff] %v2136
          %2347 = vst [vmem:[#allocation4 + $0x30] sm:$0xff] %v2257
          %2348 = vst [vmem:[#allocation4 + $0x38] sm:$0xff] %v2259
          %2349 = vst [vmem:[#allocation4 + $0x40] sm:$0xff] %v2140
          %2350 = vst [vmem:[#allocation4 + $0x48] sm:$0xff] %v2142
          %2351 = vst [vmem:[#allocation4 + $0x50] sm:$0xff] %v2263
          %2352 = vst [vmem:[#allocation4 + $0x58] sm:$0xff] %v2265
          %2353 = vst [vmem:[#allocation4 + $0x60] sm:$0xff] %v2144
          %2354 = vst [vmem:[#allocation4 + $0x68] sm:$0xff] %v2146
          %2355 = vst [vmem:[#allocation4 + $0x70] sm:$0xff] %v2267
          %2356 = vst [vmem:[#allocation4 + $0x78] sm:$0xff] %v2269
          %2357 = vst [vmem:[#allocation4 + $0x80] sm:$0xff] %v2150
          %2358 = vst [vmem:[#allocation4 + $0x88] sm:$0xff] %v2152
          %2359 = vst [vmem:[#allocation4 + $0x90] sm:$0xff] %v2273
          %2360 = vst [vmem:[#allocation4 + $0x98] sm:$0xff] %v2275
          %2361 = vst [vmem:[#allocation4 + $0xa0] sm:$0xff] %v2154
          %2362 = vst [vmem:[#allocation4 + $0xa8] sm:$0xff] %v2156
          %2363 = vst [vmem:[#allocation4 + $0xb0] sm:$0xff] %v2277
          %2364 = vst [vmem:[#allocation4 + $0xb8] sm:$0xff] %v2279
          %2365 = vst [vmem:[#allocation4 + $0xc0] sm:$0xff] %v2160
          %2366 = vst [vmem:[#allocation4 + $0xc8] sm:$0xff] %v2162
          %2367 = vst [vmem:[#allocation4 + $0xd0] sm:$0xff] %v2283
          %2368 = vst [vmem:[#allocation4 + $0xd8] sm:$0xff] %v2285
          %2369 = vst [vmem:[#allocation4 + $0xe0] sm:$0xff] %v2164
          %2370 = vst [vmem:[#allocation4 + $0xe8] sm:$0xff] %v2166
          %2371 = vst [vmem:[#allocation4 + $0xf0] sm:$0xff] %v2287
          %2372 = vst [vmem:[#allocation4 + $0xf8] sm:$0xff] %v2289
          %2373 = vst [vmem:[#allocation4 + $0x100] sm:$0xff] %v2170
          %2374 = vst [vmem:[#allocation4 + $0x108] sm:$0xff] %v2172
          %2375 = vst [vmem:[#allocation4 + $0x110] sm:$0xff] %v2293
          %2376 = vst [vmem:[#allocation4 + $0x118] sm:$0xff] %v2295
          %2377 = vst [vmem:[#allocation4 + $0x120] sm:$0xff] %v2174
          %2378 = vst [vmem:[#allocation4 + $0x128] sm:$0xff] %v2176
          %2379 = vst [vmem:[#allocation4 + $0x130] sm:$0xff] %v2297
          %2380 = vst [vmem:[#allocation4 + $0x138] sm:$0xff] %v2299
          %2381 = vst [vmem:[#allocation4 + $0x140] sm:$0xff] %v2180
          %2382 = vst [vmem:[#allocation4 + $0x148] sm:$0xff] %v2182
          %2383 = vst [vmem:[#allocation4 + $0x150] sm:$0xff] %v2303
          %2384 = vst [vmem:[#allocation4 + $0x158] sm:$0xff] %v2305
          %2385 = vst [vmem:[#allocation4 + $0x160] sm:$0xff] %v2184
          %2386 = vst [vmem:[#allocation4 + $0x168] sm:$0xff] %v2186
          %2387 = vst [vmem:[#allocation4 + $0x170] sm:$0xff] %v2307
          %2388 = vst [vmem:[#allocation4 + $0x178] sm:$0xff] %v2309
          %2389 = vst [vmem:[#allocation4 + $0x180] sm:$0xff] %v2190
          %2390 = vst [vmem:[#allocation4 + $0x188] sm:$0xff] %v2192
          %2391 = vst [vmem:[#allocation4 + $0x190] sm:$0xff] %v2313
          %2392 = vst [vmem:[#allocation4 + $0x198] sm:$0xff] %v2315
          %2393 = vst [vmem:[#allocation4 + $0x1a0] sm:$0xff] %v2194
          %2394 = vst [vmem:[#allocation4 + $0x1a8] sm:$0xff] %v2196
          %2395 = vst [vmem:[#allocation4 + $0x1b0] sm:$0xff] %v2317
          %2396 = vst [vmem:[#allocation4 + $0x1b8] sm:$0xff] %v2319
          %2397 = vst [vmem:[#allocation4 + $0x1c0] sm:$0xff] %v2200
          %2398 = vst [vmem:[#allocation4 + $0x1c8] sm:$0xff] %v2202
          %2399 = vst [vmem:[#allocation4 + $0x1d0] sm:$0xff] %v2323
          %2400 = vst [vmem:[#allocation4 + $0x1d8] sm:$0xff] %v2325
          %2401 = vst [vmem:[#allocation4 + $0x1e0] sm:$0xff] %v2204
          %2402 = vst [vmem:[#allocation4 + $0x1e8] sm:$0xff] %v2206
          %2403 = vst [vmem:[#allocation4 + $0x1f0] sm:$0xff] %v2327
          %2404 = vst [vmem:[#allocation4 + $0x1f8] sm:$0xff] %v2329
          %2405 = vst [vmem:[#allocation4 + $0x200] sm:$0xff] %v2210
          %2406 = vst [vmem:[#allocation4 + $0x208] sm:$0xff] %v2212
          %2407 = vst [vmem:[#allocation4 + $0x210] sm:$0xff] %v2333
          %2408 = vst [vmem:[#allocation4 + $0x218] sm:$0xff] %v2335
          %2409 = vst [vmem:[#allocation4 + $0x220] sm:$0xff] %v2214
          %2410 = vst [vmem:[#allocation4 + $0x228] sm:$0xff] %v2216
          %2411 = vst [vmem:[#allocation4 + $0x230] sm:$0xff] %v2337
          %2412 = vst [vmem:[#allocation4 + $0x238] sm:$0xff] %v2339
          loop: start=0, step=1, limit=9
          $region81: #{hybrid_forward.1} parent=79 // loop_pre_header
            _
          $region82: #{hybrid_forward.1} parent=79 // loop_header
            %s2414 = sphi 0, %s2418
            %p2415 = scmp.ge.s32.totalorder %s2414, 9
            %v2419 = vphi 0.0, %v2850
            %v2420 = vphi 0.0, %v2848
          $region83: #{hybrid_forward.1} parent=79 // loop_header_branch
            %2417 = sbr.rel (%p2415) target = $region87
          $region84: #{hybrid_forward.1} parent=79 // loop_body
            %s2421 = smul.u32 %s2414, 2
            %s2422 = sadd.s32 %s2421, 1
            %s2423 = smul.u32 %s2421, 4
            %s2424 = smul.addr %s2423, 8
            %s2425 = scalar_lea.vmem [#allocation4], %s2424
            %v2426 = vld [vmem:[%s2425] sm:$0xff]
            %v2427 = vld [vmem:[%s2425 + $0x8] sm:$0xff]
            %v2428 = vld [vmem:[%s2425 + $0x10] sm:$0xff]
            %v2429 = vld [vmem:[%s2425 + $0x18] sm:$0xff]
            %v2430 = vpack.c.bf16 %v2419, %v2419
            %v2431 = vld [vmem:[%s6] sm:$0xff]
            %v2432 = vld [vmem:[%s6 + $0x8] sm:$0xff]
            %v2433 = vld [vmem:[%s6 + $0x10] sm:$0xff]
            %v2434 = vld [vmem:[%s6 + $0x18] sm:$0xff]
            %v2435 = vld [vmem:[%s6 + $0x20] sm:$0xff]
            %v2436 = vld [vmem:[%s6 + $0x28] sm:$0xff]
            %v2437 = vld [vmem:[%s6 + $0x30] sm:$0xff]
            %v2438 = vld [vmem:[%s6 + $0x38] sm:$0xff]
            %v2439 = vld [vmem:[%s6 + $0x40] sm:$0xff]
            %v2440 = vld [vmem:[%s6 + $0x48] sm:$0xff]
            %v2441 = vld [vmem:[%s6 + $0x50] sm:$0xff]
            %v2442 = vld [vmem:[%s6 + $0x58] sm:$0xff]
            %v2443 = vld [vmem:[%s6 + $0x60] sm:$0xff]
            %v2444 = vld [vmem:[%s6 + $0x68] sm:$0xff]
            %v2445 = vld [vmem:[%s6 + $0x70] sm:$0xff]
            %v2446 = vld [vmem:[%s6 + $0x78] sm:$0xff]
            %v2447 = vld [vmem:[%s6 + $0x80] sm:$0xff]
            %v2448 = vld [vmem:[%s6 + $0x88] sm:$0xff]
            %v2449 = vld [vmem:[%s6 + $0x90] sm:$0xff]
            %v2450 = vld [vmem:[%s6 + $0x98] sm:$0xff]
            %v2451 = vld [vmem:[%s6 + $0xa0] sm:$0xff]
            %v2452 = vld [vmem:[%s6 + $0xa8] sm:$0xff]
            %v2453 = vld [vmem:[%s6 + $0xb0] sm:$0xff]
            %v2454 = vld [vmem:[%s6 + $0xb8] sm:$0xff]
            %v2455 = vld [vmem:[%s6 + $0xc0] sm:$0xff]
            %v2456 = vld [vmem:[%s6 + $0xc8] sm:$0xff]
            %v2457 = vld [vmem:[%s6 + $0xd0] sm:$0xff]
            %v2458 = vld [vmem:[%s6 + $0xd8] sm:$0xff]
            %v2459 = vld [vmem:[%s6 + $0xe0] sm:$0xff]
            %v2460 = vld [vmem:[%s6 + $0xe8] sm:$0xff]
            %v2461 = vld [vmem:[%s6 + $0xf0] sm:$0xff]
            %v2462 = vld [vmem:[%s6 + $0xf8] sm:$0xff]
            %v2495 = vunpack.c.l.b16 %v2431
            %v2496 = vunpack.c.h.b16 %v2431
            %v2497 = vunpack.c.l.b16 %v2432
            %v2498 = vunpack.c.h.b16 %v2432
            %v2499 = vunpack.c.l.b16 %v2433
            %v2500 = vunpack.c.h.b16 %v2433
            %v2501 = vunpack.c.l.b16 %v2434
            %v2502 = vunpack.c.h.b16 %v2434
            %v2503 = vunpack.c.l.b16 %v2435
            %v2504 = vunpack.c.h.b16 %v2435
            %v2505 = vunpack.c.l.b16 %v2436
            %v2506 = vunpack.c.h.b16 %v2436
            %v2507 = vunpack.c.l.b16 %v2437
            %v2508 = vunpack.c.h.b16 %v2437
            %v2509 = vunpack.c.l.b16 %v2438
            %v2510 = vunpack.c.h.b16 %v2438
            %v2511 = vunpack.c.l.b16 %v2439
            %v2512 = vunpack.c.h.b16 %v2439
            %v2513 = vunpack.c.l.b16 %v2440
            %v2514 = vunpack.c.h.b16 %v2440
            %v2515 = vunpack.c.l.b16 %v2441
            %v2516 = vunpack.c.h.b16 %v2441
            %v2517 = vunpack.c.l.b16 %v2442
            %v2518 = vunpack.c.h.b16 %v2442
            %v2519 = vunpack.c.l.b16 %v2443
            %v2520 = vunpack.c.h.b16 %v2443
            %v2521 = vunpack.c.l.b16 %v2444
            %v2522 = vunpack.c.h.b16 %v2444
            %v2523 = vunpack.c.l.b16 %v2445
            %v2524 = vunpack.c.h.b16 %v2445
            %v2525 = vunpack.c.l.b16 %v2446
            %v2526 = vunpack.c.h.b16 %v2446
            %v2527 = vunpack.c.l.b16 %v2447
            %v2528 = vunpack.c.h.b16 %v2447
            %v2529 = vunpack.c.l.b16 %v2448
            %v2530 = vunpack.c.h.b16 %v2448
            %v2531 = vunpack.c.l.b16 %v2449
            %v2532 = vunpack.c.h.b16 %v2449
            %v2533 = vunpack.c.l.b16 %v2450
            %v2534 = vunpack.c.h.b16 %v2450
            %v2535 = vunpack.c.l.b16 %v2451
            %v2536 = vunpack.c.h.b16 %v2451
            %v2537 = vunpack.c.l.b16 %v2452
            %v2538 = vunpack.c.h.b16 %v2452
            %v2539 = vunpack.c.l.b16 %v2453
            %v2540 = vunpack.c.h.b16 %v2453
            %v2541 = vunpack.c.l.b16 %v2454
            %v2542 = vunpack.c.h.b16 %v2454
            %v2543 = vunpack.c.l.b16 %v2455
            %v2544 = vunpack.c.h.b16 %v2455
            %v2545 = vunpack.c.l.b16 %v2456
            %v2546 = vunpack.c.h.b16 %v2456
            %v2547 = vunpack.c.l.b16 %v2457
            %v2548 = vunpack.c.h.b16 %v2457
            %v2549 = vunpack.c.l.b16 %v2458
            %v2550 = vunpack.c.h.b16 %v2458
            %v2551 = vunpack.c.l.b16 %v2459
            %v2552 = vunpack.c.h.b16 %v2459
            %v2553 = vunpack.c.l.b16 %v2460
            %v2554 = vunpack.c.h.b16 %v2460
            %v2555 = vunpack.c.l.b16 %v2461
            %v2556 = vunpack.c.h.b16 %v2461
            %v2557 = vunpack.c.l.b16 %v2462
            %v2558 = vunpack.c.h.b16 %v2462
            %v2559 = vpack.c.b16 %v2499, %v2495
            %v2560 = vpack.c.b16 %v2500, %v2496
            %v2561 = vpack.c.b16 %v2501, %v2497
            %v2562 = vpack.c.b16 %v2502, %v2498
            %v2563 = vpack.c.b16 %v2507, %v2503
            %v2564 = vpack.c.b16 %v2508, %v2504
            %v2565 = vpack.c.b16 %v2509, %v2505
            %v2566 = vpack.c.b16 %v2510, %v2506
            %v2567 = vpack.c.b16 %v2515, %v2511
            %v2568 = vpack.c.b16 %v2516, %v2512
            %v2569 = vpack.c.b16 %v2517, %v2513
            %v2570 = vpack.c.b16 %v2518, %v2514
            %v2571 = vpack.c.b16 %v2523, %v2519
            %v2572 = vpack.c.b16 %v2524, %v2520
            %v2573 = vpack.c.b16 %v2525, %v2521
            %v2574 = vpack.c.b16 %v2526, %v2522
            %v2575 = vpack.c.b16 %v2531, %v2527
            %v2576 = vpack.c.b16 %v2532, %v2528
            %v2577 = vpack.c.b16 %v2533, %v2529
            %v2578 = vpack.c.b16 %v2534, %v2530
            %v2579 = vpack.c.b16 %v2539, %v2535
            %v2580 = vpack.c.b16 %v2540, %v2536
            %v2581 = vpack.c.b16 %v2541, %v2537
            %v2582 = vpack.c.b16 %v2542, %v2538
            %v2583 = vpack.c.b16 %v2547, %v2543
            %v2584 = vpack.c.b16 %v2548, %v2544
            %v2585 = vpack.c.b16 %v2549, %v2545
            %v2586 = vpack.c.b16 %v2550, %v2546
            %v2587 = vpack.c.b16 %v2555, %v2551
            %v2588 = vpack.c.b16 %v2556, %v2552
            %v2589 = vpack.c.b16 %v2557, %v2553
            %v2590 = vpack.c.b16 %v2558, %v2554
            %2623 = vmatprep.subr.bf16.mxu0 %v2588
            %2624 = vmatpush1.bf16.msra.mxu0 %v2587
            %2625 = vmatprep.subr.bf16.mxu0 %v2584
            %2626 = vmatpush1.bf16.msra.mxu0 %v2583
            %2627 = vmatprep.subr.bf16.mxu0 %v2580
            %2628 = vmatpush1.bf16.msra.mxu0 %v2579
            %2629 = vmatprep.subr.bf16.mxu0 %v2576
            %2630 = vmatpush1.bf16.msra.mxu0 %v2575
            %2631 = vmatprep.subr.bf16.mxu0 %v2572
            %2632 = vmatpush1.bf16.msra.mxu0 %v2571
            %2633 = vmatprep.subr.bf16.mxu0 %v2568
            %2634 = vmatpush1.bf16.msra.mxu0 %v2567
            %2635 = vmatprep.subr.bf16.mxu0 %v2564
            %2636 = vmatpush1.bf16.msra.mxu0 %v2563
            %2637 = vmatprep.subr.bf16.mxu0 %v2560
            %2638 = vmatpush1.bf16.msra.mxu0 %v2559
            %2639 = vmatprep.subr.bf16.mxu0 0
            %2640 = vmatpush2.bf16.msra.mxu0 0
            %2641 = vmatprep.subr.bf16.mxu0 0
            %2642 = vmatpush2.bf16.msra.mxu0 0
            %2643 = vmatprep.subr.bf16.mxu0 0
            %2644 = vmatpush2.bf16.msra.mxu0 0
            %2645 = vmatprep.subr.bf16.mxu0 0
            %2646 = vmatpush2.bf16.msra.mxu0 0
            %2647 = vmatprep.subr.bf16.mxu0 0
            %2648 = vmatpush2.bf16.msra.mxu0 0
            %2649 = vmatprep.subr.bf16.mxu0 0
            %2650 = vmatpush2.bf16.msra.mxu0 0
            %2651 = vmatprep.subr.bf16.mxu0 0
            %2652 = vmatpush2.bf16.msra.mxu0 0
            %2653 = vmatprep.subr.bf16.mxu0 0
            %2654 = vmatpush2.bf16.msra.mxu0 0
            %2655 = vmatprep.mubr.bf16.mxu0 0
            %2656 = vmatmul.mubr.bf16.gmra.mxu0 %v2430
            %v2657 = vpop.f32.mrf.mxu0
            %v2658 = vadd.f32 0.0, %v2657
            %v2659 = vpop.f32.mrf.mxu0
            %v2660 = vadd.f32 0.0, %v2659
            %v2661 = vpop.f32.mrf.mxu0
            %v2662 = vpop.f32.mrf.mxu0
            %2663 = vdwg.mxu0
            %2664 = vmatprep.subr.bf16.mxu0 %v2590
            %2665 = vmatpush1.bf16.msra.mxu0 %v2589
            %2666 = vmatprep.subr.bf16.mxu0 %v2586
            %2667 = vmatpush1.bf16.msra.mxu0 %v2585
            %2668 = vmatprep.subr.bf16.mxu0 %v2582
            %2669 = vmatpush1.bf16.msra.mxu0 %v2581
            %2670 = vmatprep.subr.bf16.mxu0 %v2578
            %2671 = vmatpush1.bf16.msra.mxu0 %v2577
            %2672 = vmatprep.subr.bf16.mxu0 %v2574
            %2673 = vmatpush1.bf16.msra.mxu0 %v2573
            %2674 = vmatprep.subr.bf16.mxu0 %v2570
            %2675 = vmatpush1.bf16.msra.mxu0 %v2569
            %2676 = vmatprep.subr.bf16.mxu0 %v2566
            %2677 = vmatpush1.bf16.msra.mxu0 %v2565
            %2678 = vmatprep.subr.bf16.mxu0 %v2562
            %2679 = vmatpush1.bf16.msra.mxu0 %v2561
            %2680 = vmatprep.subr.bf16.mxu0 0
            %2681 = vmatpush2.bf16.msra.mxu0 0
            %2682 = vmatprep.subr.bf16.mxu0 0
            %2683 = vmatpush2.bf16.msra.mxu0 0
            %2684 = vmatprep.subr.bf16.mxu0 0
            %2685 = vmatpush2.bf16.msra.mxu0 0
            %2686 = vmatprep.subr.bf16.mxu0 0
            %2687 = vmatpush2.bf16.msra.mxu0 0
            %2688 = vmatprep.subr.bf16.mxu0 0
            %2689 = vmatpush2.bf16.msra.mxu0 0
            %2690 = vmatprep.subr.bf16.mxu0 0
            %2691 = vmatpush2.bf16.msra.mxu0 0
            %2692 = vmatprep.subr.bf16.mxu0 0
            %2693 = vmatpush2.bf16.msra.mxu0 0
            %2694 = vmatprep.subr.bf16.mxu0 0
            %2695 = vmatpush2.bf16.msra.mxu0 0
            %2696 = vmatprep.mubr.bf16.mxu0 0
            %2697 = vmatmul.mubr.bf16.gmra.mxu0 %v2430
            %v2698 = vpop.f32.mrf.mxu0
            %v2699 = vadd.f32 0.0, %v2698
            %v2700 = vpop.f32.mrf.mxu0
            %v2701 = vadd.f32 0.0, %v2700
            %v2702 = vpop.f32.mrf.mxu0
            %v2703 = vpop.f32.mrf.mxu0
            %2704 = vdwg.mxu0
            %v2705 = vadd.f32 %v2426, %v2658
            %v2706 = vadd.f32 %v2427, %v2660
            %v2707 = vadd.f32 %v2428, %v2699
            %v2708 = vadd.f32 %v2429, %v2701
            %v2709 = vxor.u32 %v2705, 2147483648
            %v2710 = vxor.u32 %v2706, 2147483648
            %v2711 = vxor.u32 %v2707, 2147483648
            %v2712 = vmul.f32 %v2709, 1.442695
            %v2713 = vpow.pop %v2712
            %v2714 = vmul.f32 %v2710, 1.442695
            %v2715 = vpow.pop %v2714
            %v2716 = vmul.f32 %v2711, 1.442695
            %v2717 = vpow.pop %v2716
            %v2718 = vadd.f32 %v2713, 1.0
            %v2719 = vadd.f32 %v2715, 1.0
            %v2720 = vadd.f32 %v2717, 1.0
            %v2721 = vrcp.pop %v2718
            %v2722 = vmul.f32 1.0, %v2721
            %v2723 = vrcp.pop %v2719
            %v2724 = vmul.f32 1.0, %v2723
            %v2725 = vrcp.pop %v2720
            %v2726 = vmul.f32 1.0, %v2725
            %v2727 = vtanh.pop %v2708
            %v2728 = vmul.f32 %v2724, %v2420
            %v2729 = vmul.f32 %v2722, %v2727
            %v2730 = vadd.f32 %v2728, %v2729
            %v2731 = vtanh.pop %v2730
            %v2732 = vmul.f32 %v2726, %v2731
            %s2733 = smul.u32 %s2422, 4
            %s2734 = smul.addr %s2733, 8
            %s2735 = scalar_lea.vmem [#allocation4], %s2734
            %v2736 = vld [vmem:[%s2735] sm:$0xff]
            %v2737 = vld [vmem:[%s2735 + $0x8] sm:$0xff]
            %v2738 = vld [vmem:[%s2735 + $0x10] sm:$0xff]
            %v2739 = vld [vmem:[%s2735 + $0x18] sm:$0xff]
            %v2740 = vpack.c.bf16 %v2732, %v2732
            %2741 = vmatprep.subr.bf16.mxu0 %v2588
            %2742 = vmatpush1.bf16.msra.mxu0 %v2587
            %2743 = vmatprep.subr.bf16.mxu0 %v2584
            %2744 = vmatpush1.bf16.msra.mxu0 %v2583
            %2745 = vmatprep.subr.bf16.mxu0 %v2580
            %2746 = vmatpush1.bf16.msra.mxu0 %v2579
            %2747 = vmatprep.subr.bf16.mxu0 %v2576
            %2748 = vmatpush1.bf16.msra.mxu0 %v2575
            %2749 = vmatprep.subr.bf16.mxu0 %v2572
            %2750 = vmatpush1.bf16.msra.mxu0 %v2571
            %2751 = vmatprep.subr.bf16.mxu0 %v2568
            %2752 = vmatpush1.bf16.msra.mxu0 %v2567
            %2753 = vmatprep.subr.bf16.mxu0 %v2564
            %2754 = vmatpush1.bf16.msra.mxu0 %v2563
            %2755 = vmatprep.subr.bf16.mxu0 %v2560
            %2756 = vmatpush1.bf16.msra.mxu0 %v2559
            %2757 = vmatprep.subr.bf16.mxu0 0
            %2758 = vmatpush2.bf16.msra.mxu0 0
            %2759 = vmatprep.subr.bf16.mxu0 0
            %2760 = vmatpush2.bf16.msra.mxu0 0
            %2761 = vmatprep.subr.bf16.mxu0 0
            %2762 = vmatpush2.bf16.msra.mxu0 0
            %2763 = vmatprep.subr.bf16.mxu0 0
            %2764 = vmatpush2.bf16.msra.mxu0 0
            %2765 = vmatprep.subr.bf16.mxu0 0
            %2766 = vmatpush2.bf16.msra.mxu0 0
            %2767 = vmatprep.subr.bf16.mxu0 0
            %2768 = vmatpush2.bf16.msra.mxu0 0
            %2769 = vmatprep.subr.bf16.mxu0 0
            %2770 = vmatpush2.bf16.msra.mxu0 0
            %2771 = vmatprep.subr.bf16.mxu0 0
            %2772 = vmatpush2.bf16.msra.mxu0 0
            %2773 = vmatprep.mubr.bf16.mxu0 0
            %2774 = vmatmul.mubr.bf16.gmra.mxu0 %v2740
            %v2775 = vpop.f32.mrf.mxu0
            %v2776 = vadd.f32 0.0, %v2775
            %v2777 = vpop.f32.mrf.mxu0
            %v2778 = vadd.f32 0.0, %v2777
            %v2779 = vpop.f32.mrf.mxu0
            %v2780 = vpop.f32.mrf.mxu0
            %2781 = vdwg.mxu0
            %2782 = vmatprep.subr.bf16.mxu0 %v2590
            %2783 = vmatpush1.bf16.msra.mxu0 %v2589
            %2784 = vmatprep.subr.bf16.mxu0 %v2586
            %2785 = vmatpush1.bf16.msra.mxu0 %v2585
            %2786 = vmatprep.subr.bf16.mxu0 %v2582
            %2787 = vmatpush1.bf16.msra.mxu0 %v2581
            %2788 = vmatprep.subr.bf16.mxu0 %v2578
            %2789 = vmatpush1.bf16.msra.mxu0 %v2577
            %2790 = vmatprep.subr.bf16.mxu0 %v2574
            %2791 = vmatpush1.bf16.msra.mxu0 %v2573
            %2792 = vmatprep.subr.bf16.mxu0 %v2570
            %2793 = vmatpush1.bf16.msra.mxu0 %v2569
            %2794 = vmatprep.subr.bf16.mxu0 %v2566
            %2795 = vmatpush1.bf16.msra.mxu0 %v2565
            %2796 = vmatprep.subr.bf16.mxu0 %v2562
            %2797 = vmatpush1.bf16.msra.mxu0 %v2561
            %2798 = vmatprep.subr.bf16.mxu0 0
            %2799 = vmatpush2.bf16.msra.mxu0 0
            %2800 = vmatprep.subr.bf16.mxu0 0
            %2801 = vmatpush2.bf16.msra.mxu0 0
            %2802 = vmatprep.subr.bf16.mxu0 0
            %2803 = vmatpush2.bf16.msra.mxu0 0
            %2804 = vmatprep.subr.bf16.mxu0 0
            %2805 = vmatpush2.bf16.msra.mxu0 0
            %2806 = vmatprep.subr.bf16.mxu0 0
            %2807 = vmatpush2.bf16.msra.mxu0 0
            %2808 = vmatprep.subr.bf16.mxu0 0
            %2809 = vmatpush2.bf16.msra.mxu0 0
            %2810 = vmatprep.subr.bf16.mxu0 0
            %2811 = vmatpush2.bf16.msra.mxu0 0
            %2812 = vmatprep.subr.bf16.mxu0 0
            %2813 = vmatpush2.bf16.msra.mxu0 0
            %2814 = vmatprep.mubr.bf16.mxu0 0
            %2815 = vmatmul.mubr.bf16.gmra.mxu0 %v2740
            %v2816 = vpop.f32.mrf.mxu0
            %v2817 = vadd.f32 0.0, %v2816
            %v2818 = vpop.f32.mrf.mxu0
            %v2819 = vadd.f32 0.0, %v2818
            %v2820 = vpop.f32.mrf.mxu0
            %v2821 = vpop.f32.mrf.mxu0
            %2822 = vdwg.mxu0
            %v2823 = vadd.f32 %v2736, %v2776
            %v2824 = vadd.f32 %v2737, %v2778
            %v2825 = vadd.f32 %v2738, %v2817
            %v2826 = vadd.f32 %v2739, %v2819
            %v2827 = vxor.u32 %v2823, 2147483648
            %v2828 = vxor.u32 %v2824, 2147483648
            %v2829 = vxor.u32 %v2825, 2147483648
            %v2830 = vmul.f32 %v2827, 1.442695
            %v2831 = vpow.pop %v2830
            %v2832 = vmul.f32 %v2828, 1.442695
            %v2833 = vpow.pop %v2832
            %v2834 = vmul.f32 %v2829, 1.442695
            %v2835 = vpow.pop %v2834
            %v2836 = vadd.f32 %v2831, 1.0
            %v2837 = vadd.f32 %v2833, 1.0
            %v2838 = vadd.f32 %v2835, 1.0
            %v2839 = vrcp.pop %v2836
            %v2840 = vmul.f32 1.0, %v2839
            %v2841 = vrcp.pop %v2837
            %v2842 = vmul.f32 1.0, %v2841
            %v2843 = vrcp.pop %v2838
            %v2844 = vmul.f32 1.0, %v2843
            %v2845 = vtanh.pop %v2826
            %v2846 = vmul.f32 %v2842, %v2730
            %v2847 = vmul.f32 %v2840, %v2845
            %v2848 = vadd.f32 %v2846, %v2847
            %v2849 = vtanh.pop %v2848
            %v2850 = vmul.f32 %v2844, %v2849
          $region85: #{hybrid_forward.1} parent=79 // loop_footer
            %s2418 = sadd.s32 1, %s2414
          $region86: #{hybrid_forward.1} parent=79 // loop_footer_branch
            %2413 = sbr.rel target = $region82
          $region87: #{hybrid_forward.1} parent=79 // loop_exit
            _
          %v2851 = vld [vmem:[%s8] sm:$0xff]
          %v2852 = vld [vmem:[%s8 + $0x8] sm:$0xff]
          %v2853 = vld [vmem:[%s8 + $0x10] sm:$0xff]
          %v2854 = vld [vmem:[%s8 + $0x18] sm:$0xff]
          %v2855 = vld [vmem:[%s8 + $0x20] sm:$0xff]
          %v2856 = vld [vmem:[%s8 + $0x28] sm:$0xff]
          %v2857 = vld [vmem:[%s8 + $0x30] sm:$0xff]
          %v2858 = vld [vmem:[%s8 + $0x38] sm:$0xff]
          %v2859 = vld [vmem:[%s8 + $0x40] sm:$0xff]
          %v2860 = vld [vmem:[%s8 + $0x48] sm:$0xff]
          %v2861 = vld [vmem:[%s8 + $0x50] sm:$0xff]
          %v2862 = vld [vmem:[%s8 + $0x58] sm:$0xff]
          %v2863 = vld [vmem:[%s8 + $0x60] sm:$0xff]
          %v2864 = vld [vmem:[%s8 + $0x68] sm:$0xff]
          %v2865 = vld [vmem:[%s8 + $0x70] sm:$0xff]
          %v2866 = vld [vmem:[%s8 + $0x78] sm:$0xff]
          %v2867 = vld [vmem:[%s9] sm:$0x1]
          %v2869 = vlaneseq
          %v2870 = vshrl.u32 %v2869, 7
          %v2871 = vsub.s32 0, %v2870
          %v2872 = vrot.slane %v2867, %v2871
          %2874 = vmatprep.subr.mxu0 0.0
          %2875 = vmatpush1.msra.mxu0 %v2866
          %2876 = vmatprep.subr.mxu0 0.0
          %2877 = vmatpush1.msra.mxu0 %v2865
          %2878 = vmatprep.subr.mxu0 0.0
          %2879 = vmatpush1.msra.mxu0 %v2864
          %2880 = vmatprep.subr.mxu0 0.0
          %2881 = vmatpush1.msra.mxu0 %v2863
          %2882 = vmatprep.subr.mxu0 0.0
          %2883 = vmatpush1.msra.mxu0 %v2862
          %2884 = vmatprep.subr.mxu0 0.0
          %2885 = vmatpush1.msra.mxu0 %v2861
          %2886 = vmatprep.subr.mxu0 0.0
          %2887 = vmatpush1.msra.mxu0 %v2860
          %2888 = vmatprep.subr.mxu0 0.0
          %2889 = vmatpush1.msra.mxu0 %v2859
          %2890 = vmatprep.subr.mxu0 0.0
          %2891 = vmatpush1.msra.mxu0 %v2858
          %2892 = vmatprep.subr.mxu0 0.0
          %2893 = vmatpush1.msra.mxu0 %v2857
          %2894 = vmatprep.subr.mxu0 0.0
          %2895 = vmatpush1.msra.mxu0 %v2856
          %2896 = vmatprep.subr.mxu0 0.0
          %2897 = vmatpush1.msra.mxu0 %v2855
          %2898 = vmatprep.subr.mxu0 0.0
          %2899 = vmatpush1.msra.mxu0 %v2854
          %2900 = vmatprep.subr.mxu0 0.0
          %2901 = vmatpush1.msra.mxu0 %v2853
          %2902 = vmatprep.subr.mxu0 0.0
          %2903 = vmatpush1.msra.mxu0 %v2852
          %2904 = vmatprep.subr.mxu0 0.0
          %2905 = vmatpush1.msra.mxu0 %v2851
          %2906 = vmatprep.subr.mxu0 0.0
          %2907 = vmatpush2.msra.mxu0 0.0
          %2908 = vmatprep.subr.mxu0 0.0
          %2909 = vmatpush2.msra.mxu0 0.0
          %2910 = vmatprep.subr.mxu0 0.0
          %2911 = vmatpush2.msra.mxu0 0.0
          %2912 = vmatprep.subr.mxu0 0.0
          %2913 = vmatpush2.msra.mxu0 0.0
          %2914 = vmatprep.subr.mxu0 0.0
          %2915 = vmatpush2.msra.mxu0 0.0
          %2916 = vmatprep.subr.mxu0 0.0
          %2917 = vmatpush2.msra.mxu0 0.0
          %2918 = vmatprep.subr.mxu0 0.0
          %2919 = vmatpush2.msra.mxu0 0.0
          %2920 = vmatprep.subr.mxu0 0.0
          %2921 = vmatpush2.msra.mxu0 0.0
          %2922 = vmatprep.subr.mxu0 0.0
          %2923 = vmatpush2.msra.mxu0 0.0
          %2924 = vmatprep.subr.mxu0 0.0
          %2925 = vmatpush2.msra.mxu0 0.0
          %2926 = vmatprep.subr.mxu0 0.0
          %2927 = vmatpush2.msra.mxu0 0.0
          %2928 = vmatprep.subr.mxu0 0.0
          %2929 = vmatpush2.msra.mxu0 0.0
          %2930 = vmatprep.subr.mxu0 0.0
          %2931 = vmatpush2.msra.mxu0 0.0
          %2932 = vmatprep.subr.mxu0 0.0
          %2933 = vmatpush2.msra.mxu0 0.0
          %2934 = vmatprep.subr.mxu0 0.0
          %2935 = vmatpush2.msra.mxu0 0.0
          %2936 = vmatprep.subr.mxu0 0.0
          %2937 = vmatpush2.msra.mxu0 0.0
          %2938 = vmatprep.mubr.f32.mxu0 0.0
          %2939 = vmatmul.mubr.f32.gmra.mxu0 %v2419
          %v2940 = vpop.f32.mrf.mxu0
          %v2941 = vadd.f32 %v2872, %v2940
          %v2942 = vpop.f32.mrf.mxu0
          %2943 = vdwg.mxu0
          %v2944 = vxor.u32 %v2941, 2147483648
          %v2945 = vmul.f32 %v2944, 1.442695
          %v2946 = vpow.pop %v2945
          %v2947 = vadd.f32 %v2946, 1.0
          %v2948 = vrcp.pop %v2947
          %v2949 = vmul.f32 1.0, %v2948
          %v2950 = vld [vmem:[%s10] sm:$0xff]
          %v2951 = vld [vmem:[%s10 + $0x8] sm:$0xff]
          %v2952 = vld [vmem:[%s10 + $0x10] sm:$0xff]
          %v2953 = vld [vmem:[%s10 + $0x18] sm:$0xff]
          %v2954 = vld [vmem:[%s10 + $0x20] sm:$0xff]
          %v2955 = vld [vmem:[%s10 + $0x28] sm:$0xff]
          %v2956 = vld [vmem:[%s10 + $0x30] sm:$0xff]
          %v2957 = vld [vmem:[%s10 + $0x38] sm:$0xff]
          %v2958 = vld [vmem:[%s10 + $0x40] sm:$0xff]
          %v2959 = vld [vmem:[%s10 + $0x48] sm:$0xff]
          %v2960 = vld [vmem:[%s10 + $0x50] sm:$0xff]
          %v2961 = vld [vmem:[%s10 + $0x58] sm:$0xff]
          %v2962 = vld [vmem:[%s10 + $0x60] sm:$0xff]
          %v2963 = vld [vmem:[%s10 + $0x68] sm:$0xff]
          %v2964 = vld [vmem:[%s10 + $0x70] sm:$0xff]
          %v2965 = vld [vmem:[%s10 + $0x78] sm:$0xff]
          %v2966 = vld [vmem:[#allocation5] sm:$0x1]
          %v2968 = vlaneseq
          %v2969 = vshrl.u32 %v2968, 7
          %v2970 = vsub.s32 0, %v2969
          %v2971 = vrot.slane %v2966, %v2970
          %2973 = vmatprep.subr.mxu0 0.0
          %2974 = vmatpush1.msra.mxu0 %v2965
          %2975 = vmatprep.subr.mxu0 0.0
          %2976 = vmatpush1.msra.mxu0 %v2964
          %2977 = vmatprep.subr.mxu0 0.0
          %2978 = vmatpush1.msra.mxu0 %v2963
          %2979 = vmatprep.subr.mxu0 0.0
          %2980 = vmatpush1.msra.mxu0 %v2962
          %2981 = vmatprep.subr.mxu0 0.0
          %2982 = vmatpush1.msra.mxu0 %v2961
          %2983 = vmatprep.subr.mxu0 0.0
          %2984 = vmatpush1.msra.mxu0 %v2960
          %2985 = vmatprep.subr.mxu0 0.0
          %2986 = vmatpush1.msra.mxu0 %v2959
          %2987 = vmatprep.subr.mxu0 0.0
          %2988 = vmatpush1.msra.mxu0 %v2958
          %2989 = vmatprep.subr.mxu0 0.0
          %2990 = vmatpush1.msra.mxu0 %v2957
          %2991 = vmatprep.subr.mxu0 0.0
          %2992 = vmatpush1.msra.mxu0 %v2956
          %2993 = vmatprep.subr.mxu0 0.0
          %2994 = vmatpush1.msra.mxu0 %v2955
          %2995 = vmatprep.subr.mxu0 0.0
          %2996 = vmatpush1.msra.mxu0 %v2954
          %2997 = vmatprep.subr.mxu0 0.0
          %2998 = vmatpush1.msra.mxu0 %v2953
          %2999 = vmatprep.subr.mxu0 0.0
          %3000 = vmatpush1.msra.mxu0 %v2952
          %3001 = vmatprep.subr.mxu0 0.0
          %3002 = vmatpush1.msra.mxu0 %v2951
          %3003 = vmatprep.subr.mxu0 0.0
          %3004 = vmatpush1.msra.mxu0 %v2950
          %3005 = vmatprep.subr.mxu0 0.0
          %3006 = vmatpush2.msra.mxu0 0.0
          %3007 = vmatprep.subr.mxu0 0.0
          %3008 = vmatpush2.msra.mxu0 0.0
          %3009 = vmatprep.subr.mxu0 0.0
          %3010 = vmatpush2.msra.mxu0 0.0
          %3011 = vmatprep.subr.mxu0 0.0
          %3012 = vmatpush2.msra.mxu0 0.0
          %3013 = vmatprep.subr.mxu0 0.0
          %3014 = vmatpush2.msra.mxu0 0.0
          %3015 = vmatprep.subr.mxu0 0.0
          %3016 = vmatpush2.msra.mxu0 0.0
          %3017 = vmatprep.subr.mxu0 0.0
          %3018 = vmatpush2.msra.mxu0 0.0
          %3019 = vmatprep.subr.mxu0 0.0
          %3020 = vmatpush2.msra.mxu0 0.0
          %3021 = vmatprep.subr.mxu0 0.0
          %3022 = vmatpush2.msra.mxu0 0.0
          %3023 = vmatprep.subr.mxu0 0.0
          %3024 = vmatpush2.msra.mxu0 0.0
          %3025 = vmatprep.subr.mxu0 0.0
          %3026 = vmatpush2.msra.mxu0 0.0
          %3027 = vmatprep.subr.mxu0 0.0
          %3028 = vmatpush2.msra.mxu0 0.0
          %3029 = vmatprep.subr.mxu0 0.0
          %3030 = vmatpush2.msra.mxu0 0.0
          %3031 = vmatprep.subr.mxu0 0.0
          %3032 = vmatpush2.msra.mxu0 0.0
          %3033 = vmatprep.subr.mxu0 0.0
          %3034 = vmatpush2.msra.mxu0 0.0
          %3035 = vmatprep.subr.mxu0 0.0
          %3036 = vmatpush2.msra.mxu0 0.0
          %3037 = vmatprep.mubr.f32.mxu0 0.0
          %3038 = vmatmul.mubr.f32.gmra.mxu0 %v2949
          %v3039 = vpop.f32.mrf.mxu0
          %v3040 = vadd.f32 %v2971, %v3039
          %v3041 = vpop.f32.mrf.mxu0
          %3042 = vdwg.mxu0
          %vm3043 = vcmask 1024
          %3044 = vst.msk [vmem:[%s12] sm:$0x3] %vm3043, %v3040
        $region80: #{hybrid_forward.1} parent=67 // pred_fallthru
          _
        // Predicated region
        $region88: #{hybrid_forward.1} parent=67 // pred_check
          %p3045 = pneg %p298
        $region89: #{hybrid_forward.1} parent=67 // pred_check_branch
          %3047 = sbr.rel (%p3045) target = $region91
        $region90: #{hybrid_forward.1} parent=67 // pred_region
          _
        $region91: #{hybrid_forward.1} parent=67 // pred_fallthru
          _
        // Predicated region
        $region92: #{hybrid_forward.1} parent=67 // pred_check
          %p3048 = pneg %p298
        $region93: #{hybrid_forward.1} parent=67 // pred_check_branch
          %3050 = sbr.rel (%p3048) target = $region95
        $region94: #{hybrid_forward.1} parent=67 // pred_region
          _
        $region95: #{hybrid_forward.1} parent=67 // pred_fallthru
          _
      $region68: #{hybrid_forward.1} parent=5 // pred_fallthru
        _
      %p3051 = scmp.le.s32.totalorder 2, %s23
      // Predicated region
      $region96: #{hybrid_forward.1} parent=5 // pred_check
        %p3052 = pneg %p3051
      $region97: #{hybrid_forward.1} parent=5 // pred_check_branch
        %3054 = sbr.rel (%p3052) target = $region99
      $region98: #{hybrid_forward.1} parent=5 // pred_region
        %s3055 = ssub.s32 %s23, 2
      $region99: #{hybrid_forward.1} parent=5 // pred_fallthru
        _
    $region6: #{hybrid_forward.1} parent=1 // loop_footer
      %s27 = sadd.s32 1, %s23
    $region7: #{hybrid_forward.1} parent=1 // loop_footer_branch
      %22 = sbr.rel target = $region3
    $region8: #{hybrid_forward.1} parent=1 // loop_exit
      _
    %3056 = vsyncpa [#allocation7], 1
    %s3057 = scalar_lea.sflag [#allocation7], 1
    %3058 = vsyncpa %s3057, 1

</llo_original>
